<compile_context>
chip_gen: v7x
topology: tpu7x:2x2x1
jax: 0.10.0
libtpu: 0.0.40
codegen_flags: <defaults>
</compile_context>

<pallas_src>
import functools

import jax
import jax.numpy as jnp
from jax.experimental import pallas as pl
from jax.experimental.pallas import tpu as pltpu

IN_DIM = 28 * 28   # 784
HID = 400
LAT = 20


def _round_up(x, m):
    return ((x + m - 1) // m) * m


def _vae_kernel(x_ref, eps_ref,
                w1_ref, b1_ref,
                wh_ref, bh_ref,
                w2_ref, b2_ref,
                w3_ref, b3_ref,
                recon_ref, mulv_ref):
    # x (TB, 784) bf16, eps (TB, 20) f32; weights bf16, biases f32.
    x = x_ref[...]
    eps = eps_ref[...]

    # ---- encode: fc1 + relu  (bf16 MXU inputs, f32 accumulate) ----
    h1 = jnp.dot(x, w1_ref[...], preferred_element_type=jnp.float32) + b1_ref[...]
    h1 = jnp.maximum(h1, 0.0)                                   # (TB, 400) f32

    # ---- fused heads: [mu | logvar] in one matmul ----
    heads = jnp.dot(h1.astype(jnp.bfloat16), wh_ref[...],
                    preferred_element_type=jnp.float32) + bh_ref[...]   # (TB, 40)
    mu = heads[:, :LAT]
    logvar = heads[:, LAT:]

    # ---- reparameterize: z = mu + eps * exp(0.5 * logvar)  (f32 epilogue) ----
    z = mu + eps * jnp.exp(0.5 * logvar)                        # (TB, 20)

    # ---- decode: fc2 + relu -> fc3 + sigmoid ----
    h2 = jnp.dot(z.astype(jnp.bfloat16), w2_ref[...],
                 preferred_element_type=jnp.float32) + b2_ref[...]
    h2 = jnp.maximum(h2, 0.0)                                   # (TB, 400)

    logits = jnp.dot(h2.astype(jnp.bfloat16), w3_ref[...],
                     preferred_element_type=jnp.float32) + b3_ref[...]
    # Sigmoid in f32 (v5e has no bf16 EUP); store in the (bf16) output dtype.
    recon_ref[...] = jax.nn.sigmoid(logits).astype(recon_ref.dtype)

    # Packed lane-dense (TB, 40) f32 output: [mu | logvar]; split in the wrapper.
    mulv_ref[...] = heads


@functools.partial(jax.jit, static_argnames=("block_b", "recon_dtype"))
def vae_forward(x, eps, params, *, block_b=512, recon_dtype=jnp.bfloat16):
    """x: (B, ..., 28, 28) or (B, 784); eps: (B, 20) f32.

    Returns (recon (B,784) recon_dtype, mu (B,20) f32, logvar (B,20) f32) —
    same semantics as the PyTorch VAE.forward (eps supplied explicitly for
    determinism)."""
    x = x.reshape(-1, IN_DIM)              # x.view(-1, 28*28)
    if x.dtype != jnp.bfloat16:
        x = x.astype(jnp.bfloat16)         # halve the x HBM stream
    B = x.shape[0]

    # Batch tile: multiple of 8, capped at block_b.  No jnp.pad — Pallas masks
    # the ragged final block (padded rows are row-local and discarded).
    tb = min(block_b, _round_up(B, 8))
    if B <= tb and B >= 16:
        # Force >= 2 grid steps so the "parallel" axis shards across the two
        # TensorCores on v7x (and keeps the pipeline busy elsewhere).
        tb = _round_up(-(-B // 2), 8)
    grid = (-(-B // tb),)

    # Batched operands: blocked along batch, feature axis full-width (lane-dense).
    batched = lambda feat: pl.BlockSpec((tb, feat), lambda i: (i, 0))
    # Weights/biases: constant index_map -> no per-step re-DMA, VMEM resident.
    resident = lambda shape: pl.BlockSpec(shape, lambda i: (0, 0))

    args = (
        x, eps,
        params["w1"], params["b1"],
        params["wh"], params["bh"],
        params["w2"], params["b2"],
        params["w3"], params["b3"],
    )
    in_specs = [
        batched(IN_DIM), batched(LAT),
        resident((IN_DIM, HID)), resident((1, HID)),
        resident((HID, 2 * LAT)), resident((1, 2 * LAT)),
        resident((LAT, HID)), resident((1, HID)),
        resident((HID, IN_DIM)), resident((1, IN_DIM)),
    ]
    out_shape = (
        jax.ShapeDtypeStruct((B, IN_DIM), recon_dtype),
        jax.ShapeDtypeStruct((B, 2 * LAT), jnp.float32),
    )
    out_specs = (batched(IN_DIM), batched(2 * LAT))

    wsize = IN_DIM * HID + HID * 2 * LAT + LAT * HID + HID * IN_DIM
    flops = 2 * B * wsize
    weight_bytes = 2 * wsize + 4 * (HID + 2 * LAT + HID + IN_DIM)
    io_bytes = (2 * B * IN_DIM                                   # x bf16
                + 4 * B * LAT                                    # eps f32
                + jnp.dtype(recon_dtype).itemsize * B * IN_DIM   # recon
                + 4 * B * 2 * LAT)                               # mu|logvar f32
    cost = pl.CostEstimate(flops=flops,
                           transcendentals=B * (LAT + IN_DIM),
                           bytes_accessed=weight_bytes + io_bytes)

    recon, mulv = pl.pallas_call(
        _vae_kernel,
        out_shape=out_shape,
        grid=grid,
        in_specs=in_specs,
        out_specs=out_specs,
        compiler_params=pltpu.CompilerParams(
            dimension_semantics=("parallel",),
            vmem_limit_bytes=64 * 1024 * 1024),
        cost_estimate=cost,
    )(*args)

    return recon, mulv[:, :LAT], mulv[:, LAT:]


def init_params(key):
    """Deterministic synthetic params. PyTorch Linear stores weight as (out, in);
    here weights are pre-transposed to (in, out) so the kernel does x @ W + b.
    Weights are bf16 (halve HBM traffic), biases f32 (1, out). The mu/logvar
    head weights are fused into a single (400, 40) matrix."""
    ks = jax.random.split(key, 10)

    def lin(kw, kb, fan_in, fan_out):
        bound = 1.0 / jnp.sqrt(fan_in)
        w = jax.random.uniform(kw, (fan_in, fan_out), jnp.float32, -bound, bound)
        b = jax.random.uniform(kb, (1, fan_out), jnp.float32, -bound, bound)
        return w, b

    w1, b1 = lin(ks[0], ks[1], IN_DIM, HID)
    wmu, bmu = lin(ks[2], ks[3], HID, LAT)
    wlv, blv = lin(ks[4], ks[5], HID, LAT)
    w2, b2 = lin(ks[6], ks[7], LAT, HID)
    w3, b3 = lin(ks[8], ks[9], HID, IN_DIM)

    wh = jnp.concatenate([wmu, wlv], axis=1)    # (400, 40)
    bh = jnp.concatenate([bmu, blv], axis=1)    # (1, 40)

    bf = jnp.bfloat16
    return dict(
        w1=w1.astype(bf), b1=b1,
        wh=wh.astype(bf), bh=bh,
        w2=w2.astype(bf), b2=b2,
        w3=w3.astype(bf), b3=b3,
    )


def vae_forward_ref(x, eps, p):
    """Pure-JAX reference with the same bf16-input / f32-accumulate matmuls."""
    def mm(a, w):
        return jnp.dot(a.astype(jnp.bfloat16), w,
                       preferred_element_type=jnp.float32)

    x = x.reshape(-1, IN_DIM)
    h1 = jnp.maximum(mm(x, p["w1"]) + p["b1"], 0.0)
    heads = mm(h1, p["wh"]) + p["bh"]
    mu, logvar = heads[:, :LAT], heads[:, LAT:]
    z = mu + eps * jnp.exp(0.5 * logvar)
    h2 = jnp.maximum(mm(z, p["w2"]) + p["b2"], 0.0)
    recon = jax.nn.sigmoid(mm(h2, p["w3"]) + p["b3"])
    return recon, mu, logvar


if __name__ == "__main__":
    key = jax.random.PRNGKey(0)
    k_param, k_x, k_eps = jax.random.split(key, 3)

    B = 8
    # Input images (B, 1, 28, 28) f32 -> flattened to (B, 784) inside the
    # wrapper, mirroring x.view(-1, 28*28).
    x_img = jax.random.normal(k_x, (B, 1, 28, 28), jnp.float32)
    # eps drawn once (deterministic stand-in for torch.randn_like in reparameterize)
    # TODO(synk): could be generated in-kernel via pltpu.prng_seed + stateful_normal.
    eps = jax.random.normal(k_eps, (B, LAT), jnp.float32)

    params = init_params(k_param)

    recon, mu, logvar = vae_forward(x_img, eps, params)
    jax.block_until_ready((recon, mu, logvar))

    recon_r, mu_r, logvar_r = vae_forward_ref(x_img, eps, params)
    assert recon.shape == (B, IN_DIM) and mu.shape == (B, LAT) and logvar.shape == (B, LAT)
    assert jnp.allclose(recon.astype(jnp.float32), recon_r, atol=2e-2, rtol=2e-2)
    assert jnp.allclose(mu, mu_r, atol=1e-2, rtol=1e-2)
    assert jnp.allclose(logvar, logvar_r, atol=1e-2, rtol=1e-2)

    print("KERNEL_OK")
</pallas_src>

<mosaic_0001>
module attributes {stable_mosaic.version = 11 : i64} {
  func.func @_vae_kernel(%arg0: i32, %arg1: memref<8x784xbf16, #tpu.memory_space<vmem>>, %arg2: memref<8x20xf32, #tpu.memory_space<vmem>>, %arg3: memref<784x400xbf16, #tpu.memory_space<vmem>>, %arg4: memref<1x400xf32, #tpu.memory_space<vmem>>, %arg5: memref<400x40xbf16, #tpu.memory_space<vmem>>, %arg6: memref<1x40xf32, #tpu.memory_space<vmem>>, %arg7: memref<20x400xbf16, #tpu.memory_space<vmem>>, %arg8: memref<1x400xf32, #tpu.memory_space<vmem>>, %arg9: memref<400x784xbf16, #tpu.memory_space<vmem>>, %arg10: memref<1x784xf32, #tpu.memory_space<vmem>>, %arg11: memref<8x784xbf16, #tpu.memory_space<vmem>>, %arg12: memref<8x40xf32, #tpu.memory_space<vmem>>) attributes {dimension_semantics = [#tpu.dimension_semantics<parallel>], iteration_bounds = array<i64: 1>, scalar_prefetch = 0 : i64, scratch_operands = 0 : i64, tpu.core_type = #tpu.core_type<tc>, window_params = [{transform_indices = @transform_0, window_bounds = array<i64: 8, 784>}, {transform_indices = @transform_1, window_bounds = array<i64: 8, 20>}, {pipeline_mode = #tpu.pipeline_mode<synchronous>, transform_indices = @transform_2, window_bounds = array<i64: 784, 400>}, {pipeline_mode = #tpu.pipeline_mode<synchronous>, transform_indices = @transform_3, window_bounds = array<i64: 1, 400>}, {pipeline_mode = #tpu.pipeline_mode<synchronous>, transform_indices = @transform_4, window_bounds = array<i64: 400, 40>}, {pipeline_mode = #tpu.pipeline_mode<synchronous>, transform_indices = @transform_5, window_bounds = array<i64: 1, 40>}, {pipeline_mode = #tpu.pipeline_mode<synchronous>, transform_indices = @transform_6, window_bounds = array<i64: 20, 400>}, {pipeline_mode = #tpu.pipeline_mode<synchronous>, transform_indices = @transform_7, window_bounds = array<i64: 1, 400>}, {pipeline_mode = #tpu.pipeline_mode<synchronous>, transform_indices = @transform_8, window_bounds = array<i64: 400, 784>}, {pipeline_mode = #tpu.pipeline_mode<synchronous>, transform_indices = @transform_9, window_bounds = array<i64: 1, 784>}, {transform_indices = @transform_10, window_bounds = array<i64: 8, 784>}, {transform_indices = @transform_11, window_bounds = array<i64: 8, 40>}]} {
    %c0 = arith.constant 0 : index
    %c0_0 = arith.constant 0 : index
    %0 = vector.load %arg1[%c0, %c0_0] : memref<8x784xbf16, #tpu.memory_space<vmem>>, vector<8x784xbf16>
    %c0_1 = arith.constant 0 : index
    %c0_2 = arith.constant 0 : index
    %1 = vector.load %arg2[%c0_1, %c0_2] : memref<8x20xf32, #tpu.memory_space<vmem>>, vector<8x20xf32>
    %c0_3 = arith.constant 0 : index
    %c0_4 = arith.constant 0 : index
    %2 = vector.load %arg3[%c0_3, %c0_4] : memref<784x400xbf16, #tpu.memory_space<vmem>>, vector<784x400xbf16>
    %cst = arith.constant dense<0.000000e+00> : vector<8x400xf32>
    %3 = tpu.matmul %0, %2, %cst {dimension_numbers = #tpu.dot_dimension_numbers<[1], [0], [0], [1], [0, 0, 1, 1], [], []>} : vector<8x784xbf16>, vector<784x400xbf16>, vector<8x400xf32> -> vector<8x400xf32>
    %c0_5 = arith.constant 0 : index
    %c0_6 = arith.constant 0 : index
    %4 = vector.load %arg4[%c0_5, %c0_6] : memref<1x400xf32, #tpu.memory_space<vmem>>, vector<1x400xf32>
    %5 = vector.broadcast %4 : vector<1x400xf32> to vector<8x400xf32>
    %6 = arith.addf %3, %5 : vector<8x400xf32>
    %cst_7 = arith.constant 0.000000e+00 : f32
    %7 = vector.broadcast %cst_7 : f32 to vector<8x400xf32>
    %8 = arith.maximumf %6, %7 : vector<8x400xf32>
    %9 = arith.truncf %8 : vector<8x400xf32> to vector<8x400xbf16>
    %c0_8 = arith.constant 0 : index
    %c0_9 = arith.constant 0 : index
    %10 = vector.load %arg5[%c0_8, %c0_9] : memref<400x40xbf16, #tpu.memory_space<vmem>>, vector<400x40xbf16>
    %cst_10 = arith.constant dense<0.000000e+00> : vector<8x40xf32>
    %11 = tpu.matmul %9, %10, %cst_10 {dimension_numbers = #tpu.dot_dimension_numbers<[1], [0], [0], [1], [0, 0, 1, 1], [], []>} : vector<8x400xbf16>, vector<400x40xbf16>, vector<8x40xf32> -> vector<8x40xf32>
    %c0_11 = arith.constant 0 : index
    %c0_12 = arith.constant 0 : index
    %12 = vector.load %arg6[%c0_11, %c0_12] : memref<1x40xf32, #tpu.memory_space<vmem>>, vector<1x40xf32>
    %13 = vector.broadcast %12 : vector<1x40xf32> to vector<8x40xf32>
    %14 = arith.addf %11, %13 : vector<8x40xf32>
    %15 = vector.extract_strided_slice %14 {offsets = [0, 0], sizes = [8, 20], strides = [1, 1]} : vector<8x40xf32> to vector<8x20xf32>
    %16 = vector.extract_strided_slice %14 {offsets = [0, 20], sizes = [8, 20], strides = [1, 1]} : vector<8x40xf32> to vector<8x20xf32>
    %cst_13 = arith.constant 5.000000e-01 : f32
    %17 = vector.broadcast %cst_13 : f32 to vector<8x20xf32>
    %18 = arith.mulf %17, %16 : vector<8x20xf32>
    %19 = math.exp %18 : vector<8x20xf32>
    %20 = arith.mulf %1, %19 : vector<8x20xf32>
    %21 = arith.addf %15, %20 : vector<8x20xf32>
    %22 = arith.truncf %21 : vector<8x20xf32> to vector<8x20xbf16>
    %c0_14 = arith.constant 0 : index
    %c0_15 = arith.constant 0 : index
    %23 = vector.load %arg7[%c0_14, %c0_15] : memref<20x400xbf16, #tpu.memory_space<vmem>>, vector<20x400xbf16>
    %cst_16 = arith.constant dense<0.000000e+00> : vector<8x400xf32>
    %24 = tpu.matmul %22, %23, %cst_16 {dimension_numbers = #tpu.dot_dimension_numbers<[1], [0], [0], [1], [0, 0, 1, 1], [], []>} : vector<8x20xbf16>, vector<20x400xbf16>, vector<8x400xf32> -> vector<8x400xf32>
    %c0_17 = arith.constant 0 : index
    %c0_18 = arith.constant 0 : index
    %25 = vector.load %arg8[%c0_17, %c0_18] : memref<1x400xf32, #tpu.memory_space<vmem>>, vector<1x400xf32>
    %26 = vector.broadcast %25 : vector<1x400xf32> to vector<8x400xf32>
    %27 = arith.addf %24, %26 : vector<8x400xf32>
    %cst_19 = arith.constant 0.000000e+00 : f32
    %28 = vector.broadcast %cst_19 : f32 to vector<8x400xf32>
    %29 = arith.maximumf %27, %28 : vector<8x400xf32>
    %30 = arith.truncf %29 : vector<8x400xf32> to vector<8x400xbf16>
    %c0_20 = arith.constant 0 : index
    %c0_21 = arith.constant 0 : index
    %31 = vector.load %arg9[%c0_20, %c0_21] : memref<400x784xbf16, #tpu.memory_space<vmem>>, vector<400x784xbf16>
    %cst_22 = arith.constant dense<0.000000e+00> : vector<8x784xf32>
    %32 = tpu.matmul %30, %31, %cst_22 {dimension_numbers = #tpu.dot_dimension_numbers<[1], [0], [0], [1], [0, 0, 1, 1], [], []>} : vector<8x400xbf16>, vector<400x784xbf16>, vector<8x784xf32> -> vector<8x784xf32>
    %c0_23 = arith.constant 0 : index
    %c0_24 = arith.constant 0 : index
    %33 = vector.load %arg10[%c0_23, %c0_24] : memref<1x784xf32, #tpu.memory_space<vmem>>, vector<1x784xf32>
    %34 = vector.broadcast %33 : vector<1x784xf32> to vector<8x784xf32>
    %35 = arith.addf %32, %34 : vector<8x784xf32>
    %36 = arith.negf %35 : vector<8x784xf32>
    %37 = math.exp %36 : vector<8x784xf32>
    %cst_25 = arith.constant 1.000000e+00 : f32
    %38 = vector.broadcast %cst_25 : f32 to vector<8x784xf32>
    %39 = arith.addf %38, %37 : vector<8x784xf32>
    %40 = arith.divf %38, %39 : vector<8x784xf32>
    %41 = arith.truncf %40 : vector<8x784xf32> to vector<8x784xbf16>
    %c0_26 = arith.constant 0 : index
    %c0_27 = arith.constant 0 : index
    %42 = vector.load %arg11[%c0_26, %c0_27] : memref<8x784xbf16, #tpu.memory_space<vmem>>, vector<8x784xbf16>
    tpu.vector_store %arg11[%c0_26, %c0_27], %41 {strides = array<i32>} : memref<8x784xbf16, #tpu.memory_space<vmem>>, vector<8x784xbf16>,
    %c0_28 = arith.constant 0 : index
    %c0_29 = arith.constant 0 : index
    %43 = vector.load %arg12[%c0_28, %c0_29] : memref<8x40xf32, #tpu.memory_space<vmem>>, vector<8x40xf32>
    tpu.vector_store %arg12[%c0_28, %c0_29], %14 {strides = array<i32>} : memref<8x40xf32, #tpu.memory_space<vmem>>, vector<8x40xf32>,
    return
  }
  func.func @transform_0(%arg0: i32) -> (i32, i32) {
    %c0_i32 = arith.constant 0 : i32
    %c0_i32_0 = arith.constant 0 : i32
    return %arg0, %c0_i32 : i32, i32
  }
  func.func @transform_1(%arg0: i32) -> (i32, i32) {
    %c0_i32 = arith.constant 0 : i32
    %c0_i32_0 = arith.constant 0 : i32
    return %arg0, %c0_i32 : i32, i32
  }
  func.func @transform_2(%arg0: i32) -> (i32, i32) {
    %c0_i32 = arith.constant 0 : i32
    %c0_i32_0 = arith.constant 0 : i32
    %c0_i32_1 = arith.constant 0 : i32
    return %c0_i32, %c0_i32_0 : i32, i32
  }
  func.func @transform_3(%arg0: i32) -> (i32, i32) {
    %c0_i32 = arith.constant 0 : i32
    %c0_i32_0 = arith.constant 0 : i32
    %c0_i32_1 = arith.constant 0 : i32
    return %c0_i32, %c0_i32_0 : i32, i32
  }
  func.func @transform_4(%arg0: i32) -> (i32, i32) {
    %c0_i32 = arith.constant 0 : i32
    %c0_i32_0 = arith.constant 0 : i32
    %c0_i32_1 = arith.constant 0 : i32
    return %c0_i32, %c0_i32_0 : i32, i32
  }
  func.func @transform_5(%arg0: i32) -> (i32, i32) {
    %c0_i32 = arith.constant 0 : i32
    %c0_i32_0 = arith.constant 0 : i32
    %c0_i32_1 = arith.constant 0 : i32
    return %c0_i32, %c0_i32_0 : i32, i32
  }
  func.func @transform_6(%arg0: i32) -> (i32, i32) {
    %c0_i32 = arith.constant 0 : i32
    %c0_i32_0 = arith.constant 0 : i32
    %c0_i32_1 = arith.constant 0 : i32
    return %c0_i32, %c0_i32_0 : i32, i32
  }
  func.func @transform_7(%arg0: i32) -> (i32, i32) {
    %c0_i32 = arith.constant 0 : i32
    %c0_i32_0 = arith.constant 0 : i32
    %c0_i32_1 = arith.constant 0 : i32
    return %c0_i32, %c0_i32_0 : i32, i32
  }
  func.func @transform_8(%arg0: i32) -> (i32, i32) {
    %c0_i32 = arith.constant 0 : i32
    %c0_i32_0 = arith.constant 0 : i32
    %c0_i32_1 = arith.constant 0 : i32
    return %c0_i32, %c0_i32_0 : i32, i32
  }
  func.func @transform_9(%arg0: i32) -> (i32, i32) {
    %c0_i32 = arith.constant 0 : i32
    %c0_i32_0 = arith.constant 0 : i32
    %c0_i32_1 = arith.constant 0 : i32
    return %c0_i32, %c0_i32_0 : i32, i32
  }
  func.func @transform_10(%arg0: i32) -> (i32, i32) {
    %c0_i32 = arith.constant 0 : i32
    %c0_i32_0 = arith.constant 0 : i32
    return %arg0, %c0_i32 : i32, i32
  }
  func.func @transform_11(%arg0: i32) -> (i32, i32) {
    %c0_i32 = arith.constant 0 : i32
    %c0_i32_0 = arith.constant 0 : i32
    return %arg0, %c0_i32 : i32, i32
  }
}

</mosaic_0001>

<llo_original>
// kernel: vae_forward.1
$region0: #{vae_forward.1}
  #allocation0 [shape = 'u32[]', space=smem, size = 0x4, offset = 0x4, fixed_abs, tag = 'smem constant byte address 0x4 - core index']
  #allocation1 [shape = 'u32[144,128]{1,0:T(1,128)}', space=vmem, size = 0x12000, scoped, tag = 'internal scratch']
  %s0 = inlined_call_operand.hbm [shape: bf16[8,784], index: 0, kind: input, shape index: {}]
  %s1 = inlined_call_operand.hbm [shape: f32[8,20], index: 1, kind: input, shape index: {}]
  %s2 = inlined_call_operand.hbm [shape: bf16[784,400], index: 2, kind: input, shape index: {}]
  %s3 = inlined_call_operand.hbm [shape: f32[1,400], index: 3, kind: input, shape index: {}]
  %s4 = inlined_call_operand.hbm [shape: bf16[400,40], index: 4, kind: input, shape index: {}]
  %s5 = inlined_call_operand.hbm [shape: f32[1,40], index: 5, kind: input, shape index: {}]
  %s6 = inlined_call_operand.hbm [shape: bf16[20,400], index: 6, kind: input, shape index: {}]
  %s7 = inlined_call_operand.hbm [shape: f32[1,400], index: 7, kind: input, shape index: {}]
  %s8 = inlined_call_operand.hbm [shape: bf16[400,784], index: 8, kind: input, shape index: {}]
  %s9 = inlined_call_operand.hbm [shape: f32[1,784], index: 9, kind: input, shape index: {}]
  %s10 = inlined_call_operand.hbm [shape: bf16[8,784], index: 10, kind: output, shape index: {0}]
  %s11 = inlined_call_operand.hbm [shape: f32[8,40], index: 11, kind: output, shape index: {1}]
  %12 = xla_tuple %s10, %s11
  %s13 = sld [smem:[#allocation0]]
  $region98: #{vae_forward.1} parent=0
    _
  %s15 = ssub.s32 1, %s13
  %s16 = scalar_select 0, %s15, %s13
  $region1: #{vae_forward.1} parent=0
    #allocation2 [shape = 'u8[14336]{0}', space=vmem, size = 0x3800, scoped, tag = 'input window, operand 0, single buffered']
    #allocation3 [shape = 's32[1]{0}', space=sflag, size = 0x4, scoped, tag = 'scoped memory for vae_forward.1']
    #allocation4 [shape = 's32[1]{0}', space=sflag, size = 0x4, scoped, tag = 'scoped memory for vae_forward.1']
    #allocation5 [shape = 'u8[4096]{0}', space=vmem, size = 0x1000, scoped, tag = 'input window, operand 1, single buffered']
    #allocation6 [shape = 's32[1]{0}', space=sflag, size = 0x4, scoped, tag = 'scoped memory for vae_forward.1']
    #allocation7 [shape = 'u8[802816]{0}', space=vmem, size = 0xc4000, scoped, tag = 'input window, operand 2, single buffered']
    #allocation8 [shape = 'u8[2048]{0}', space=vmem, size = 0x800, scoped, tag = 'input window, operand 3, single buffered']
    #allocation9 [shape = 's32[1]{0}', space=sflag, size = 0x4, scoped, tag = 'scoped memory for vae_forward.1']
    #allocation10 [shape = 'u8[102400]{0}', space=vmem, size = 0x19000, scoped, tag = 'input window, operand 4, single buffered']
    #allocation11 [shape = 'u8[512]{0}', space=vmem, size = 0x400, scoped, tag = 'input window, operand 5, single buffered']
    #allocation12 [shape = 's32[1]{0}', space=sflag, size = 0x4, scoped, tag = 'scoped memory for vae_forward.1']
    #allocation13 [shape = 'u8[24576]{0}', space=vmem, size = 0x6000, scoped, tag = 'input window, operand 6, single buffered']
    #allocation14 [shape = 'u8[2048]{0}', space=vmem, size = 0x800, scoped, tag = 'input window, operand 7, single buffered']
    #allocation15 [shape = 's32[1]{0}', space=sflag, size = 0x4, scoped, tag = 'scoped memory for vae_forward.1']
    #allocation16 [shape = 'u8[716800]{0}', space=vmem, size = 0xaf000, scoped, tag = 'input window, operand 8, single buffered']
    #allocation17 [shape = 'u8[3584]{0}', space=vmem, size = 0x1000, scoped, tag = 'input window, operand 9, single buffered']
    #allocation18 [shape = 's32[1]{0}', space=sflag, size = 0x4, scoped, tag = 'scoped memory for vae_forward.1']
    #allocation19 [shape = 'u8[14336]{0}', space=vmem, size = 0x3800, scoped, tag = 'output window, operand 0, single buffered']
    #allocation20 [shape = 'u8[4096]{0}', space=vmem, size = 0x1000, scoped, tag = 'output window, operand 1, single buffered']
    #allocation21 [shape = 's32[1]{0}', space=sflag, size = 0x4, scoped, tag = 'scoped memory for vae_forward.1']
    %17 = vsyncpa [#allocation3], 0
    %18 = vsyncpa [#allocation6], 0
    %19 = vsyncpa [#allocation9], 0
    %20 = vsyncpa [#allocation12], 0
    %21 = vsyncpa [#allocation15], 0
    %22 = vsyncpa [#allocation18], 0
    %23 = vsyncpa [#allocation4], 0
    %24 = vsyncpa [#allocation21], 0
    // Predicated region
    $region2: #{vae_forward.1} parent=1 // pred_check
      _
    $region3: #{vae_forward.1} parent=1 // pred_check_branch
      %26 = sbr.rel (0) target = $region5
    $region4: #{vae_forward.1} parent=1 // pred_region
      %s28 = ssub.s32 448, 448
      %29 = vsyncadd [#allocation3], %s28
      %s31 = sshll.u32 [#allocation2], 4
      %s32 = int_to_ptr.vmem [resolvable:$true] %s31
      %34 = dma.hbm_to_vmem [thread:$0]  %s0, 448, %s32, [#allocation3]
    $region5: #{vae_forward.1} parent=1 // pred_fallthru
      _
    // Predicated region
    $region6: #{vae_forward.1} parent=1 // pred_check
      _
    $region7: #{vae_forward.1} parent=1 // pred_check_branch
      %36 = sbr.rel (0) target = $region9
    $region8: #{vae_forward.1} parent=1 // pred_region
      %s38 = ssub.s32 128, 128
      %39 = vsyncadd [#allocation6], %s38
      %s41 = sshll.u32 [#allocation5], 4
      %s42 = int_to_ptr.vmem [resolvable:$true] %s41
      %44 = dma.hbm_to_vmem [thread:$0]  %s1, 128, %s42, [#allocation6]
    $region9: #{vae_forward.1} parent=1 // pred_fallthru
      _
    // Predicated region
    $region10: #{vae_forward.1} parent=1 // pred_check
      _
    $region11: #{vae_forward.1} parent=1 // pred_check_branch
      %46 = sbr.rel (0) target = $region13
    $region12: #{vae_forward.1} parent=1 // pred_region
      %s48 = ssub.s32 25088, 25088
      %49 = vsyncadd [#allocation6], %s48
      %s50 = sshll.u32 [#allocation7], 4
      %s51 = int_to_ptr.vmem [resolvable:$true] %s50
      %56 = dma.hbm_to_vmem [thread:$0]  %s2, 25088, %s51, [#allocation6], 256, 256, 16
    $region13: #{vae_forward.1} parent=1 // pred_fallthru
      _
    // Predicated region
    $region14: #{vae_forward.1} parent=1 // pred_check
      _
    $region15: #{vae_forward.1} parent=1 // pred_check_branch
      %58 = sbr.rel (0) target = $region17
    $region16: #{vae_forward.1} parent=1 // pred_region
      %s60 = ssub.s32 64, 64
      %61 = vsyncadd [#allocation9], %s60
      %s63 = sshll.u32 [#allocation8], 4
      %s64 = int_to_ptr.vmem [resolvable:$true] %s63
      %66 = dma.hbm_to_vmem [thread:$0]  %s3, 64, %s64, [#allocation9]
    $region17: #{vae_forward.1} parent=1 // pred_fallthru
      _
    // Predicated region
    $region18: #{vae_forward.1} parent=1 // pred_check
      _
    $region19: #{vae_forward.1} parent=1 // pred_check_branch
      %68 = sbr.rel (0) target = $region21
    $region20: #{vae_forward.1} parent=1 // pred_region
      %s70 = ssub.s32 3200, 3200
      %71 = vsyncadd [#allocation9], %s70
      %s72 = sshll.u32 [#allocation10], 4
      %s73 = int_to_ptr.vmem [resolvable:$true] %s72
      %78 = dma.hbm_to_vmem [thread:$0]  %s4, 3200, %s73, [#allocation9], 64, 64, 4
    $region21: #{vae_forward.1} parent=1 // pred_fallthru
      _
    // Predicated region
    $region22: #{vae_forward.1} parent=1 // pred_check
      _
    $region23: #{vae_forward.1} parent=1 // pred_check_branch
      %80 = sbr.rel (0) target = $region25
    $region24: #{vae_forward.1} parent=1 // pred_region
      %s82 = ssub.s32 16, 16
      %83 = vsyncadd [#allocation12], %s82
      %s85 = sshll.u32 [#allocation11], 4
      %s86 = int_to_ptr.vmem [resolvable:$true] %s85
      %88 = dma.hbm_to_vmem [thread:$0]  %s5, 16, %s86, [#allocation12]
    $region25: #{vae_forward.1} parent=1 // pred_fallthru
      _
    // Predicated region
    $region26: #{vae_forward.1} parent=1 // pred_check
      _
    $region27: #{vae_forward.1} parent=1 // pred_check_branch
      %90 = sbr.rel (0) target = $region29
    $region28: #{vae_forward.1} parent=1 // pred_region
      %s92 = ssub.s32 768, 768
      %93 = vsyncadd [#allocation12], %s92
      %s94 = sshll.u32 [#allocation13], 4
      %s95 = int_to_ptr.vmem [resolvable:$true] %s94
      %100 = dma.hbm_to_vmem [thread:$0]  %s6, 768, %s95, [#allocation12], 256, 256, 16
    $region29: #{vae_forward.1} parent=1 // pred_fallthru
      _
    // Predicated region
    $region30: #{vae_forward.1} parent=1 // pred_check
      _
    $region31: #{vae_forward.1} parent=1 // pred_check_branch
      %102 = sbr.rel (0) target = $region33
    $region32: #{vae_forward.1} parent=1 // pred_region
      %s104 = ssub.s32 64, 64
      %105 = vsyncadd [#allocation15], %s104
      %s107 = sshll.u32 [#allocation14], 4
      %s108 = int_to_ptr.vmem [resolvable:$true] %s107
      %110 = dma.hbm_to_vmem [thread:$0]  %s7, 64, %s108, [#allocation15]
    $region33: #{vae_forward.1} parent=1 // pred_fallthru
      _
    // Predicated region
    $region34: #{vae_forward.1} parent=1 // pred_check
      _
    $region35: #{vae_forward.1} parent=1 // pred_check_branch
      %112 = sbr.rel (0) target = $region37
    $region36: #{vae_forward.1} parent=1 // pred_region
      %s114 = ssub.s32 22400, 22400
      %115 = vsyncadd [#allocation15], %s114
      %s116 = sshll.u32 [#allocation16], 4
      %s117 = int_to_ptr.vmem [resolvable:$true] %s116
      %122 = dma.hbm_to_vmem [thread:$0]  %s8, 22400, %s117, [#allocation15], 448, 448, 28
    $region37: #{vae_forward.1} parent=1 // pred_fallthru
      _
    // Predicated region
    $region38: #{vae_forward.1} parent=1 // pred_check
      _
    $region39: #{vae_forward.1} parent=1 // pred_check_branch
      %124 = sbr.rel (0) target = $region41
    $region40: #{vae_forward.1} parent=1 // pred_region
      %s126 = ssub.s32 112, 112
      %127 = vsyncadd [#allocation18], %s126
      %s129 = sshll.u32 [#allocation17], 4
      %s130 = int_to_ptr.vmem [resolvable:$true] %s129
      %132 = dma.hbm_to_vmem [thread:$0]  %s9, 112, %s130, [#allocation18]
    $region41: #{vae_forward.1} parent=1 // pred_fallthru
      _
    // Predicated region
    $region42: #{vae_forward.1} parent=1 // pred_check
      _
    $region43: #{vae_forward.1} parent=1 // pred_check_branch
      %134 = sbr.rel (0) target = $region45
    $region44: #{vae_forward.1} parent=1 // pred_region
      %135 = dma.done [#allocation3], 448
    $region45: #{vae_forward.1} parent=1 // pred_fallthru
      _
    // Predicated region
    $region46: #{vae_forward.1} parent=1 // pred_check
      _
    $region47: #{vae_forward.1} parent=1 // pred_check_branch
      %137 = sbr.rel (0) target = $region49
    $region48: #{vae_forward.1} parent=1 // pred_region
      %138 = dma.done [#allocation6], 128
    $region49: #{vae_forward.1} parent=1 // pred_fallthru
      _
    // Predicated region
    $region50: #{vae_forward.1} parent=1 // pred_check
      _
    $region51: #{vae_forward.1} parent=1 // pred_check_branch
      %140 = sbr.rel (0) target = $region53
    $region52: #{vae_forward.1} parent=1 // pred_region
      %141 = dma.done [#allocation6], 25088
    $region53: #{vae_forward.1} parent=1 // pred_fallthru
      _
    // Predicated region
    $region54: #{vae_forward.1} parent=1 // pred_check
      _
    $region55: #{vae_forward.1} parent=1 // pred_check_branch
      %143 = sbr.rel (0) target = $region57
    $region56: #{vae_forward.1} parent=1 // pred_region
      %144 = dma.done [#allocation9], 64
    $region57: #{vae_forward.1} parent=1 // pred_fallthru
      _
    // Predicated region
    $region58: #{vae_forward.1} parent=1 // pred_check
      _
    $region59: #{vae_forward.1} parent=1 // pred_check_branch
      %146 = sbr.rel (0) target = $region61
    $region60: #{vae_forward.1} parent=1 // pred_region
      %147 = dma.done [#allocation9], 3200
    $region61: #{vae_forward.1} parent=1 // pred_fallthru
      _
    // Predicated region
    $region62: #{vae_forward.1} parent=1 // pred_check
      _
    $region63: #{vae_forward.1} parent=1 // pred_check_branch
      %149 = sbr.rel (0) target = $region65
    $region64: #{vae_forward.1} parent=1 // pred_region
      %150 = dma.done [#allocation12], 16
    $region65: #{vae_forward.1} parent=1 // pred_fallthru
      _
    // Predicated region
    $region66: #{vae_forward.1} parent=1 // pred_check
      _
    $region67: #{vae_forward.1} parent=1 // pred_check_branch
      %152 = sbr.rel (0) target = $region69
    $region68: #{vae_forward.1} parent=1 // pred_region
      %153 = dma.done [#allocation12], 768
    $region69: #{vae_forward.1} parent=1 // pred_fallthru
      _
    // Predicated region
    $region70: #{vae_forward.1} parent=1 // pred_check
      _
    $region71: #{vae_forward.1} parent=1 // pred_check_branch
      %155 = sbr.rel (0) target = $region73
    $region72: #{vae_forward.1} parent=1 // pred_region
      %156 = dma.done [#allocation15], 64
    $region73: #{vae_forward.1} parent=1 // pred_fallthru
      _
    // Predicated region
    $region74: #{vae_forward.1} parent=1 // pred_check
      _
    $region75: #{vae_forward.1} parent=1 // pred_check_branch
      %158 = sbr.rel (0) target = $region77
    $region76: #{vae_forward.1} parent=1 // pred_region
      %159 = dma.done [#allocation15], 22400
    $region77: #{vae_forward.1} parent=1 // pred_fallthru
      _
    // Predicated region
    $region78: #{vae_forward.1} parent=1 // pred_check
      _
    $region79: #{vae_forward.1} parent=1 // pred_check_branch
      %161 = sbr.rel (0) target = $region81
    $region80: #{vae_forward.1} parent=1 // pred_region
      %162 = dma.done [#allocation18], 112
    $region81: #{vae_forward.1} parent=1 // pred_fallthru
      _
    %v164 = vld [vmem:[#allocation2] sm:$0xff]
    %v165 = vld [vmem:[#allocation2 + $0x8] sm:$0xff]
    %v166 = vld [vmem:[#allocation2 + $0x10] sm:$0xff]
    %v167 = vld [vmem:[#allocation2 + $0x18] sm:$0xf]
    %v168 = vld [vmem:[#allocation5] sm:$0xff]
    %v169 = vld [vmem:[#allocation7] sm:$0xff]
    %v170 = vld [vmem:[#allocation7 + $0x8] sm:$0xff]
    %v171 = vld [vmem:[#allocation7 + $0x10] sm:$0xff]
    %v172 = vld [vmem:[#allocation7 + $0x18] sm:$0xff]
    %v173 = vld [vmem:[#allocation7 + $0x20] sm:$0xff]
    %v174 = vld [vmem:[#allocation7 + $0x28] sm:$0xff]
    %v175 = vld [vmem:[#allocation7 + $0x30] sm:$0xff]
    %v176 = vld [vmem:[#allocation7 + $0x38] sm:$0xff]
    %v177 = vld [vmem:[#allocation7 + $0x40] sm:$0xff]
    %v178 = vld [vmem:[#allocation7 + $0x48] sm:$0xff]
    %v179 = vld [vmem:[#allocation7 + $0x50] sm:$0xff]
    %v180 = vld [vmem:[#allocation7 + $0x58] sm:$0xff]
    %v181 = vld [vmem:[#allocation7 + $0x60] sm:$0xff]
    %v182 = vld [vmem:[#allocation7 + $0x68] sm:$0xff]
    %v183 = vld [vmem:[#allocation7 + $0x70] sm:$0xff]
    %v184 = vld [vmem:[#allocation7 + $0x78] sm:$0xff]
    %v185 = vld [vmem:[#allocation7 + $0x80] sm:$0xff]
    %v186 = vld [vmem:[#allocation7 + $0x88] sm:$0xff]
    %v187 = vld [vmem:[#allocation7 + $0x90] sm:$0xff]
    %v188 = vld [vmem:[#allocation7 + $0x98] sm:$0xff]
    %v189 = vld [vmem:[#allocation7 + $0xa0] sm:$0xff]
    %v190 = vld [vmem:[#allocation7 + $0xa8] sm:$0xff]
    %v191 = vld [vmem:[#allocation7 + $0xb0] sm:$0xff]
    %v192 = vld [vmem:[#allocation7 + $0xb8] sm:$0xff]
    %v193 = vld [vmem:[#allocation7 + $0xc0] sm:$0xff]
    %v194 = vld [vmem:[#allocation7 + $0xc8] sm:$0xff]
    %v195 = vld [vmem:[#allocation7 + $0xd0] sm:$0xff]
    %v196 = vld [vmem:[#allocation7 + $0xd8] sm:$0xff]
    %v197 = vld [vmem:[#allocation7 + $0xe0] sm:$0xff]
    %v198 = vld [vmem:[#allocation7 + $0xe8] sm:$0xff]
    %v199 = vld [vmem:[#allocation7 + $0xf0] sm:$0xff]
    %v200 = vld [vmem:[#allocation7 + $0xf8] sm:$0xff]
    %v201 = vld [vmem:[#allocation7 + $0x100] sm:$0xff]
    %v202 = vld [vmem:[#allocation7 + $0x108] sm:$0xff]
    %v203 = vld [vmem:[#allocation7 + $0x110] sm:$0xff]
    %v204 = vld [vmem:[#allocation7 + $0x118] sm:$0xff]
    %v205 = vld [vmem:[#allocation7 + $0x120] sm:$0xff]
    %v206 = vld [vmem:[#allocation7 + $0x128] sm:$0xff]
    %v207 = vld [vmem:[#allocation7 + $0x130] sm:$0xff]
    %v208 = vld [vmem:[#allocation7 + $0x138] sm:$0xff]
    %v209 = vld [vmem:[#allocation7 + $0x140] sm:$0xff]
    %v210 = vld [vmem:[#allocation7 + $0x148] sm:$0xff]
    %v211 = vld [vmem:[#allocation7 + $0x150] sm:$0xff]
    %v212 = vld [vmem:[#allocation7 + $0x158] sm:$0xff]
    %v213 = vld [vmem:[#allocation7 + $0x160] sm:$0xff]
    %v214 = vld [vmem:[#allocation7 + $0x168] sm:$0xff]
    %v215 = vld [vmem:[#allocation7 + $0x170] sm:$0xff]
    %v216 = vld [vmem:[#allocation7 + $0x178] sm:$0xff]
    %v217 = vld [vmem:[#allocation7 + $0x180] sm:$0xff]
    %v218 = vld [vmem:[#allocation7 + $0x188] sm:$0xff]
    %v219 = vld [vmem:[#allocation7 + $0x190] sm:$0xff]
    %v220 = vld [vmem:[#allocation7 + $0x198] sm:$0xff]
    %v221 = vld [vmem:[#allocation7 + $0x1a0] sm:$0xff]
    %v222 = vld [vmem:[#allocation7 + $0x1a8] sm:$0xff]
    %v223 = vld [vmem:[#allocation7 + $0x1b0] sm:$0xff]
    %v224 = vld [vmem:[#allocation7 + $0x1b8] sm:$0xff]
    %v225 = vld [vmem:[#allocation7 + $0x1c0] sm:$0xff]
    %v226 = vld [vmem:[#allocation7 + $0x1c8] sm:$0xff]
    %v227 = vld [vmem:[#allocation7 + $0x1d0] sm:$0xff]
    %v228 = vld [vmem:[#allocation7 + $0x1d8] sm:$0xff]
    %v229 = vld [vmem:[#allocation7 + $0x1e0] sm:$0xff]
    %v230 = vld [vmem:[#allocation7 + $0x1e8] sm:$0xff]
    %v231 = vld [vmem:[#allocation7 + $0x1f0] sm:$0xff]
    %v232 = vld [vmem:[#allocation7 + $0x1f8] sm:$0xff]
    %v233 = vld [vmem:[#allocation7 + $0x200] sm:$0xff]
    %v234 = vld [vmem:[#allocation7 + $0x208] sm:$0xff]
    %v235 = vld [vmem:[#allocation7 + $0x210] sm:$0xff]
    %v236 = vld [vmem:[#allocation7 + $0x218] sm:$0xff]
    %v237 = vld [vmem:[#allocation7 + $0x220] sm:$0xff]
    %v238 = vld [vmem:[#allocation7 + $0x228] sm:$0xff]
    %v239 = vld [vmem:[#allocation7 + $0x230] sm:$0xff]
    %v240 = vld [vmem:[#allocation7 + $0x238] sm:$0xff]
    %v241 = vld [vmem:[#allocation7 + $0x240] sm:$0xff]
    %v242 = vld [vmem:[#allocation7 + $0x248] sm:$0xff]
    %v243 = vld [vmem:[#allocation7 + $0x250] sm:$0xff]
    %v244 = vld [vmem:[#allocation7 + $0x258] sm:$0xff]
    %v245 = vld [vmem:[#allocation7 + $0x260] sm:$0xff]
    %v246 = vld [vmem:[#allocation7 + $0x268] sm:$0xff]
    %v247 = vld [vmem:[#allocation7 + $0x270] sm:$0xff]
    %v248 = vld [vmem:[#allocation7 + $0x278] sm:$0xff]
    %v249 = vld [vmem:[#allocation7 + $0x280] sm:$0xff]
    %v250 = vld [vmem:[#allocation7 + $0x288] sm:$0xff]
    %v251 = vld [vmem:[#allocation7 + $0x290] sm:$0xff]
    %v252 = vld [vmem:[#allocation7 + $0x298] sm:$0xff]
    %v253 = vld [vmem:[#allocation7 + $0x2a0] sm:$0xff]
    %v254 = vld [vmem:[#allocation7 + $0x2a8] sm:$0xff]
    %v255 = vld [vmem:[#allocation7 + $0x2b0] sm:$0xff]
    %v256 = vld [vmem:[#allocation7 + $0x2b8] sm:$0xff]
    %v257 = vld [vmem:[#allocation7 + $0x2c0] sm:$0xff]
    %v258 = vld [vmem:[#allocation7 + $0x2c8] sm:$0xff]
    %v259 = vld [vmem:[#allocation7 + $0x2d0] sm:$0xff]
    %v260 = vld [vmem:[#allocation7 + $0x2d8] sm:$0xff]
    %v261 = vld [vmem:[#allocation7 + $0x2e0] sm:$0xff]
    %v262 = vld [vmem:[#allocation7 + $0x2e8] sm:$0xff]
    %v263 = vld [vmem:[#allocation7 + $0x2f0] sm:$0xff]
    %v264 = vld [vmem:[#allocation7 + $0x2f8] sm:$0xff]
    %v265 = vld [vmem:[#allocation7 + $0x300] sm:$0xff]
    %v266 = vld [vmem:[#allocation7 + $0x308] sm:$0xff]
    %v267 = vld [vmem:[#allocation7 + $0x310] sm:$0xff]
    %v268 = vld [vmem:[#allocation7 + $0x318] sm:$0xff]
    %v269 = vld [vmem:[#allocation7 + $0x320] sm:$0xff]
    %v270 = vld [vmem:[#allocation7 + $0x328] sm:$0xff]
    %v271 = vld [vmem:[#allocation7 + $0x330] sm:$0xff]
    %v272 = vld [vmem:[#allocation7 + $0x338] sm:$0xff]
    %v273 = vld [vmem:[#allocation7 + $0x340] sm:$0xff]
    %v274 = vld [vmem:[#allocation7 + $0x348] sm:$0xff]
    %v275 = vld [vmem:[#allocation7 + $0x350] sm:$0xff]
    %v276 = vld [vmem:[#allocation7 + $0x358] sm:$0xff]
    %v277 = vld [vmem:[#allocation7 + $0x360] sm:$0xff]
    %v278 = vld [vmem:[#allocation7 + $0x368] sm:$0xff]
    %v279 = vld [vmem:[#allocation7 + $0x370] sm:$0xff]
    %v280 = vld [vmem:[#allocation7 + $0x378] sm:$0xff]
    %v281 = vld [vmem:[#allocation7 + $0x380] sm:$0xff]
    %v282 = vld [vmem:[#allocation7 + $0x388] sm:$0xff]
    %v283 = vld [vmem:[#allocation7 + $0x390] sm:$0xff]
    %v284 = vld [vmem:[#allocation7 + $0x398] sm:$0xff]
    %v285 = vld [vmem:[#allocation7 + $0x3a0] sm:$0xff]
    %v286 = vld [vmem:[#allocation7 + $0x3a8] sm:$0xff]
    %v287 = vld [vmem:[#allocation7 + $0x3b0] sm:$0xff]
    %v288 = vld [vmem:[#allocation7 + $0x3b8] sm:$0xff]
    %v289 = vld [vmem:[#allocation7 + $0x3c0] sm:$0xff]
    %v290 = vld [vmem:[#allocation7 + $0x3c8] sm:$0xff]
    %v291 = vld [vmem:[#allocation7 + $0x3d0] sm:$0xff]
    %v292 = vld [vmem:[#allocation7 + $0x3d8] sm:$0xff]
    %v293 = vld [vmem:[#allocation7 + $0x3e0] sm:$0xff]
    %v294 = vld [vmem:[#allocation7 + $0x3e8] sm:$0xff]
    %v295 = vld [vmem:[#allocation7 + $0x3f0] sm:$0xff]
    %v296 = vld [vmem:[#allocation7 + $0x3f8] sm:$0xff]
    %v297 = vld [vmem:[#allocation7 + $0x400] sm:$0xff]
    %v298 = vld [vmem:[#allocation7 + $0x408] sm:$0xff]
    %v299 = vld [vmem:[#allocation7 + $0x410] sm:$0xff]
    %v300 = vld [vmem:[#allocation7 + $0x418] sm:$0xff]
    %v301 = vld [vmem:[#allocation7 + $0x420] sm:$0xff]
    %v302 = vld [vmem:[#allocation7 + $0x428] sm:$0xff]
    %v303 = vld [vmem:[#allocation7 + $0x430] sm:$0xff]
    %v304 = vld [vmem:[#allocation7 + $0x438] sm:$0xff]
    %v305 = vld [vmem:[#allocation7 + $0x440] sm:$0xff]
    %v306 = vld [vmem:[#allocation7 + $0x448] sm:$0xff]
    %v307 = vld [vmem:[#allocation7 + $0x450] sm:$0xff]
    %v308 = vld [vmem:[#allocation7 + $0x458] sm:$0xff]
    %v309 = vld [vmem:[#allocation7 + $0x460] sm:$0xff]
    %v310 = vld [vmem:[#allocation7 + $0x468] sm:$0xff]
    %v311 = vld [vmem:[#allocation7 + $0x470] sm:$0xff]
    %v312 = vld [vmem:[#allocation7 + $0x478] sm:$0xff]
    %v313 = vld [vmem:[#allocation7 + $0x480] sm:$0xff]
    %v314 = vld [vmem:[#allocation7 + $0x488] sm:$0xff]
    %v315 = vld [vmem:[#allocation7 + $0x490] sm:$0xff]
    %v316 = vld [vmem:[#allocation7 + $0x498] sm:$0xff]
    %v317 = vld [vmem:[#allocation7 + $0x4a0] sm:$0xff]
    %v318 = vld [vmem:[#allocation7 + $0x4a8] sm:$0xff]
    %v319 = vld [vmem:[#allocation7 + $0x4b0] sm:$0xff]
    %v320 = vld [vmem:[#allocation7 + $0x4b8] sm:$0xff]
    %v321 = vld [vmem:[#allocation7 + $0x4c0] sm:$0xff]
    %v322 = vld [vmem:[#allocation7 + $0x4c8] sm:$0xff]
    %v323 = vld [vmem:[#allocation7 + $0x4d0] sm:$0xff]
    %v324 = vld [vmem:[#allocation7 + $0x4d8] sm:$0xff]
    %v325 = vld [vmem:[#allocation7 + $0x4e0] sm:$0xff]
    %v326 = vld [vmem:[#allocation7 + $0x4e8] sm:$0xff]
    %v327 = vld [vmem:[#allocation7 + $0x4f0] sm:$0xff]
    %v328 = vld [vmem:[#allocation7 + $0x4f8] sm:$0xff]
    %v329 = vld [vmem:[#allocation7 + $0x500] sm:$0xff]
    %v330 = vld [vmem:[#allocation7 + $0x508] sm:$0xff]
    %v331 = vld [vmem:[#allocation7 + $0x510] sm:$0xff]
    %v332 = vld [vmem:[#allocation7 + $0x518] sm:$0xff]
    %v333 = vld [vmem:[#allocation7 + $0x520] sm:$0xff]
    %v334 = vld [vmem:[#allocation7 + $0x528] sm:$0xff]
    %v335 = vld [vmem:[#allocation7 + $0x530] sm:$0xff]
    %v336 = vld [vmem:[#allocation7 + $0x538] sm:$0xff]
    %v337 = vld [vmem:[#allocation7 + $0x540] sm:$0xff]
    %v338 = vld [vmem:[#allocation7 + $0x548] sm:$0xff]
    %v339 = vld [vmem:[#allocation7 + $0x550] sm:$0xff]
    %v340 = vld [vmem:[#allocation7 + $0x558] sm:$0xff]
    %v341 = vld [vmem:[#allocation7 + $0x560] sm:$0xff]
    %v342 = vld [vmem:[#allocation7 + $0x568] sm:$0xff]
    %v343 = vld [vmem:[#allocation7 + $0x570] sm:$0xff]
    %v344 = vld [vmem:[#allocation7 + $0x578] sm:$0xff]
    %v345 = vld [vmem:[#allocation7 + $0x580] sm:$0xff]
    %v346 = vld [vmem:[#allocation7 + $0x588] sm:$0xff]
    %v347 = vld [vmem:[#allocation7 + $0x590] sm:$0xff]
    %v348 = vld [vmem:[#allocation7 + $0x598] sm:$0xff]
    %v349 = vld [vmem:[#allocation7 + $0x5a0] sm:$0xff]
    %v350 = vld [vmem:[#allocation7 + $0x5a8] sm:$0xff]
    %v351 = vld [vmem:[#allocation7 + $0x5b0] sm:$0xff]
    %v352 = vld [vmem:[#allocation7 + $0x5b8] sm:$0xff]
    %v353 = vld [vmem:[#allocation7 + $0x5c0] sm:$0xff]
    %v354 = vld [vmem:[#allocation7 + $0x5c8] sm:$0xff]
    %v355 = vld [vmem:[#allocation7 + $0x5d0] sm:$0xff]
    %v356 = vld [vmem:[#allocation7 + $0x5d8] sm:$0xff]
    %v357 = vld [vmem:[#allocation7 + $0x5e0] sm:$0xff]
    %v358 = vld [vmem:[#allocation7 + $0x5e8] sm:$0xff]
    %v359 = vld [vmem:[#allocation7 + $0x5f0] sm:$0xff]
    %v360 = vld [vmem:[#allocation7 + $0x5f8] sm:$0xff]
    %v361 = vld [vmem:[#allocation7 + $0x600] sm:$0xff]
    %v362 = vld [vmem:[#allocation7 + $0x608] sm:$0xff]
    %v363 = vld [vmem:[#allocation7 + $0x610] sm:$0xff]
    %v364 = vld [vmem:[#allocation7 + $0x618] sm:$0xff]
    %v365 = vld [vmem:[#allocation8] sm:$0xf]
    %v367 = vlaneseq
    %v368 = vshrl.u32 %v367, 7
    %v369 = vsub.s32 0, %v368
    %v370 = vrot.slane %v365, %v369
    %v371 = vlaneseq
    %v372 = vshrl.u32 %v371, 7
    %v373 = vsub.s32 1, %v372
    %v374 = vrot.slane %v365, %v373
    %v375 = vlaneseq
    %v376 = vshrl.u32 %v375, 7
    %v377 = vsub.s32 2, %v376
    %v378 = vrot.slane %v365, %v377
    %v379 = vlaneseq
    %v380 = vshrl.u32 %v379, 7
    %v381 = vsub.s32 3, %v380
    %v382 = vrot.slane %v365, %v381
    %v391 = vunpack.c.l.b16 %v164
    %v392 = vunpack.c.h.b16 %v164
    %v393 = vunpack.c.l.b16 %v165
    %v394 = vunpack.c.h.b16 %v165
    %v395 = vunpack.c.l.b16 %v166
    %v396 = vunpack.c.h.b16 %v166
    %v397 = vunpack.c.l.b16 %v167
    %v398 = vpack.c.b16 %v391, %v391
    %v399 = vpack.c.b16 %v392, %v392
    %v400 = vpack.c.b16 %v393, %v393
    %v401 = vpack.c.b16 %v394, %v394
    %v402 = vpack.c.b16 %v395, %v395
    %v403 = vpack.c.b16 %v396, %v396
    %v404 = vpack.c.b16 %v397, %v397
    %v607 = vunpack.c.l.b16 %v169
    %v608 = vunpack.c.h.b16 %v169
    %v609 = vunpack.c.l.b16 %v170
    %v610 = vunpack.c.h.b16 %v170
    %v611 = vunpack.c.l.b16 %v171
    %v612 = vunpack.c.h.b16 %v171
    %v613 = vunpack.c.l.b16 %v172
    %v614 = vunpack.c.h.b16 %v172
    %v615 = vunpack.c.l.b16 %v173
    %v616 = vunpack.c.h.b16 %v173
    %v617 = vunpack.c.l.b16 %v174
    %v618 = vunpack.c.h.b16 %v174
    %v619 = vunpack.c.l.b16 %v175
    %v620 = vunpack.c.h.b16 %v175
    %v621 = vunpack.c.l.b16 %v176
    %v622 = vunpack.c.h.b16 %v176
    %v623 = vunpack.c.l.b16 %v177
    %v624 = vunpack.c.h.b16 %v177
    %v625 = vunpack.c.l.b16 %v178
    %v626 = vunpack.c.h.b16 %v178
    %v627 = vunpack.c.l.b16 %v179
    %v628 = vunpack.c.h.b16 %v179
    %v629 = vunpack.c.l.b16 %v180
    %v630 = vunpack.c.h.b16 %v180
    %v631 = vunpack.c.l.b16 %v181
    %v632 = vunpack.c.h.b16 %v181
    %v633 = vunpack.c.l.b16 %v182
    %v634 = vunpack.c.h.b16 %v182
    %v635 = vunpack.c.l.b16 %v183
    %v636 = vunpack.c.h.b16 %v183
    %v637 = vunpack.c.l.b16 %v184
    %v638 = vunpack.c.h.b16 %v184
    %v639 = vunpack.c.l.b16 %v185
    %v640 = vunpack.c.h.b16 %v185
    %v641 = vunpack.c.l.b16 %v186
    %v642 = vunpack.c.h.b16 %v186
    %v643 = vunpack.c.l.b16 %v187
    %v644 = vunpack.c.h.b16 %v187
    %v645 = vunpack.c.l.b16 %v188
    %v646 = vunpack.c.h.b16 %v188
    %v647 = vunpack.c.l.b16 %v189
    %v648 = vunpack.c.h.b16 %v189
    %v649 = vunpack.c.l.b16 %v190
    %v650 = vunpack.c.h.b16 %v190
    %v651 = vunpack.c.l.b16 %v191
    %v652 = vunpack.c.h.b16 %v191
    %v653 = vunpack.c.l.b16 %v192
    %v654 = vunpack.c.h.b16 %v192
    %v655 = vunpack.c.l.b16 %v193
    %v656 = vunpack.c.h.b16 %v193
    %v657 = vunpack.c.l.b16 %v194
    %v658 = vunpack.c.h.b16 %v194
    %v659 = vunpack.c.l.b16 %v195
    %v660 = vunpack.c.h.b16 %v195
    %v661 = vunpack.c.l.b16 %v196
    %v662 = vunpack.c.h.b16 %v196
    %v663 = vunpack.c.l.b16 %v197
    %v664 = vunpack.c.h.b16 %v197
    %v665 = vunpack.c.l.b16 %v198
    %v666 = vunpack.c.h.b16 %v198
    %v667 = vunpack.c.l.b16 %v199
    %v668 = vunpack.c.h.b16 %v199
    %v669 = vunpack.c.l.b16 %v200
    %v670 = vunpack.c.h.b16 %v200
    %v671 = vunpack.c.l.b16 %v201
    %v672 = vunpack.c.h.b16 %v201
    %v673 = vunpack.c.l.b16 %v202
    %v674 = vunpack.c.h.b16 %v202
    %v675 = vunpack.c.l.b16 %v203
    %v676 = vunpack.c.h.b16 %v203
    %v677 = vunpack.c.l.b16 %v204
    %v678 = vunpack.c.h.b16 %v204
    %v679 = vunpack.c.l.b16 %v205
    %v680 = vunpack.c.h.b16 %v205
    %v681 = vunpack.c.l.b16 %v206
    %v682 = vunpack.c.h.b16 %v206
    %v683 = vunpack.c.l.b16 %v207
    %v684 = vunpack.c.h.b16 %v207
    %v685 = vunpack.c.l.b16 %v208
    %v686 = vunpack.c.h.b16 %v208
    %v687 = vunpack.c.l.b16 %v209
    %v688 = vunpack.c.h.b16 %v209
    %v689 = vunpack.c.l.b16 %v210
    %v690 = vunpack.c.h.b16 %v210
    %v691 = vunpack.c.l.b16 %v211
    %v692 = vunpack.c.h.b16 %v211
    %v693 = vunpack.c.l.b16 %v212
    %v694 = vunpack.c.h.b16 %v212
    %v695 = vunpack.c.l.b16 %v213
    %v696 = vunpack.c.h.b16 %v213
    %v697 = vunpack.c.l.b16 %v214
    %v698 = vunpack.c.h.b16 %v214
    %v699 = vunpack.c.l.b16 %v215
    %v700 = vunpack.c.h.b16 %v215
    %v701 = vunpack.c.l.b16 %v216
    %v702 = vunpack.c.h.b16 %v216
    %v703 = vunpack.c.l.b16 %v217
    %v704 = vunpack.c.h.b16 %v217
    %v705 = vunpack.c.l.b16 %v218
    %v706 = vunpack.c.h.b16 %v218
    %v707 = vunpack.c.l.b16 %v219
    %v708 = vunpack.c.h.b16 %v219
    %v709 = vunpack.c.l.b16 %v220
    %v710 = vunpack.c.h.b16 %v220
    %v711 = vunpack.c.l.b16 %v221
    %v712 = vunpack.c.h.b16 %v221
    %v713 = vunpack.c.l.b16 %v222
    %v714 = vunpack.c.h.b16 %v222
    %v715 = vunpack.c.l.b16 %v223
    %v716 = vunpack.c.h.b16 %v223
    %v717 = vunpack.c.l.b16 %v224
    %v718 = vunpack.c.h.b16 %v224
    %v719 = vunpack.c.l.b16 %v225
    %v720 = vunpack.c.h.b16 %v225
    %v721 = vunpack.c.l.b16 %v226
    %v722 = vunpack.c.h.b16 %v226
    %v723 = vunpack.c.l.b16 %v227
    %v724 = vunpack.c.h.b16 %v227
    %v725 = vunpack.c.l.b16 %v228
    %v726 = vunpack.c.h.b16 %v228
    %v727 = vunpack.c.l.b16 %v229
    %v728 = vunpack.c.h.b16 %v229
    %v729 = vunpack.c.l.b16 %v230
    %v730 = vunpack.c.h.b16 %v230
    %v731 = vunpack.c.l.b16 %v231
    %v732 = vunpack.c.h.b16 %v231
    %v733 = vunpack.c.l.b16 %v232
    %v734 = vunpack.c.h.b16 %v232
    %v735 = vunpack.c.l.b16 %v233
    %v736 = vunpack.c.h.b16 %v233
    %v737 = vunpack.c.l.b16 %v234
    %v738 = vunpack.c.h.b16 %v234
    %v739 = vunpack.c.l.b16 %v235
    %v740 = vunpack.c.h.b16 %v235
    %v741 = vunpack.c.l.b16 %v236
    %v742 = vunpack.c.h.b16 %v236
    %v743 = vunpack.c.l.b16 %v237
    %v744 = vunpack.c.h.b16 %v237
    %v745 = vunpack.c.l.b16 %v238
    %v746 = vunpack.c.h.b16 %v238
    %v747 = vunpack.c.l.b16 %v239
    %v748 = vunpack.c.h.b16 %v239
    %v749 = vunpack.c.l.b16 %v240
    %v750 = vunpack.c.h.b16 %v240
    %v751 = vunpack.c.l.b16 %v241
    %v752 = vunpack.c.h.b16 %v241
    %v753 = vunpack.c.l.b16 %v242
    %v754 = vunpack.c.h.b16 %v242
    %v755 = vunpack.c.l.b16 %v243
    %v756 = vunpack.c.h.b16 %v243
    %v757 = vunpack.c.l.b16 %v244
    %v758 = vunpack.c.h.b16 %v244
    %v759 = vunpack.c.l.b16 %v245
    %v760 = vunpack.c.h.b16 %v245
    %v761 = vunpack.c.l.b16 %v246
    %v762 = vunpack.c.h.b16 %v246
    %v763 = vunpack.c.l.b16 %v247
    %v764 = vunpack.c.h.b16 %v247
    %v765 = vunpack.c.l.b16 %v248
    %v766 = vunpack.c.h.b16 %v248
    %v767 = vunpack.c.l.b16 %v249
    %v768 = vunpack.c.h.b16 %v249
    %v769 = vunpack.c.l.b16 %v250
    %v770 = vunpack.c.h.b16 %v250
    %v771 = vunpack.c.l.b16 %v251
    %v772 = vunpack.c.h.b16 %v251
    %v773 = vunpack.c.l.b16 %v252
    %v774 = vunpack.c.h.b16 %v252
    %v775 = vunpack.c.l.b16 %v253
    %v776 = vunpack.c.h.b16 %v253
    %v777 = vunpack.c.l.b16 %v254
    %v778 = vunpack.c.h.b16 %v254
    %v779 = vunpack.c.l.b16 %v255
    %v780 = vunpack.c.h.b16 %v255
    %v781 = vunpack.c.l.b16 %v256
    %v782 = vunpack.c.h.b16 %v256
    %v783 = vunpack.c.l.b16 %v257
    %v784 = vunpack.c.h.b16 %v257
    %v785 = vunpack.c.l.b16 %v258
    %v786 = vunpack.c.h.b16 %v258
    %v787 = vunpack.c.l.b16 %v259
    %v788 = vunpack.c.h.b16 %v259
    %v789 = vunpack.c.l.b16 %v260
    %v790 = vunpack.c.h.b16 %v260
    %v791 = vunpack.c.l.b16 %v261
    %v792 = vunpack.c.h.b16 %v261
    %v793 = vunpack.c.l.b16 %v262
    %v794 = vunpack.c.h.b16 %v262
    %v795 = vunpack.c.l.b16 %v263
    %v796 = vunpack.c.h.b16 %v263
    %v797 = vunpack.c.l.b16 %v264
    %v798 = vunpack.c.h.b16 %v264
    %v799 = vunpack.c.l.b16 %v265
    %v800 = vunpack.c.h.b16 %v265
    %v801 = vunpack.c.l.b16 %v266
    %v802 = vunpack.c.h.b16 %v266
    %v803 = vunpack.c.l.b16 %v267
    %v804 = vunpack.c.h.b16 %v267
    %v805 = vunpack.c.l.b16 %v268
    %v806 = vunpack.c.h.b16 %v268
    %v807 = vunpack.c.l.b16 %v269
    %v808 = vunpack.c.h.b16 %v269
    %v809 = vunpack.c.l.b16 %v270
    %v810 = vunpack.c.h.b16 %v270
    %v811 = vunpack.c.l.b16 %v271
    %v812 = vunpack.c.h.b16 %v271
    %v813 = vunpack.c.l.b16 %v272
    %v814 = vunpack.c.h.b16 %v272
    %v815 = vunpack.c.l.b16 %v273
    %v816 = vunpack.c.h.b16 %v273
    %v817 = vunpack.c.l.b16 %v274
    %v818 = vunpack.c.h.b16 %v274
    %v819 = vunpack.c.l.b16 %v275
    %v820 = vunpack.c.h.b16 %v275
    %v821 = vunpack.c.l.b16 %v276
    %v822 = vunpack.c.h.b16 %v276
    %v823 = vunpack.c.l.b16 %v277
    %v824 = vunpack.c.h.b16 %v277
    %v825 = vunpack.c.l.b16 %v278
    %v826 = vunpack.c.h.b16 %v278
    %v827 = vunpack.c.l.b16 %v279
    %v828 = vunpack.c.h.b16 %v279
    %v829 = vunpack.c.l.b16 %v280
    %v830 = vunpack.c.h.b16 %v280
    %v831 = vunpack.c.l.b16 %v281
    %v832 = vunpack.c.h.b16 %v281
    %v833 = vunpack.c.l.b16 %v282
    %v834 = vunpack.c.h.b16 %v282
    %v835 = vunpack.c.l.b16 %v283
    %v836 = vunpack.c.h.b16 %v283
    %v837 = vunpack.c.l.b16 %v284
    %v838 = vunpack.c.h.b16 %v284
    %v839 = vunpack.c.l.b16 %v285
    %v840 = vunpack.c.h.b16 %v285
    %v841 = vunpack.c.l.b16 %v286
    %v842 = vunpack.c.h.b16 %v286
    %v843 = vunpack.c.l.b16 %v287
    %v844 = vunpack.c.h.b16 %v287
    %v845 = vunpack.c.l.b16 %v288
    %v846 = vunpack.c.h.b16 %v288
    %v847 = vunpack.c.l.b16 %v289
    %v848 = vunpack.c.h.b16 %v289
    %v849 = vunpack.c.l.b16 %v290
    %v850 = vunpack.c.h.b16 %v290
    %v851 = vunpack.c.l.b16 %v291
    %v852 = vunpack.c.h.b16 %v291
    %v853 = vunpack.c.l.b16 %v292
    %v854 = vunpack.c.h.b16 %v292
    %v855 = vunpack.c.l.b16 %v293
    %v856 = vunpack.c.h.b16 %v293
    %v857 = vunpack.c.l.b16 %v294
    %v858 = vunpack.c.h.b16 %v294
    %v859 = vunpack.c.l.b16 %v295
    %v860 = vunpack.c.h.b16 %v295
    %v861 = vunpack.c.l.b16 %v296
    %v862 = vunpack.c.h.b16 %v296
    %v863 = vunpack.c.l.b16 %v297
    %v864 = vunpack.c.h.b16 %v297
    %v865 = vunpack.c.l.b16 %v298
    %v866 = vunpack.c.h.b16 %v298
    %v867 = vunpack.c.l.b16 %v299
    %v868 = vunpack.c.h.b16 %v299
    %v869 = vunpack.c.l.b16 %v300
    %v870 = vunpack.c.h.b16 %v300
    %v871 = vunpack.c.l.b16 %v301
    %v872 = vunpack.c.h.b16 %v301
    %v873 = vunpack.c.l.b16 %v302
    %v874 = vunpack.c.h.b16 %v302
    %v875 = vunpack.c.l.b16 %v303
    %v876 = vunpack.c.h.b16 %v303
    %v877 = vunpack.c.l.b16 %v304
    %v878 = vunpack.c.h.b16 %v304
    %v879 = vunpack.c.l.b16 %v305
    %v880 = vunpack.c.h.b16 %v305
    %v881 = vunpack.c.l.b16 %v306
    %v882 = vunpack.c.h.b16 %v306
    %v883 = vunpack.c.l.b16 %v307
    %v884 = vunpack.c.h.b16 %v307
    %v885 = vunpack.c.l.b16 %v308
    %v886 = vunpack.c.h.b16 %v308
    %v887 = vunpack.c.l.b16 %v309
    %v888 = vunpack.c.h.b16 %v309
    %v889 = vunpack.c.l.b16 %v310
    %v890 = vunpack.c.h.b16 %v310
    %v891 = vunpack.c.l.b16 %v311
    %v892 = vunpack.c.h.b16 %v311
    %v893 = vunpack.c.l.b16 %v312
    %v894 = vunpack.c.h.b16 %v312
    %v895 = vunpack.c.l.b16 %v313
    %v896 = vunpack.c.h.b16 %v313
    %v897 = vunpack.c.l.b16 %v314
    %v898 = vunpack.c.h.b16 %v314
    %v899 = vunpack.c.l.b16 %v315
    %v900 = vunpack.c.h.b16 %v315
    %v901 = vunpack.c.l.b16 %v316
    %v902 = vunpack.c.h.b16 %v316
    %v903 = vunpack.c.l.b16 %v317
    %v904 = vunpack.c.h.b16 %v317
    %v905 = vunpack.c.l.b16 %v318
    %v906 = vunpack.c.h.b16 %v318
    %v907 = vunpack.c.l.b16 %v319
    %v908 = vunpack.c.h.b16 %v319
    %v909 = vunpack.c.l.b16 %v320
    %v910 = vunpack.c.h.b16 %v320
    %v911 = vunpack.c.l.b16 %v321
    %v912 = vunpack.c.h.b16 %v321
    %v913 = vunpack.c.l.b16 %v322
    %v914 = vunpack.c.h.b16 %v322
    %v915 = vunpack.c.l.b16 %v323
    %v916 = vunpack.c.h.b16 %v323
    %v917 = vunpack.c.l.b16 %v324
    %v918 = vunpack.c.h.b16 %v324
    %v919 = vunpack.c.l.b16 %v325
    %v920 = vunpack.c.h.b16 %v325
    %v921 = vunpack.c.l.b16 %v326
    %v922 = vunpack.c.h.b16 %v326
    %v923 = vunpack.c.l.b16 %v327
    %v924 = vunpack.c.h.b16 %v327
    %v925 = vunpack.c.l.b16 %v328
    %v926 = vunpack.c.h.b16 %v328
    %v927 = vunpack.c.l.b16 %v329
    %v928 = vunpack.c.h.b16 %v329
    %v929 = vunpack.c.l.b16 %v330
    %v930 = vunpack.c.h.b16 %v330
    %v931 = vunpack.c.l.b16 %v331
    %v932 = vunpack.c.h.b16 %v331
    %v933 = vunpack.c.l.b16 %v332
    %v934 = vunpack.c.h.b16 %v332
    %v935 = vunpack.c.l.b16 %v333
    %v936 = vunpack.c.h.b16 %v333
    %v937 = vunpack.c.l.b16 %v334
    %v938 = vunpack.c.h.b16 %v334
    %v939 = vunpack.c.l.b16 %v335
    %v940 = vunpack.c.h.b16 %v335
    %v941 = vunpack.c.l.b16 %v336
    %v942 = vunpack.c.h.b16 %v336
    %v943 = vunpack.c.l.b16 %v337
    %v944 = vunpack.c.h.b16 %v337
    %v945 = vunpack.c.l.b16 %v338
    %v946 = vunpack.c.h.b16 %v338
    %v947 = vunpack.c.l.b16 %v339
    %v948 = vunpack.c.h.b16 %v339
    %v949 = vunpack.c.l.b16 %v340
    %v950 = vunpack.c.h.b16 %v340
    %v951 = vunpack.c.l.b16 %v341
    %v952 = vunpack.c.h.b16 %v341
    %v953 = vunpack.c.l.b16 %v342
    %v954 = vunpack.c.h.b16 %v342
    %v955 = vunpack.c.l.b16 %v343
    %v956 = vunpack.c.h.b16 %v343
    %v957 = vunpack.c.l.b16 %v344
    %v958 = vunpack.c.h.b16 %v344
    %v959 = vunpack.c.l.b16 %v345
    %v960 = vunpack.c.h.b16 %v345
    %v961 = vunpack.c.l.b16 %v346
    %v962 = vunpack.c.h.b16 %v346
    %v963 = vunpack.c.l.b16 %v347
    %v964 = vunpack.c.h.b16 %v347
    %v965 = vunpack.c.l.b16 %v348
    %v966 = vunpack.c.h.b16 %v348
    %v967 = vunpack.c.l.b16 %v349
    %v968 = vunpack.c.h.b16 %v349
    %v969 = vunpack.c.l.b16 %v350
    %v970 = vunpack.c.h.b16 %v350
    %v971 = vunpack.c.l.b16 %v351
    %v972 = vunpack.c.h.b16 %v351
    %v973 = vunpack.c.l.b16 %v352
    %v974 = vunpack.c.h.b16 %v352
    %v975 = vunpack.c.l.b16 %v353
    %v976 = vunpack.c.h.b16 %v353
    %v977 = vunpack.c.l.b16 %v354
    %v978 = vunpack.c.h.b16 %v354
    %v979 = vunpack.c.l.b16 %v355
    %v980 = vunpack.c.h.b16 %v355
    %v981 = vunpack.c.l.b16 %v356
    %v982 = vunpack.c.h.b16 %v356
    %v983 = vunpack.c.l.b16 %v357
    %v984 = vunpack.c.h.b16 %v357
    %v985 = vunpack.c.l.b16 %v358
    %v986 = vunpack.c.h.b16 %v358
    %v987 = vunpack.c.l.b16 %v359
    %v988 = vunpack.c.h.b16 %v359
    %v989 = vunpack.c.l.b16 %v360
    %v990 = vunpack.c.h.b16 %v360
    %v991 = vunpack.c.l.b16 %v361
    %v992 = vunpack.c.h.b16 %v361
    %v993 = vunpack.c.l.b16 %v362
    %v994 = vunpack.c.h.b16 %v362
    %v995 = vunpack.c.l.b16 %v363
    %v996 = vunpack.c.h.b16 %v363
    %v997 = vunpack.c.l.b16 %v364
    %v998 = vunpack.c.h.b16 %v364
    %v999 = vpack.c.b16 %v611, %v607
    %v1000 = vpack.c.b16 %v612, %v608
    %v1001 = vpack.c.b16 %v613, %v609
    %v1002 = vpack.c.b16 %v614, %v610
    %v1003 = vpack.c.b16 %v619, %v615
    %v1004 = vpack.c.b16 %v620, %v616
    %v1005 = vpack.c.b16 %v621, %v617
    %v1006 = vpack.c.b16 %v622, %v618
    %v1007 = vpack.c.b16 %v627, %v623
    %v1008 = vpack.c.b16 %v628, %v624
    %v1009 = vpack.c.b16 %v629, %v625
    %v1010 = vpack.c.b16 %v630, %v626
    %v1011 = vpack.c.b16 %v635, %v631
    %v1012 = vpack.c.b16 %v636, %v632
    %v1013 = vpack.c.b16 %v637, %v633
    %v1014 = vpack.c.b16 %v638, %v634
    %v1015 = vpack.c.b16 %v643, %v639
    %v1016 = vpack.c.b16 %v644, %v640
    %v1017 = vpack.c.b16 %v645, %v641
    %v1018 = vpack.c.b16 %v646, %v642
    %v1019 = vpack.c.b16 %v651, %v647
    %v1020 = vpack.c.b16 %v652, %v648
    %v1021 = vpack.c.b16 %v653, %v649
    %v1022 = vpack.c.b16 %v654, %v650
    %v1023 = vpack.c.b16 %v659, %v655
    %v1024 = vpack.c.b16 %v660, %v656
    %v1025 = vpack.c.b16 %v661, %v657
    %v1026 = vpack.c.b16 %v662, %v658
    %v1027 = vpack.c.b16 %v667, %v663
    %v1028 = vpack.c.b16 %v668, %v664
    %v1029 = vpack.c.b16 %v669, %v665
    %v1030 = vpack.c.b16 %v670, %v666
    %v1031 = vpack.c.b16 %v675, %v671
    %v1032 = vpack.c.b16 %v676, %v672
    %v1033 = vpack.c.b16 %v677, %v673
    %v1034 = vpack.c.b16 %v678, %v674
    %v1035 = vpack.c.b16 %v683, %v679
    %v1036 = vpack.c.b16 %v684, %v680
    %v1037 = vpack.c.b16 %v685, %v681
    %v1038 = vpack.c.b16 %v686, %v682
    %v1039 = vpack.c.b16 %v691, %v687
    %v1040 = vpack.c.b16 %v692, %v688
    %v1041 = vpack.c.b16 %v693, %v689
    %v1042 = vpack.c.b16 %v694, %v690
    %v1043 = vpack.c.b16 %v699, %v695
    %v1044 = vpack.c.b16 %v700, %v696
    %v1045 = vpack.c.b16 %v701, %v697
    %v1046 = vpack.c.b16 %v702, %v698
    %v1047 = vpack.c.b16 %v707, %v703
    %v1048 = vpack.c.b16 %v708, %v704
    %v1049 = vpack.c.b16 %v709, %v705
    %v1050 = vpack.c.b16 %v710, %v706
    %v1051 = vpack.c.b16 %v715, %v711
    %v1052 = vpack.c.b16 %v716, %v712
    %v1053 = vpack.c.b16 %v717, %v713
    %v1054 = vpack.c.b16 %v718, %v714
    %v1055 = vpack.c.b16 %v723, %v719
    %v1056 = vpack.c.b16 %v724, %v720
    %v1057 = vpack.c.b16 %v725, %v721
    %v1058 = vpack.c.b16 %v726, %v722
    %v1059 = vpack.c.b16 %v731, %v727
    %v1060 = vpack.c.b16 %v732, %v728
    %v1061 = vpack.c.b16 %v733, %v729
    %v1062 = vpack.c.b16 %v734, %v730
    %v1063 = vpack.c.b16 %v739, %v735
    %v1064 = vpack.c.b16 %v740, %v736
    %v1065 = vpack.c.b16 %v741, %v737
    %v1066 = vpack.c.b16 %v742, %v738
    %v1067 = vpack.c.b16 %v747, %v743
    %v1068 = vpack.c.b16 %v748, %v744
    %v1069 = vpack.c.b16 %v749, %v745
    %v1070 = vpack.c.b16 %v750, %v746
    %v1071 = vpack.c.b16 %v755, %v751
    %v1072 = vpack.c.b16 %v756, %v752
    %v1073 = vpack.c.b16 %v757, %v753
    %v1074 = vpack.c.b16 %v758, %v754
    %v1075 = vpack.c.b16 %v763, %v759
    %v1076 = vpack.c.b16 %v764, %v760
    %v1077 = vpack.c.b16 %v765, %v761
    %v1078 = vpack.c.b16 %v766, %v762
    %v1079 = vpack.c.b16 %v771, %v767
    %v1080 = vpack.c.b16 %v772, %v768
    %v1081 = vpack.c.b16 %v773, %v769
    %v1082 = vpack.c.b16 %v774, %v770
    %v1083 = vpack.c.b16 %v779, %v775
    %v1084 = vpack.c.b16 %v780, %v776
    %v1085 = vpack.c.b16 %v781, %v777
    %v1086 = vpack.c.b16 %v782, %v778
    %v1087 = vpack.c.b16 %v787, %v783
    %v1088 = vpack.c.b16 %v788, %v784
    %v1089 = vpack.c.b16 %v789, %v785
    %v1090 = vpack.c.b16 %v790, %v786
    %v1091 = vpack.c.b16 %v795, %v791
    %v1092 = vpack.c.b16 %v796, %v792
    %v1093 = vpack.c.b16 %v797, %v793
    %v1094 = vpack.c.b16 %v798, %v794
    %v1095 = vpack.c.b16 %v803, %v799
    %v1096 = vpack.c.b16 %v804, %v800
    %v1097 = vpack.c.b16 %v805, %v801
    %v1098 = vpack.c.b16 %v806, %v802
    %v1099 = vpack.c.b16 %v811, %v807
    %v1100 = vpack.c.b16 %v812, %v808
    %v1101 = vpack.c.b16 %v813, %v809
    %v1102 = vpack.c.b16 %v814, %v810
    %v1103 = vpack.c.b16 %v819, %v815
    %v1104 = vpack.c.b16 %v820, %v816
    %v1105 = vpack.c.b16 %v821, %v817
    %v1106 = vpack.c.b16 %v822, %v818
    %v1107 = vpack.c.b16 %v827, %v823
    %v1108 = vpack.c.b16 %v828, %v824
    %v1109 = vpack.c.b16 %v829, %v825
    %v1110 = vpack.c.b16 %v830, %v826
    %v1111 = vpack.c.b16 %v835, %v831
    %v1112 = vpack.c.b16 %v836, %v832
    %v1113 = vpack.c.b16 %v837, %v833
    %v1114 = vpack.c.b16 %v838, %v834
    %v1115 = vpack.c.b16 %v843, %v839
    %v1116 = vpack.c.b16 %v844, %v840
    %v1117 = vpack.c.b16 %v845, %v841
    %v1118 = vpack.c.b16 %v846, %v842
    %v1119 = vpack.c.b16 %v851, %v847
    %v1120 = vpack.c.b16 %v852, %v848
    %v1121 = vpack.c.b16 %v853, %v849
    %v1122 = vpack.c.b16 %v854, %v850
    %v1123 = vpack.c.b16 %v859, %v855
    %v1124 = vpack.c.b16 %v860, %v856
    %v1125 = vpack.c.b16 %v861, %v857
    %v1126 = vpack.c.b16 %v862, %v858
    %v1127 = vpack.c.b16 %v867, %v863
    %v1128 = vpack.c.b16 %v868, %v864
    %v1129 = vpack.c.b16 %v869, %v865
    %v1130 = vpack.c.b16 %v870, %v866
    %v1131 = vpack.c.b16 %v875, %v871
    %v1132 = vpack.c.b16 %v876, %v872
    %v1133 = vpack.c.b16 %v877, %v873
    %v1134 = vpack.c.b16 %v878, %v874
    %v1135 = vpack.c.b16 %v883, %v879
    %v1136 = vpack.c.b16 %v884, %v880
    %v1137 = vpack.c.b16 %v885, %v881
    %v1138 = vpack.c.b16 %v886, %v882
    %v1139 = vpack.c.b16 %v891, %v887
    %v1140 = vpack.c.b16 %v892, %v888
    %v1141 = vpack.c.b16 %v893, %v889
    %v1142 = vpack.c.b16 %v894, %v890
    %v1143 = vpack.c.b16 %v899, %v895
    %v1144 = vpack.c.b16 %v900, %v896
    %v1145 = vpack.c.b16 %v901, %v897
    %v1146 = vpack.c.b16 %v902, %v898
    %v1147 = vpack.c.b16 %v907, %v903
    %v1148 = vpack.c.b16 %v908, %v904
    %v1149 = vpack.c.b16 %v909, %v905
    %v1150 = vpack.c.b16 %v910, %v906
    %v1151 = vpack.c.b16 %v915, %v911
    %v1152 = vpack.c.b16 %v916, %v912
    %v1153 = vpack.c.b16 %v917, %v913
    %v1154 = vpack.c.b16 %v918, %v914
    %v1155 = vpack.c.b16 %v923, %v919
    %v1156 = vpack.c.b16 %v924, %v920
    %v1157 = vpack.c.b16 %v925, %v921
    %v1158 = vpack.c.b16 %v926, %v922
    %v1159 = vpack.c.b16 %v931, %v927
    %v1160 = vpack.c.b16 %v932, %v928
    %v1161 = vpack.c.b16 %v933, %v929
    %v1162 = vpack.c.b16 %v934, %v930
    %v1163 = vpack.c.b16 %v939, %v935
    %v1164 = vpack.c.b16 %v940, %v936
    %v1165 = vpack.c.b16 %v941, %v937
    %v1166 = vpack.c.b16 %v942, %v938
    %v1167 = vpack.c.b16 %v947, %v943
    %v1168 = vpack.c.b16 %v948, %v944
    %v1169 = vpack.c.b16 %v949, %v945
    %v1170 = vpack.c.b16 %v950, %v946
    %v1171 = vpack.c.b16 %v955, %v951
    %v1172 = vpack.c.b16 %v956, %v952
    %v1173 = vpack.c.b16 %v957, %v953
    %v1174 = vpack.c.b16 %v958, %v954
    %v1175 = vpack.c.b16 %v963, %v959
    %v1176 = vpack.c.b16 %v964, %v960
    %v1177 = vpack.c.b16 %v965, %v961
    %v1178 = vpack.c.b16 %v966, %v962
    %v1179 = vpack.c.b16 %v971, %v967
    %v1180 = vpack.c.b16 %v972, %v968
    %v1181 = vpack.c.b16 %v973, %v969
    %v1182 = vpack.c.b16 %v974, %v970
    %v1183 = vpack.c.b16 %v979, %v975
    %v1184 = vpack.c.b16 %v980, %v976
    %v1185 = vpack.c.b16 %v981, %v977
    %v1186 = vpack.c.b16 %v982, %v978
    %v1187 = vpack.c.b16 %v987, %v983
    %v1188 = vpack.c.b16 %v988, %v984
    %v1189 = vpack.c.b16 %v989, %v985
    %v1190 = vpack.c.b16 %v990, %v986
    %v1191 = vpack.c.b16 %v995, %v991
    %v1192 = vpack.c.b16 %v996, %v992
    %v1193 = vpack.c.b16 %v997, %v993
    %v1194 = vpack.c.b16 %v998, %v994
    %vm1391 = vcmask 130048
    %v1393 = vsel %vm1391, %v404, 0
    %1395 = vmatprep.subr.bf16.mxu0 %v1000
    %1396 = vmatpush1.bf16.msra.mxu0 %v999
    %1397 = vmatprep.subr.bf16.mxu0 %v1004
    %1398 = vmatpush1.bf16.msra.mxu0 %v1003
    %1399 = vmatprep.subr.bf16.mxu0 %v1008
    %1400 = vmatpush1.bf16.msra.mxu0 %v1007
    %1401 = vmatprep.subr.bf16.mxu0 %v1012
    %1402 = vmatpush1.bf16.msra.mxu0 %v1011
    %1403 = vmatprep.subr.bf16.mxu0 %v1016
    %1404 = vmatpush1.bf16.msra.mxu0 %v1015
    %1405 = vmatprep.subr.bf16.mxu0 %v1020
    %1406 = vmatpush1.bf16.msra.mxu0 %v1019
    %1407 = vmatprep.subr.bf16.mxu0 %v1024
    %1408 = vmatpush1.bf16.msra.mxu0 %v1023
    %1409 = vmatprep.subr.bf16.mxu0 %v1028
    %1410 = vmatpush1.bf16.msra.mxu0 %v1027
    %1411 = vmatprep.subr.bf16.mxu0 %v1032
    %1412 = vmatpush1.bf16.msra.mxu0 %v1031
    %1413 = vmatprep.subr.bf16.mxu0 %v1036
    %1414 = vmatpush1.bf16.msra.mxu0 %v1035
    %1415 = vmatprep.subr.bf16.mxu0 %v1040
    %1416 = vmatpush1.bf16.msra.mxu0 %v1039
    %1417 = vmatprep.subr.bf16.mxu0 %v1044
    %1418 = vmatpush1.bf16.msra.mxu0 %v1043
    %1419 = vmatprep.subr.bf16.mxu0 %v1048
    %1420 = vmatpush1.bf16.msra.mxu0 %v1047
    %1421 = vmatprep.subr.bf16.mxu0 %v1052
    %1422 = vmatpush1.bf16.msra.mxu0 %v1051
    %1423 = vmatprep.subr.bf16.mxu0 %v1056
    %1424 = vmatpush1.bf16.msra.mxu0 %v1055
    %1425 = vmatprep.subr.bf16.mxu0 %v1060
    %1426 = vmatpush1.bf16.msra.mxu0 %v1059
    %1427 = vmatprep.mubr.bf16.mxu0 %v399
    %1428 = vmatmul.mubr.bf16.gmra.mrb[0].mxu0 %v398
    %v1429 = vpop.f32.mrb[0].mxu0
    %v1430 = vadd.f32 %v370, %v1429
    %v1431 = vpop.f32.mrb[0].mxu0
    %v1432 = vadd.f32 %v374, %v1431
    %v1433 = vpop.f32.mrb[0].mxu0
    %v1434 = vpop.f32.mrb[0].mxu0
    %1435 = vdwg.mxu0
    %1436 = vmatprep.subr.bf16.mxu0 %v1064
    %1437 = vmatpush1.bf16.msra.mxu0 %v1063
    %1438 = vmatprep.subr.bf16.mxu0 %v1068
    %1439 = vmatpush1.bf16.msra.mxu0 %v1067
    %1440 = vmatprep.subr.bf16.mxu0 %v1072
    %1441 = vmatpush1.bf16.msra.mxu0 %v1071
    %1442 = vmatprep.subr.bf16.mxu0 %v1076
    %1443 = vmatpush1.bf16.msra.mxu0 %v1075
    %1444 = vmatprep.subr.bf16.mxu0 %v1080
    %1445 = vmatpush1.bf16.msra.mxu0 %v1079
    %1446 = vmatprep.subr.bf16.mxu0 %v1084
    %1447 = vmatpush1.bf16.msra.mxu0 %v1083
    %1448 = vmatprep.subr.bf16.mxu0 %v1088
    %1449 = vmatpush1.bf16.msra.mxu0 %v1087
    %1450 = vmatprep.subr.bf16.mxu0 %v1092
    %1451 = vmatpush1.bf16.msra.mxu0 %v1091
    %1452 = vmatprep.subr.bf16.mxu0 %v1096
    %1453 = vmatpush1.bf16.msra.mxu0 %v1095
    %1454 = vmatprep.subr.bf16.mxu0 %v1100
    %1455 = vmatpush1.bf16.msra.mxu0 %v1099
    %1456 = vmatprep.subr.bf16.mxu0 %v1104
    %1457 = vmatpush1.bf16.msra.mxu0 %v1103
    %1458 = vmatprep.subr.bf16.mxu0 %v1108
    %1459 = vmatpush1.bf16.msra.mxu0 %v1107
    %1460 = vmatprep.subr.bf16.mxu0 %v1112
    %1461 = vmatpush1.bf16.msra.mxu0 %v1111
    %1462 = vmatprep.subr.bf16.mxu0 %v1116
    %1463 = vmatpush1.bf16.msra.mxu0 %v1115
    %1464 = vmatprep.subr.bf16.mxu0 %v1120
    %1465 = vmatpush1.bf16.msra.mxu0 %v1119
    %1466 = vmatprep.subr.bf16.mxu0 %v1124
    %1467 = vmatpush1.bf16.msra.mxu0 %v1123
    %1468 = vmatprep.mubr.bf16.mxu0 %v401
    %1469 = vmatmul.mubr.bf16.gmra.mrb[0].mxu0 %v400
    %v1470 = vpop.f32.mrb[0].mxu0
    %v1471 = vadd.f32 %v1430, %v1470
    %v1472 = vpop.f32.mrb[0].mxu0
    %v1473 = vadd.f32 %v1432, %v1472
    %v1474 = vpop.f32.mrb[0].mxu0
    %v1475 = vpop.f32.mrb[0].mxu0
    %1476 = vdwg.mxu0
    %1477 = vmatprep.subr.bf16.mxu0 %v1128
    %1478 = vmatpush1.bf16.msra.mxu0 %v1127
    %1479 = vmatprep.subr.bf16.mxu0 %v1132
    %1480 = vmatpush1.bf16.msra.mxu0 %v1131
    %1481 = vmatprep.subr.bf16.mxu0 %v1136
    %1482 = vmatpush1.bf16.msra.mxu0 %v1135
    %1483 = vmatprep.subr.bf16.mxu0 %v1140
    %1484 = vmatpush1.bf16.msra.mxu0 %v1139
    %1485 = vmatprep.subr.bf16.mxu0 %v1144
    %1486 = vmatpush1.bf16.msra.mxu0 %v1143
    %1487 = vmatprep.subr.bf16.mxu0 %v1148
    %1488 = vmatpush1.bf16.msra.mxu0 %v1147
    %1489 = vmatprep.subr.bf16.mxu0 %v1152
    %1490 = vmatpush1.bf16.msra.mxu0 %v1151
    %1491 = vmatprep.subr.bf16.mxu0 %v1156
    %1492 = vmatpush1.bf16.msra.mxu0 %v1155
    %1493 = vmatprep.subr.bf16.mxu0 %v1160
    %1494 = vmatpush1.bf16.msra.mxu0 %v1159
    %1495 = vmatprep.subr.bf16.mxu0 %v1164
    %1496 = vmatpush1.bf16.msra.mxu0 %v1163
    %1497 = vmatprep.subr.bf16.mxu0 %v1168
    %1498 = vmatpush1.bf16.msra.mxu0 %v1167
    %1499 = vmatprep.subr.bf16.mxu0 %v1172
    %1500 = vmatpush1.bf16.msra.mxu0 %v1171
    %1501 = vmatprep.subr.bf16.mxu0 %v1176
    %1502 = vmatpush1.bf16.msra.mxu0 %v1175
    %1503 = vmatprep.subr.bf16.mxu0 %v1180
    %1504 = vmatpush1.bf16.msra.mxu0 %v1179
    %1505 = vmatprep.subr.bf16.mxu0 %v1184
    %1506 = vmatpush1.bf16.msra.mxu0 %v1183
    %1507 = vmatprep.subr.bf16.mxu0 %v1188
    %1508 = vmatpush1.bf16.msra.mxu0 %v1187
    %1509 = vmatprep.mubr.bf16.mxu0 %v403
    %1510 = vmatmul.mubr.bf16.gmra.mrb[0].mxu0 %v402
    %v1511 = vpop.f32.mrb[0].mxu0
    %v1512 = vadd.f32 %v1471, %v1511
    %v1513 = vpop.f32.mrb[0].mxu0
    %v1514 = vadd.f32 %v1473, %v1513
    %v1515 = vpop.f32.mrb[0].mxu0
    %v1516 = vpop.f32.mrb[0].mxu0
    %1517 = vdwg.mxu0
    %1518 = vmatprep.subr.bf16.mxu0 %v1192
    %1519 = vmatpush1.bf16.msra.mxu0 %v1191
    %1520 = vmatprep.subr.bf16.mxu0 0
    %1521 = vmatpush1.bf16.msra.mxu0 0
    %1522 = vmatprep.subr.bf16.mxu0 0
    %1523 = vmatpush1.bf16.msra.mxu0 0
    %1524 = vmatprep.subr.bf16.mxu0 0
    %1525 = vmatpush1.bf16.msra.mxu0 0
    %1526 = vmatprep.subr.bf16.mxu0 0
    %1527 = vmatpush1.bf16.msra.mxu0 0
    %1528 = vmatprep.subr.bf16.mxu0 0
    %1529 = vmatpush1.bf16.msra.mxu0 0
    %1530 = vmatprep.subr.bf16.mxu0 0
    %1531 = vmatpush1.bf16.msra.mxu0 0
    %1532 = vmatprep.subr.bf16.mxu0 0
    %1533 = vmatpush1.bf16.msra.mxu0 0
    %1534 = vmatprep.subr.bf16.mxu0 0
    %1535 = vmatpush1.bf16.msra.mxu0 0
    %1536 = vmatprep.subr.bf16.mxu0 0
    %1537 = vmatpush1.bf16.msra.mxu0 0
    %1538 = vmatprep.subr.bf16.mxu0 0
    %1539 = vmatpush1.bf16.msra.mxu0 0
    %1540 = vmatprep.subr.bf16.mxu0 0
    %1541 = vmatpush1.bf16.msra.mxu0 0
    %1542 = vmatprep.subr.bf16.mxu0 0
    %1543 = vmatpush1.bf16.msra.mxu0 0
    %1544 = vmatprep.subr.bf16.mxu0 0
    %1545 = vmatpush1.bf16.msra.mxu0 0
    %1546 = vmatprep.subr.bf16.mxu0 0
    %1547 = vmatpush1.bf16.msra.mxu0 0
    %1548 = vmatprep.subr.bf16.mxu0 0
    %1549 = vmatpush1.bf16.msra.mxu0 0
    %1550 = vmatprep.mubr.bf16.mxu0 0
    %1551 = vmatmul.mubr.bf16.gmra.mrb[0].mxu0 %v1393
    %v1552 = vpop.f32.mrb[0].mxu0
    %v1553 = vadd.f32 %v1512, %v1552
    %v1554 = vpop.f32.mrb[0].mxu0
    %v1555 = vadd.f32 %v1514, %v1554
    %v1556 = vpop.f32.mrb[0].mxu0
    %v1557 = vpop.f32.mrb[0].mxu0
    %1558 = vdwg.mxu0
    %1559 = vmatprep.subr.bf16.mxu0 %v1002
    %1560 = vmatpush1.bf16.msra.mxu0 %v1001
    %1561 = vmatprep.subr.bf16.mxu0 %v1006
    %1562 = vmatpush1.bf16.msra.mxu0 %v1005
    %1563 = vmatprep.subr.bf16.mxu0 %v1010
    %1564 = vmatpush1.bf16.msra.mxu0 %v1009
    %1565 = vmatprep.subr.bf16.mxu0 %v1014
    %1566 = vmatpush1.bf16.msra.mxu0 %v1013
    %1567 = vmatprep.subr.bf16.mxu0 %v1018
    %1568 = vmatpush1.bf16.msra.mxu0 %v1017
    %1569 = vmatprep.subr.bf16.mxu0 %v1022
    %1570 = vmatpush1.bf16.msra.mxu0 %v1021
    %1571 = vmatprep.subr.bf16.mxu0 %v1026
    %1572 = vmatpush1.bf16.msra.mxu0 %v1025
    %1573 = vmatprep.subr.bf16.mxu0 %v1030
    %1574 = vmatpush1.bf16.msra.mxu0 %v1029
    %1575 = vmatprep.subr.bf16.mxu0 %v1034
    %1576 = vmatpush1.bf16.msra.mxu0 %v1033
    %1577 = vmatprep.subr.bf16.mxu0 %v1038
    %1578 = vmatpush1.bf16.msra.mxu0 %v1037
    %1579 = vmatprep.subr.bf16.mxu0 %v1042
    %1580 = vmatpush1.bf16.msra.mxu0 %v1041
    %1581 = vmatprep.subr.bf16.mxu0 %v1046
    %1582 = vmatpush1.bf16.msra.mxu0 %v1045
    %1583 = vmatprep.subr.bf16.mxu0 %v1050
    %1584 = vmatpush1.bf16.msra.mxu0 %v1049
    %1585 = vmatprep.subr.bf16.mxu0 %v1054
    %1586 = vmatpush1.bf16.msra.mxu0 %v1053
    %1587 = vmatprep.subr.bf16.mxu0 %v1058
    %1588 = vmatpush1.bf16.msra.mxu0 %v1057
    %1589 = vmatprep.subr.bf16.mxu0 %v1062
    %1590 = vmatpush1.bf16.msra.mxu0 %v1061
    %1591 = vmatprep.mubr.bf16.mxu0 %v399
    %1592 = vmatmul.mubr.bf16.gmra.mrb[0].mxu0 %v398
    %v1593 = vpop.f32.mrb[0].mxu0
    %v1594 = vadd.f32 %v378, %v1593
    %v1595 = vpop.f32.mrb[0].mxu0
    %v1596 = vadd.f32 %v382, %v1595
    %v1597 = vpop.f32.mrb[0].mxu0
    %v1598 = vpop.f32.mrb[0].mxu0
    %1599 = vdwg.mxu0
    %1600 = vmatprep.subr.bf16.mxu0 %v1066
    %1601 = vmatpush1.bf16.msra.mxu0 %v1065
    %1602 = vmatprep.subr.bf16.mxu0 %v1070
    %1603 = vmatpush1.bf16.msra.mxu0 %v1069
    %1604 = vmatprep.subr.bf16.mxu0 %v1074
    %1605 = vmatpush1.bf16.msra.mxu0 %v1073
    %1606 = vmatprep.subr.bf16.mxu0 %v1078
    %1607 = vmatpush1.bf16.msra.mxu0 %v1077
    %1608 = vmatprep.subr.bf16.mxu0 %v1082
    %1609 = vmatpush1.bf16.msra.mxu0 %v1081
    %1610 = vmatprep.subr.bf16.mxu0 %v1086
    %1611 = vmatpush1.bf16.msra.mxu0 %v1085
    %1612 = vmatprep.subr.bf16.mxu0 %v1090
    %1613 = vmatpush1.bf16.msra.mxu0 %v1089
    %1614 = vmatprep.subr.bf16.mxu0 %v1094
    %1615 = vmatpush1.bf16.msra.mxu0 %v1093
    %1616 = vmatprep.subr.bf16.mxu0 %v1098
    %1617 = vmatpush1.bf16.msra.mxu0 %v1097
    %1618 = vmatprep.subr.bf16.mxu0 %v1102
    %1619 = vmatpush1.bf16.msra.mxu0 %v1101
    %1620 = vmatprep.subr.bf16.mxu0 %v1106
    %1621 = vmatpush1.bf16.msra.mxu0 %v1105
    %1622 = vmatprep.subr.bf16.mxu0 %v1110
    %1623 = vmatpush1.bf16.msra.mxu0 %v1109
    %1624 = vmatprep.subr.bf16.mxu0 %v1114
    %1625 = vmatpush1.bf16.msra.mxu0 %v1113
    %1626 = vmatprep.subr.bf16.mxu0 %v1118
    %1627 = vmatpush1.bf16.msra.mxu0 %v1117
    %1628 = vmatprep.subr.bf16.mxu0 %v1122
    %1629 = vmatpush1.bf16.msra.mxu0 %v1121
    %1630 = vmatprep.subr.bf16.mxu0 %v1126
    %1631 = vmatpush1.bf16.msra.mxu0 %v1125
    %1632 = vmatprep.mubr.bf16.mxu0 %v401
    %1633 = vmatmul.mubr.bf16.gmra.mrb[0].mxu0 %v400
    %v1634 = vpop.f32.mrb[0].mxu0
    %v1635 = vadd.f32 %v1594, %v1634
    %v1636 = vpop.f32.mrb[0].mxu0
    %v1637 = vadd.f32 %v1596, %v1636
    %v1638 = vpop.f32.mrb[0].mxu0
    %v1639 = vpop.f32.mrb[0].mxu0
    %1640 = vdwg.mxu0
    %1641 = vmatprep.subr.bf16.mxu0 %v1130
    %1642 = vmatpush1.bf16.msra.mxu0 %v1129
    %1643 = vmatprep.subr.bf16.mxu0 %v1134
    %1644 = vmatpush1.bf16.msra.mxu0 %v1133
    %1645 = vmatprep.subr.bf16.mxu0 %v1138
    %1646 = vmatpush1.bf16.msra.mxu0 %v1137
    %1647 = vmatprep.subr.bf16.mxu0 %v1142
    %1648 = vmatpush1.bf16.msra.mxu0 %v1141
    %1649 = vmatprep.subr.bf16.mxu0 %v1146
    %1650 = vmatpush1.bf16.msra.mxu0 %v1145
    %1651 = vmatprep.subr.bf16.mxu0 %v1150
    %1652 = vmatpush1.bf16.msra.mxu0 %v1149
    %1653 = vmatprep.subr.bf16.mxu0 %v1154
    %1654 = vmatpush1.bf16.msra.mxu0 %v1153
    %1655 = vmatprep.subr.bf16.mxu0 %v1158
    %1656 = vmatpush1.bf16.msra.mxu0 %v1157
    %1657 = vmatprep.subr.bf16.mxu0 %v1162
    %1658 = vmatpush1.bf16.msra.mxu0 %v1161
    %1659 = vmatprep.subr.bf16.mxu0 %v1166
    %1660 = vmatpush1.bf16.msra.mxu0 %v1165
    %1661 = vmatprep.subr.bf16.mxu0 %v1170
    %1662 = vmatpush1.bf16.msra.mxu0 %v1169
    %1663 = vmatprep.subr.bf16.mxu0 %v1174
    %1664 = vmatpush1.bf16.msra.mxu0 %v1173
    %1665 = vmatprep.subr.bf16.mxu0 %v1178
    %1666 = vmatpush1.bf16.msra.mxu0 %v1177
    %1667 = vmatprep.subr.bf16.mxu0 %v1182
    %1668 = vmatpush1.bf16.msra.mxu0 %v1181
    %1669 = vmatprep.subr.bf16.mxu0 %v1186
    %1670 = vmatpush1.bf16.msra.mxu0 %v1185
    %1671 = vmatprep.subr.bf16.mxu0 %v1190
    %1672 = vmatpush1.bf16.msra.mxu0 %v1189
    %1673 = vmatprep.mubr.bf16.mxu0 %v403
    %1674 = vmatmul.mubr.bf16.gmra.mrb[0].mxu0 %v402
    %v1675 = vpop.f32.mrb[0].mxu0
    %v1676 = vadd.f32 %v1635, %v1675
    %v1677 = vpop.f32.mrb[0].mxu0
    %v1678 = vadd.f32 %v1637, %v1677
    %v1679 = vpop.f32.mrb[0].mxu0
    %v1680 = vpop.f32.mrb[0].mxu0
    %1681 = vdwg.mxu0
    %1682 = vmatprep.subr.bf16.mxu0 %v1194
    %1683 = vmatpush1.bf16.msra.mxu0 %v1193
    %1684 = vmatprep.subr.bf16.mxu0 0
    %1685 = vmatpush1.bf16.msra.mxu0 0
    %1686 = vmatprep.subr.bf16.mxu0 0
    %1687 = vmatpush1.bf16.msra.mxu0 0
    %1688 = vmatprep.subr.bf16.mxu0 0
    %1689 = vmatpush1.bf16.msra.mxu0 0
    %1690 = vmatprep.subr.bf16.mxu0 0
    %1691 = vmatpush1.bf16.msra.mxu0 0
    %1692 = vmatprep.subr.bf16.mxu0 0
    %1693 = vmatpush1.bf16.msra.mxu0 0
    %1694 = vmatprep.subr.bf16.mxu0 0
    %1695 = vmatpush1.bf16.msra.mxu0 0
    %1696 = vmatprep.subr.bf16.mxu0 0
    %1697 = vmatpush1.bf16.msra.mxu0 0
    %1698 = vmatprep.subr.bf16.mxu0 0
    %1699 = vmatpush1.bf16.msra.mxu0 0
    %1700 = vmatprep.subr.bf16.mxu0 0
    %1701 = vmatpush1.bf16.msra.mxu0 0
    %1702 = vmatprep.subr.bf16.mxu0 0
    %1703 = vmatpush1.bf16.msra.mxu0 0
    %1704 = vmatprep.subr.bf16.mxu0 0
    %1705 = vmatpush1.bf16.msra.mxu0 0
    %1706 = vmatprep.subr.bf16.mxu0 0
    %1707 = vmatpush1.bf16.msra.mxu0 0
    %1708 = vmatprep.subr.bf16.mxu0 0
    %1709 = vmatpush1.bf16.msra.mxu0 0
    %1710 = vmatprep.subr.bf16.mxu0 0
    %1711 = vmatpush1.bf16.msra.mxu0 0
    %1712 = vmatprep.subr.bf16.mxu0 0
    %1713 = vmatpush1.bf16.msra.mxu0 0
    %1714 = vmatprep.mubr.bf16.mxu0 0
    %1715 = vmatmul.mubr.bf16.gmra.mrb[0].mxu0 %v1393
    %v1716 = vpop.f32.mrb[0].mxu0
    %v1717 = vadd.f32 %v1676, %v1716
    %v1718 = vpop.f32.mrb[0].mxu0
    %v1719 = vadd.f32 %v1678, %v1718
    %v1720 = vpop.f32.mrb[0].mxu0
    %v1721 = vpop.f32.mrb[0].mxu0
    %1722 = vdwg.mxu0
    %v1723 = vmax.f32 %v1553, 0.0
    %v1724 = vmax.f32 %v1555, 0.0
    %v1725 = vmax.f32 %v1717, 0.0
    %v1726 = vmax.f32 %v1719, 0.0
    %v1727 = vpack.c.bf16 %v1723, %v1723
    %v1728 = vpack.c.bf16 %v1724, %v1724
    %v1729 = vpack.c.bf16 %v1725, %v1725
    %v1730 = vpack.c.bf16 %v1726, %v1726
    %v1731 = vld [vmem:[#allocation10] sm:$0xf]
    %v1732 = vld [vmem:[#allocation10 + $0x4] sm:$0xf]
    %v1733 = vld [vmem:[#allocation10 + $0x8] sm:$0xf]
    %v1734 = vld [vmem:[#allocation10 + $0xc] sm:$0xf]
    %v1735 = vld [vmem:[#allocation10 + $0x10] sm:$0xf]
    %v1736 = vld [vmem:[#allocation10 + $0x14] sm:$0xf]
    %v1737 = vld [vmem:[#allocation10 + $0x18] sm:$0xf]
    %v1738 = vld [vmem:[#allocation10 + $0x1c] sm:$0xf]
    %v1739 = vld [vmem:[#allocation10 + $0x20] sm:$0xf]
    %v1740 = vld [vmem:[#allocation10 + $0x24] sm:$0xf]
    %v1741 = vld [vmem:[#allocation10 + $0x28] sm:$0xf]
    %v1742 = vld [vmem:[#allocation10 + $0x2c] sm:$0xf]
    %v1743 = vld [vmem:[#allocation10 + $0x30] sm:$0xf]
    %v1744 = vld [vmem:[#allocation10 + $0x34] sm:$0xf]
    %v1745 = vld [vmem:[#allocation10 + $0x38] sm:$0xf]
    %v1746 = vld [vmem:[#allocation10 + $0x3c] sm:$0xf]
    %v1747 = vld [vmem:[#allocation10 + $0x40] sm:$0xf]
    %v1748 = vld [vmem:[#allocation10 + $0x44] sm:$0xf]
    %v1749 = vld [vmem:[#allocation10 + $0x48] sm:$0xf]
    %v1750 = vld [vmem:[#allocation10 + $0x4c] sm:$0xf]
    %v1751 = vld [vmem:[#allocation10 + $0x50] sm:$0xf]
    %v1752 = vld [vmem:[#allocation10 + $0x54] sm:$0xf]
    %v1753 = vld [vmem:[#allocation10 + $0x58] sm:$0xf]
    %v1754 = vld [vmem:[#allocation10 + $0x5c] sm:$0xf]
    %v1755 = vld [vmem:[#allocation10 + $0x60] sm:$0xf]
    %v1756 = vld [vmem:[#allocation10 + $0x64] sm:$0xf]
    %v1757 = vld [vmem:[#allocation10 + $0x68] sm:$0xf]
    %v1758 = vld [vmem:[#allocation10 + $0x6c] sm:$0xf]
    %v1759 = vld [vmem:[#allocation10 + $0x70] sm:$0xf]
    %v1760 = vld [vmem:[#allocation10 + $0x74] sm:$0xf]
    %v1761 = vld [vmem:[#allocation10 + $0x78] sm:$0xf]
    %v1762 = vld [vmem:[#allocation10 + $0x7c] sm:$0xf]
    %v1763 = vld [vmem:[#allocation10 + $0x80] sm:$0xf]
    %v1764 = vld [vmem:[#allocation10 + $0x84] sm:$0xf]
    %v1765 = vld [vmem:[#allocation10 + $0x88] sm:$0xf]
    %v1766 = vld [vmem:[#allocation10 + $0x8c] sm:$0xf]
    %v1767 = vld [vmem:[#allocation10 + $0x90] sm:$0xf]
    %v1768 = vld [vmem:[#allocation10 + $0x94] sm:$0xf]
    %v1769 = vld [vmem:[#allocation10 + $0x98] sm:$0xf]
    %v1770 = vld [vmem:[#allocation10 + $0x9c] sm:$0xf]
    %v1771 = vld [vmem:[#allocation10 + $0xa0] sm:$0xf]
    %v1772 = vld [vmem:[#allocation10 + $0xa4] sm:$0xf]
    %v1773 = vld [vmem:[#allocation10 + $0xa8] sm:$0xf]
    %v1774 = vld [vmem:[#allocation10 + $0xac] sm:$0xf]
    %v1775 = vld [vmem:[#allocation10 + $0xb0] sm:$0xf]
    %v1776 = vld [vmem:[#allocation10 + $0xb4] sm:$0xf]
    %v1777 = vld [vmem:[#allocation10 + $0xb8] sm:$0xf]
    %v1778 = vld [vmem:[#allocation10 + $0xbc] sm:$0xf]
    %v1779 = vld [vmem:[#allocation10 + $0xc0] sm:$0xf]
    %v1780 = vld [vmem:[#allocation10 + $0xc4] sm:$0xf]
    %v1781 = vld [vmem:[#allocation11] sm:$0x1]
    %v1783 = vlaneseq
    %v1784 = vshrl.u32 %v1783, 7
    %v1785 = vsub.s32 0, %v1784
    %v1786 = vrot.slane %v1781, %v1785
    %v1838 = vunpack.c.l.b16 %v1731
    %v1839 = vunpack.c.l.b16 %v1732
    %v1840 = vunpack.c.l.b16 %v1733
    %v1841 = vunpack.c.l.b16 %v1734
    %v1842 = vunpack.c.l.b16 %v1735
    %v1843 = vunpack.c.l.b16 %v1736
    %v1844 = vunpack.c.l.b16 %v1737
    %v1845 = vunpack.c.l.b16 %v1738
    %v1846 = vunpack.c.l.b16 %v1739
    %v1847 = vunpack.c.l.b16 %v1740
    %v1848 = vunpack.c.l.b16 %v1741
    %v1849 = vunpack.c.l.b16 %v1742
    %v1850 = vunpack.c.l.b16 %v1743
    %v1851 = vunpack.c.l.b16 %v1744
    %v1852 = vunpack.c.l.b16 %v1745
    %v1853 = vunpack.c.l.b16 %v1746
    %v1854 = vunpack.c.l.b16 %v1747
    %v1855 = vunpack.c.l.b16 %v1748
    %v1856 = vunpack.c.l.b16 %v1749
    %v1857 = vunpack.c.l.b16 %v1750
    %v1858 = vunpack.c.l.b16 %v1751
    %v1859 = vunpack.c.l.b16 %v1752
    %v1860 = vunpack.c.l.b16 %v1753
    %v1861 = vunpack.c.l.b16 %v1754
    %v1862 = vunpack.c.l.b16 %v1755
    %v1863 = vunpack.c.l.b16 %v1756
    %v1864 = vunpack.c.l.b16 %v1757
    %v1865 = vunpack.c.l.b16 %v1758
    %v1866 = vunpack.c.l.b16 %v1759
    %v1867 = vunpack.c.l.b16 %v1760
    %v1868 = vunpack.c.l.b16 %v1761
    %v1869 = vunpack.c.l.b16 %v1762
    %v1870 = vunpack.c.l.b16 %v1763
    %v1871 = vunpack.c.l.b16 %v1764
    %v1872 = vunpack.c.l.b16 %v1765
    %v1873 = vunpack.c.l.b16 %v1766
    %v1874 = vunpack.c.l.b16 %v1767
    %v1875 = vunpack.c.l.b16 %v1768
    %v1876 = vunpack.c.l.b16 %v1769
    %v1877 = vunpack.c.l.b16 %v1770
    %v1878 = vunpack.c.l.b16 %v1771
    %v1879 = vunpack.c.l.b16 %v1772
    %v1880 = vunpack.c.l.b16 %v1773
    %v1881 = vunpack.c.l.b16 %v1774
    %v1882 = vunpack.c.l.b16 %v1775
    %v1883 = vunpack.c.l.b16 %v1776
    %v1884 = vunpack.c.l.b16 %v1777
    %v1885 = vunpack.c.l.b16 %v1778
    %v1886 = vunpack.c.l.b16 %v1779
    %v1887 = vunpack.c.l.b16 %v1780
    %v1888 = vpack.c.b16 %v1839, %v1838
    %v1889 = vpack.c.b16 %v1841, %v1840
    %v1890 = vpack.c.b16 %v1843, %v1842
    %v1891 = vpack.c.b16 %v1845, %v1844
    %v1892 = vpack.c.b16 %v1847, %v1846
    %v1893 = vpack.c.b16 %v1849, %v1848
    %v1894 = vpack.c.b16 %v1851, %v1850
    %v1895 = vpack.c.b16 %v1853, %v1852
    %v1896 = vpack.c.b16 %v1855, %v1854
    %v1897 = vpack.c.b16 %v1857, %v1856
    %v1898 = vpack.c.b16 %v1859, %v1858
    %v1899 = vpack.c.b16 %v1861, %v1860
    %v1900 = vpack.c.b16 %v1863, %v1862
    %v1901 = vpack.c.b16 %v1865, %v1864
    %v1902 = vpack.c.b16 %v1867, %v1866
    %v1903 = vpack.c.b16 %v1869, %v1868
    %v1904 = vpack.c.b16 %v1871, %v1870
    %v1905 = vpack.c.b16 %v1873, %v1872
    %v1906 = vpack.c.b16 %v1875, %v1874
    %v1907 = vpack.c.b16 %v1877, %v1876
    %v1908 = vpack.c.b16 %v1879, %v1878
    %v1909 = vpack.c.b16 %v1881, %v1880
    %v1910 = vpack.c.b16 %v1883, %v1882
    %v1911 = vpack.c.b16 %v1885, %v1884
    %v1912 = vpack.c.b16 %v1887, %v1886
    %v1939 = vsel %vm1391, %v1730, 0
    %1941 = vmatprep.subr.bf16.mxu0 0
    %1942 = vmatpush1.bf16.msra.mxu0 %v1888
    %1943 = vmatprep.subr.bf16.mxu0 0
    %1944 = vmatpush1.bf16.msra.mxu0 %v1889
    %1945 = vmatprep.subr.bf16.mxu0 0
    %1946 = vmatpush1.bf16.msra.mxu0 %v1890
    %1947 = vmatprep.subr.bf16.mxu0 0
    %1948 = vmatpush1.bf16.msra.mxu0 %v1891
    %1949 = vmatprep.subr.bf16.mxu0 0
    %1950 = vmatpush1.bf16.msra.mxu0 %v1892
    %1951 = vmatprep.subr.bf16.mxu0 0
    %1952 = vmatpush1.bf16.msra.mxu0 %v1893
    %1953 = vmatprep.subr.bf16.mxu0 0
    %1954 = vmatpush1.bf16.msra.mxu0 %v1894
    %1955 = vmatprep.subr.bf16.mxu0 0
    %1956 = vmatpush1.bf16.msra.mxu0 %v1895
    %1957 = vmatprep.subr.bf16.mxu0 0
    %1958 = vmatpush1.bf16.msra.mxu0 %v1896
    %1959 = vmatprep.subr.bf16.mxu0 0
    %1960 = vmatpush1.bf16.msra.mxu0 %v1897
    %1961 = vmatprep.subr.bf16.mxu0 0
    %1962 = vmatpush1.bf16.msra.mxu0 %v1898
    %1963 = vmatprep.subr.bf16.mxu0 0
    %1964 = vmatpush1.bf16.msra.mxu0 %v1899
    %1965 = vmatprep.subr.bf16.mxu0 0
    %1966 = vmatpush1.bf16.msra.mxu0 %v1900
    %1967 = vmatprep.subr.bf16.mxu0 0
    %1968 = vmatpush1.bf16.msra.mxu0 %v1901
    %1969 = vmatprep.subr.bf16.mxu0 0
    %1970 = vmatpush1.bf16.msra.mxu0 %v1902
    %1971 = vmatprep.subr.bf16.mxu0 0
    %1972 = vmatpush1.bf16.msra.mxu0 %v1903
    %1973 = vmatprep.mubr.bf16.mxu0 %v1728
    %1974 = vmatmul.mubr.bf16.gmra.mrb[0].mxu0 %v1727
    %v1975 = vpop.f32.mrb[0].mxu0
    %v1976 = vadd.f32 %v1786, %v1975
    %v1977 = vpop.f32.mrb[0].mxu0
    %v1978 = vpop.f32.mrb[0].mxu0
    %v1979 = vpop.f32.mrb[0].mxu0
    %1980 = vdwg.mxu0
    %1981 = vmatprep.subr.bf16.mxu0 0
    %1982 = vmatpush1.bf16.msra.mxu0 %v1904
    %1983 = vmatprep.subr.bf16.mxu0 0
    %1984 = vmatpush1.bf16.msra.mxu0 %v1905
    %1985 = vmatprep.subr.bf16.mxu0 0
    %1986 = vmatpush1.bf16.msra.mxu0 %v1906
    %1987 = vmatprep.subr.bf16.mxu0 0
    %1988 = vmatpush1.bf16.msra.mxu0 %v1907
    %1989 = vmatprep.subr.bf16.mxu0 0
    %1990 = vmatpush1.bf16.msra.mxu0 %v1908
    %1991 = vmatprep.subr.bf16.mxu0 0
    %1992 = vmatpush1.bf16.msra.mxu0 %v1909
    %1993 = vmatprep.subr.bf16.mxu0 0
    %1994 = vmatpush1.bf16.msra.mxu0 %v1910
    %1995 = vmatprep.subr.bf16.mxu0 0
    %1996 = vmatpush1.bf16.msra.mxu0 %v1911
    %1997 = vmatprep.subr.bf16.mxu0 0
    %1998 = vmatpush1.bf16.msra.mxu0 %v1912
    %1999 = vmatprep.subr.bf16.mxu0 0
    %2000 = vmatpush1.bf16.msra.mxu0 0
    %2001 = vmatprep.subr.bf16.mxu0 0
    %2002 = vmatpush1.bf16.msra.mxu0 0
    %2003 = vmatprep.subr.bf16.mxu0 0
    %2004 = vmatpush1.bf16.msra.mxu0 0
    %2005 = vmatprep.subr.bf16.mxu0 0
    %2006 = vmatpush1.bf16.msra.mxu0 0
    %2007 = vmatprep.subr.bf16.mxu0 0
    %2008 = vmatpush1.bf16.msra.mxu0 0
    %2009 = vmatprep.subr.bf16.mxu0 0
    %2010 = vmatpush1.bf16.msra.mxu0 0
    %2011 = vmatprep.subr.bf16.mxu0 0
    %2012 = vmatpush1.bf16.msra.mxu0 0
    %2013 = vmatprep.mubr.bf16.mxu0 %v1939
    %2014 = vmatmul.mubr.bf16.gmra.mrb[0].mxu0 %v1729
    %v2015 = vpop.f32.mrb[0].mxu0
    %v2016 = vadd.f32 %v1976, %v2015
    %v2017 = vpop.f32.mrb[0].mxu0
    %v2018 = vpop.f32.mrb[0].mxu0
    %v2019 = vpop.f32.mrb[0].mxu0
    %2020 = vdwg.mxu0
    %v2021 = vmul.f32 %v2016, 0.5
    %v2022 = vmul.f32 %v2021, 1.442695
    %v2023 = vpow.pop %v2022
    %2025 = vrot.lane.b32.xlu0 %v2023, 108
    %v2026 = vpop.permute.xlu0 %2025
    %v2028 = vmul.f32 %v168, %v2026
    %v2029 = vadd.f32 %v2016, %v2028
    %v2030 = vpack.c.bf16 %v2029, %v2029
    %v2031 = vld [vmem:[#allocation13] sm:$0xff]
    %v2032 = vld [vmem:[#allocation13 + $0x8] sm:$0xff]
    %v2033 = vld [vmem:[#allocation13 + $0x10] sm:$0xff]
    %v2034 = vld [vmem:[#allocation13 + $0x18] sm:$0xff]
    %v2035 = vld [vmem:[#allocation13 + $0x20] sm:$0x33]
    %v2036 = vld [vmem:[#allocation13 + $0x28] sm:$0x33]
    %v2037 = vld [vmem:[#allocation14] sm:$0xf]
    %v2039 = vlaneseq
    %v2040 = vshrl.u32 %v2039, 7
    %v2041 = vsub.s32 0, %v2040
    %v2042 = vrot.slane %v2037, %v2041
    %v2043 = vlaneseq
    %v2044 = vshrl.u32 %v2043, 7
    %v2045 = vsub.s32 1, %v2044
    %v2046 = vrot.slane %v2037, %v2045
    %v2047 = vlaneseq
    %v2048 = vshrl.u32 %v2047, 7
    %v2049 = vsub.s32 2, %v2048
    %v2050 = vrot.slane %v2037, %v2049
    %v2051 = vlaneseq
    %v2052 = vshrl.u32 %v2051, 7
    %v2053 = vsub.s32 3, %v2052
    %v2054 = vrot.slane %v2037, %v2053
    %v2065 = vunpack.c.l.b16 %v2031
    %v2066 = vunpack.c.h.b16 %v2031
    %v2067 = vunpack.c.l.b16 %v2032
    %v2068 = vunpack.c.h.b16 %v2032
    %v2069 = vunpack.c.l.b16 %v2033
    %v2070 = vunpack.c.h.b16 %v2033
    %v2071 = vunpack.c.l.b16 %v2034
    %v2072 = vunpack.c.h.b16 %v2034
    %v2073 = vunpack.c.l.b16 %v2035
    %v2074 = vunpack.c.h.b16 %v2035
    %v2075 = vunpack.c.l.b16 %v2036
    %v2076 = vunpack.c.h.b16 %v2036
    %v2077 = vpack.c.b16 %v2069, %v2065
    %v2078 = vpack.c.b16 %v2070, %v2066
    %v2079 = vpack.c.b16 %v2071, %v2067
    %v2080 = vpack.c.b16 %v2072, %v2068
    %v2081 = vpack.c.b16 %v2073, %v2073
    %v2082 = vpack.c.b16 %v2074, %v2074
    %v2083 = vpack.c.b16 %v2075, %v2075
    %v2084 = vpack.c.b16 %v2076, %v2076
    %vm2089 = vcmask 162816
    %v2091 = vsel %vm2089, %v2030, 0
    %vm2093 = vcmask 1041408
    %v2095 = vsel %vm2093, %v2081, 0
    %v2098 = vsel %vm2093, %v2082, 0
    %v2101 = vsel %vm2093, %v2083, 0
    %v2104 = vsel %vm2093, %v2084, 0
    %2106 = vmatprep.subr.bf16.mxu0 %v2078
    %2107 = vmatpush1.bf16.msra.mxu0 %v2077
    %2108 = vmatprep.subr.bf16.mxu0 %v2098
    %2109 = vmatpush1.bf16.msra.mxu0 %v2095
    %2110 = vmatprep.subr.bf16.mxu0 0
    %2111 = vmatpush1.bf16.msra.mxu0 0
    %2112 = vmatprep.subr.bf16.mxu0 0
    %2113 = vmatpush1.bf16.msra.mxu0 0
    %2114 = vmatprep.subr.bf16.mxu0 0
    %2115 = vmatpush1.bf16.msra.mxu0 0
    %2116 = vmatprep.subr.bf16.mxu0 0
    %2117 = vmatpush1.bf16.msra.mxu0 0
    %2118 = vmatprep.subr.bf16.mxu0 0
    %2119 = vmatpush1.bf16.msra.mxu0 0
    %2120 = vmatprep.subr.bf16.mxu0 0
    %2121 = vmatpush1.bf16.msra.mxu0 0
    %2122 = vmatprep.subr.bf16.mxu0 0
    %2123 = vmatpush1.bf16.msra.mxu0 0
    %2124 = vmatprep.subr.bf16.mxu0 0
    %2125 = vmatpush1.bf16.msra.mxu0 0
    %2126 = vmatprep.subr.bf16.mxu0 0
    %2127 = vmatpush1.bf16.msra.mxu0 0
    %2128 = vmatprep.subr.bf16.mxu0 0
    %2129 = vmatpush1.bf16.msra.mxu0 0
    %2130 = vmatprep.subr.bf16.mxu0 0
    %2131 = vmatpush1.bf16.msra.mxu0 0
    %2132 = vmatprep.subr.bf16.mxu0 0
    %2133 = vmatpush1.bf16.msra.mxu0 0
    %2134 = vmatprep.subr.bf16.mxu0 0
    %2135 = vmatpush1.bf16.msra.mxu0 0
    %2136 = vmatprep.subr.bf16.mxu0 0
    %2137 = vmatpush1.bf16.msra.mxu0 0
    %2138 = vmatprep.mubr.bf16.mxu0 0
    %2139 = vmatmul.mubr.bf16.gmra.mrb[0].mxu0 %v2091
    %v2140 = vpop.f32.mrb[0].mxu0
    %v2141 = vadd.f32 %v2042, %v2140
    %v2142 = vpop.f32.mrb[0].mxu0
    %v2143 = vadd.f32 %v2046, %v2142
    %v2144 = vpop.f32.mrb[0].mxu0
    %v2145 = vpop.f32.mrb[0].mxu0
    %2146 = vdwg.mxu0
    %2147 = vmatprep.subr.bf16.mxu0 %v2080
    %2148 = vmatpush1.bf16.msra.mxu0 %v2079
    %2149 = vmatprep.subr.bf16.mxu0 %v2104
    %2150 = vmatpush1.bf16.msra.mxu0 %v2101
    %2151 = vmatprep.subr.bf16.mxu0 0
    %2152 = vmatpush1.bf16.msra.mxu0 0
    %2153 = vmatprep.subr.bf16.mxu0 0
    %2154 = vmatpush1.bf16.msra.mxu0 0
    %2155 = vmatprep.subr.bf16.mxu0 0
    %2156 = vmatpush1.bf16.msra.mxu0 0
    %2157 = vmatprep.subr.bf16.mxu0 0
    %2158 = vmatpush1.bf16.msra.mxu0 0
    %2159 = vmatprep.subr.bf16.mxu0 0
    %2160 = vmatpush1.bf16.msra.mxu0 0
    %2161 = vmatprep.subr.bf16.mxu0 0
    %2162 = vmatpush1.bf16.msra.mxu0 0
    %2163 = vmatprep.subr.bf16.mxu0 0
    %2164 = vmatpush1.bf16.msra.mxu0 0
    %2165 = vmatprep.subr.bf16.mxu0 0
    %2166 = vmatpush1.bf16.msra.mxu0 0
    %2167 = vmatprep.subr.bf16.mxu0 0
    %2168 = vmatpush1.bf16.msra.mxu0 0
    %2169 = vmatprep.subr.bf16.mxu0 0
    %2170 = vmatpush1.bf16.msra.mxu0 0
    %2171 = vmatprep.subr.bf16.mxu0 0
    %2172 = vmatpush1.bf16.msra.mxu0 0
    %2173 = vmatprep.subr.bf16.mxu0 0
    %2174 = vmatpush1.bf16.msra.mxu0 0
    %2175 = vmatprep.subr.bf16.mxu0 0
    %2176 = vmatpush1.bf16.msra.mxu0 0
    %2177 = vmatprep.subr.bf16.mxu0 0
    %2178 = vmatpush1.bf16.msra.mxu0 0
    %2179 = vmatprep.mubr.bf16.mxu0 0
    %2180 = vmatmul.mubr.bf16.gmra.mrb[0].mxu0 %v2091
    %v2181 = vpop.f32.mrb[0].mxu0
    %v2182 = vadd.f32 %v2050, %v2181
    %v2183 = vpop.f32.mrb[0].mxu0
    %v2184 = vadd.f32 %v2054, %v2183
    %v2185 = vpop.f32.mrb[0].mxu0
    %v2186 = vpop.f32.mrb[0].mxu0
    %2187 = vdwg.mxu0
    %v2188 = vmax.f32 %v2141, 0.0
    %v2189 = vmax.f32 %v2143, 0.0
    %v2190 = vmax.f32 %v2182, 0.0
    %v2191 = vmax.f32 %v2184, 0.0
    %v2192 = vpack.c.bf16 %v2188, %v2188
    %v2193 = vpack.c.bf16 %v2189, %v2189
    %v2194 = vpack.c.bf16 %v2190, %v2190
    %v2195 = vpack.c.bf16 %v2191, %v2191
    %v2196 = vld [vmem:[#allocation16] sm:$0xff]
    %v2197 = vld [vmem:[#allocation16 + $0x8] sm:$0xff]
    %v2198 = vld [vmem:[#allocation16 + $0x10] sm:$0xff]
    %v2199 = vld [vmem:[#allocation16 + $0x18] sm:$0xf]
    %v2200 = vld [vmem:[#allocation16 + $0x1c] sm:$0xff]
    %v2201 = vld [vmem:[#allocation16 + $0x24] sm:$0xff]
    %v2202 = vld [vmem:[#allocation16 + $0x2c] sm:$0xff]
    %v2203 = vld [vmem:[#allocation16 + $0x34] sm:$0xf]
    %v2204 = vld [vmem:[#allocation16 + $0x38] sm:$0xff]
    %v2205 = vld [vmem:[#allocation16 + $0x40] sm:$0xff]
    %v2206 = vld [vmem:[#allocation16 + $0x48] sm:$0xff]
    %v2207 = vld [vmem:[#allocation16 + $0x50] sm:$0xf]
    %v2208 = vld [vmem:[#allocation16 + $0x54] sm:$0xff]
    %v2209 = vld [vmem:[#allocation16 + $0x5c] sm:$0xff]
    %v2210 = vld [vmem:[#allocation16 + $0x64] sm:$0xff]
    %v2211 = vld [vmem:[#allocation16 + $0x6c] sm:$0xf]
    %v2212 = vld [vmem:[#allocation16 + $0x70] sm:$0xff]
    %v2213 = vld [vmem:[#allocation16 + $0x78] sm:$0xff]
    %v2214 = vld [vmem:[#allocation16 + $0x80] sm:$0xff]
    %v2215 = vld [vmem:[#allocation16 + $0x88] sm:$0xf]
    %v2216 = vld [vmem:[#allocation16 + $0x8c] sm:$0xff]
    %v2217 = vld [vmem:[#allocation16 + $0x94] sm:$0xff]
    %v2218 = vld [vmem:[#allocation16 + $0x9c] sm:$0xff]
    %v2219 = vld [vmem:[#allocation16 + $0xa4] sm:$0xf]
    %v2220 = vld [vmem:[#allocation16 + $0xa8] sm:$0xff]
    %v2221 = vld [vmem:[#allocation16 + $0xb0] sm:$0xff]
    %v2222 = vld [vmem:[#allocation16 + $0xb8] sm:$0xff]
    %v2223 = vld [vmem:[#allocation16 + $0xc0] sm:$0xf]
    %v2224 = vld [vmem:[#allocation16 + $0xc4] sm:$0xff]
    %v2225 = vld [vmem:[#allocation16 + $0xcc] sm:$0xff]
    %v2226 = vld [vmem:[#allocation16 + $0xd4] sm:$0xff]
    %v2227 = vld [vmem:[#allocation16 + $0xdc] sm:$0xf]
    %v2228 = vld [vmem:[#allocation16 + $0xe0] sm:$0xff]
    %v2229 = vld [vmem:[#allocation16 + $0xe8] sm:$0xff]
    %v2230 = vld [vmem:[#allocation16 + $0xf0] sm:$0xff]
    %v2231 = vld [vmem:[#allocation16 + $0xf8] sm:$0xf]
    %v2232 = vld [vmem:[#allocation16 + $0xfc] sm:$0xff]
    %v2233 = vld [vmem:[#allocation16 + $0x104] sm:$0xff]
    %v2234 = vld [vmem:[#allocation16 + $0x10c] sm:$0xff]
    %v2235 = vld [vmem:[#allocation16 + $0x114] sm:$0xf]
    %v2236 = vld [vmem:[#allocation16 + $0x118] sm:$0xff]
    %v2237 = vld [vmem:[#allocation16 + $0x120] sm:$0xff]
    %v2238 = vld [vmem:[#allocation16 + $0x128] sm:$0xff]
    %v2239 = vld [vmem:[#allocation16 + $0x130] sm:$0xf]
    %v2240 = vld [vmem:[#allocation16 + $0x134] sm:$0xff]
    %v2241 = vld [vmem:[#allocation16 + $0x13c] sm:$0xff]
    %v2242 = vld [vmem:[#allocation16 + $0x144] sm:$0xff]
    %v2243 = vld [vmem:[#allocation16 + $0x14c] sm:$0xf]
    %v2244 = vld [vmem:[#allocation16 + $0x150] sm:$0xff]
    %v2245 = vld [vmem:[#allocation16 + $0x158] sm:$0xff]
    %v2246 = vld [vmem:[#allocation16 + $0x160] sm:$0xff]
    %v2247 = vld [vmem:[#allocation16 + $0x168] sm:$0xf]
    %v2248 = vld [vmem:[#allocation16 + $0x16c] sm:$0xff]
    %v2249 = vld [vmem:[#allocation16 + $0x174] sm:$0xff]
    %v2250 = vld [vmem:[#allocation16 + $0x17c] sm:$0xff]
    %v2251 = vld [vmem:[#allocation16 + $0x184] sm:$0xf]
    %v2252 = vld [vmem:[#allocation16 + $0x188] sm:$0xff]
    %v2253 = vld [vmem:[#allocation16 + $0x190] sm:$0xff]
    %v2254 = vld [vmem:[#allocation16 + $0x198] sm:$0xff]
    %v2255 = vld [vmem:[#allocation16 + $0x1a0] sm:$0xf]
    %v2256 = vld [vmem:[#allocation16 + $0x1a4] sm:$0xff]
    %v2257 = vld [vmem:[#allocation16 + $0x1ac] sm:$0xff]
    %v2258 = vld [vmem:[#allocation16 + $0x1b4] sm:$0xff]
    %v2259 = vld [vmem:[#allocation16 + $0x1bc] sm:$0xf]
    %v2260 = vld [vmem:[#allocation16 + $0x1c0] sm:$0xff]
    %v2261 = vld [vmem:[#allocation16 + $0x1c8] sm:$0xff]
    %v2262 = vld [vmem:[#allocation16 + $0x1d0] sm:$0xff]
    %v2263 = vld [vmem:[#allocation16 + $0x1d8] sm:$0xf]
    %v2264 = vld [vmem:[#allocation16 + $0x1dc] sm:$0xff]
    %v2265 = vld [vmem:[#allocation16 + $0x1e4] sm:$0xff]
    %v2266 = vld [vmem:[#allocation16 + $0x1ec] sm:$0xff]
    %v2267 = vld [vmem:[#allocation16 + $0x1f4] sm:$0xf]
    %v2268 = vld [vmem:[#allocation16 + $0x1f8] sm:$0xff]
    %v2269 = vld [vmem:[#allocation16 + $0x200] sm:$0xff]
    %v2270 = vld [vmem:[#allocation16 + $0x208] sm:$0xff]
    %v2271 = vld [vmem:[#allocation16 + $0x210] sm:$0xf]
    %v2272 = vld [vmem:[#allocation16 + $0x214] sm:$0xff]
    %v2273 = vld [vmem:[#allocation16 + $0x21c] sm:$0xff]
    %v2274 = vld [vmem:[#allocation16 + $0x224] sm:$0xff]
    %v2275 = vld [vmem:[#allocation16 + $0x22c] sm:$0xf]
    %v2276 = vld [vmem:[#allocation16 + $0x230] sm:$0xff]
    %v2277 = vld [vmem:[#allocation16 + $0x238] sm:$0xff]
    %v2278 = vld [vmem:[#allocation16 + $0x240] sm:$0xff]
    %v2279 = vld [vmem:[#allocation16 + $0x248] sm:$0xf]
    %v2280 = vld [vmem:[#allocation16 + $0x24c] sm:$0xff]
    %v2281 = vld [vmem:[#allocation16 + $0x254] sm:$0xff]
    %v2282 = vld [vmem:[#allocation16 + $0x25c] sm:$0xff]
    %v2283 = vld [vmem:[#allocation16 + $0x264] sm:$0xf]
    %v2284 = vld [vmem:[#allocation16 + $0x268] sm:$0xff]
    %v2285 = vld [vmem:[#allocation16 + $0x270] sm:$0xff]
    %v2286 = vld [vmem:[#allocation16 + $0x278] sm:$0xff]
    %v2287 = vld [vmem:[#allocation16 + $0x280] sm:$0xf]
    %v2288 = vld [vmem:[#allocation16 + $0x284] sm:$0xff]
    %v2289 = vld [vmem:[#allocation16 + $0x28c] sm:$0xff]
    %v2290 = vld [vmem:[#allocation16 + $0x294] sm:$0xff]
    %v2291 = vld [vmem:[#allocation16 + $0x29c] sm:$0xf]
    %v2292 = vld [vmem:[#allocation16 + $0x2a0] sm:$0xff]
    %v2293 = vld [vmem:[#allocation16 + $0x2a8] sm:$0xff]
    %v2294 = vld [vmem:[#allocation16 + $0x2b0] sm:$0xff]
    %v2295 = vld [vmem:[#allocation16 + $0x2b8] sm:$0xf]
    %v2296 = vld [vmem:[#allocation16 + $0x2bc] sm:$0xff]
    %v2297 = vld [vmem:[#allocation16 + $0x2c4] sm:$0xff]
    %v2298 = vld [vmem:[#allocation16 + $0x2cc] sm:$0xff]
    %v2299 = vld [vmem:[#allocation16 + $0x2d4] sm:$0xf]
    %v2300 = vld [vmem:[#allocation16 + $0x2d8] sm:$0xff]
    %v2301 = vld [vmem:[#allocation16 + $0x2e0] sm:$0xff]
    %v2302 = vld [vmem:[#allocation16 + $0x2e8] sm:$0xff]
    %v2303 = vld [vmem:[#allocation16 + $0x2f0] sm:$0xf]
    %v2304 = vld [vmem:[#allocation16 + $0x2f4] sm:$0xff]
    %v2305 = vld [vmem:[#allocation16 + $0x2fc] sm:$0xff]
    %v2306 = vld [vmem:[#allocation16 + $0x304] sm:$0xff]
    %v2307 = vld [vmem:[#allocation16 + $0x30c] sm:$0xf]
    %v2308 = vld [vmem:[#allocation16 + $0x310] sm:$0xff]
    %v2309 = vld [vmem:[#allocation16 + $0x318] sm:$0xff]
    %v2310 = vld [vmem:[#allocation16 + $0x320] sm:$0xff]
    %v2311 = vld [vmem:[#allocation16 + $0x328] sm:$0xf]
    %v2312 = vld [vmem:[#allocation16 + $0x32c] sm:$0xff]
    %v2313 = vld [vmem:[#allocation16 + $0x334] sm:$0xff]
    %v2314 = vld [vmem:[#allocation16 + $0x33c] sm:$0xff]
    %v2315 = vld [vmem:[#allocation16 + $0x344] sm:$0xf]
    %v2316 = vld [vmem:[#allocation16 + $0x348] sm:$0xff]
    %v2317 = vld [vmem:[#allocation16 + $0x350] sm:$0xff]
    %v2318 = vld [vmem:[#allocation16 + $0x358] sm:$0xff]
    %v2319 = vld [vmem:[#allocation16 + $0x360] sm:$0xf]
    %v2320 = vld [vmem:[#allocation16 + $0x364] sm:$0xff]
    %v2321 = vld [vmem:[#allocation16 + $0x36c] sm:$0xff]
    %v2322 = vld [vmem:[#allocation16 + $0x374] sm:$0xff]
    %v2323 = vld [vmem:[#allocation16 + $0x37c] sm:$0xf]
    %v2324 = vld [vmem:[#allocation16 + $0x380] sm:$0xff]
    %v2325 = vld [vmem:[#allocation16 + $0x388] sm:$0xff]
    %v2326 = vld [vmem:[#allocation16 + $0x390] sm:$0xff]
    %v2327 = vld [vmem:[#allocation16 + $0x398] sm:$0xf]
    %v2328 = vld [vmem:[#allocation16 + $0x39c] sm:$0xff]
    %v2329 = vld [vmem:[#allocation16 + $0x3a4] sm:$0xff]
    %v2330 = vld [vmem:[#allocation16 + $0x3ac] sm:$0xff]
    %v2331 = vld [vmem:[#allocation16 + $0x3b4] sm:$0xf]
    %v2332 = vld [vmem:[#allocation16 + $0x3b8] sm:$0xff]
    %v2333 = vld [vmem:[#allocation16 + $0x3c0] sm:$0xff]
    %v2334 = vld [vmem:[#allocation16 + $0x3c8] sm:$0xff]
    %v2335 = vld [vmem:[#allocation16 + $0x3d0] sm:$0xf]
    %v2336 = vld [vmem:[#allocation16 + $0x3d4] sm:$0xff]
    %v2337 = vld [vmem:[#allocation16 + $0x3dc] sm:$0xff]
    %v2338 = vld [vmem:[#allocation16 + $0x3e4] sm:$0xff]
    %v2339 = vld [vmem:[#allocation16 + $0x3ec] sm:$0xf]
    %v2340 = vld [vmem:[#allocation16 + $0x3f0] sm:$0xff]
    %v2341 = vld [vmem:[#allocation16 + $0x3f8] sm:$0xff]
    %v2342 = vld [vmem:[#allocation16 + $0x400] sm:$0xff]
    %v2343 = vld [vmem:[#allocation16 + $0x408] sm:$0xf]
    %v2344 = vld [vmem:[#allocation16 + $0x40c] sm:$0xff]
    %v2345 = vld [vmem:[#allocation16 + $0x414] sm:$0xff]
    %v2346 = vld [vmem:[#allocation16 + $0x41c] sm:$0xff]
    %v2347 = vld [vmem:[#allocation16 + $0x424] sm:$0xf]
    %v2348 = vld [vmem:[#allocation16 + $0x428] sm:$0xff]
    %v2349 = vld [vmem:[#allocation16 + $0x430] sm:$0xff]
    %v2350 = vld [vmem:[#allocation16 + $0x438] sm:$0xff]
    %v2351 = vld [vmem:[#allocation16 + $0x440] sm:$0xf]
    %v2352 = vld [vmem:[#allocation16 + $0x444] sm:$0xff]
    %v2353 = vld [vmem:[#allocation16 + $0x44c] sm:$0xff]
    %v2354 = vld [vmem:[#allocation16 + $0x454] sm:$0xff]
    %v2355 = vld [vmem:[#allocation16 + $0x45c] sm:$0xf]
    %v2356 = vld [vmem:[#allocation16 + $0x460] sm:$0xff]
    %v2357 = vld [vmem:[#allocation16 + $0x468] sm:$0xff]
    %v2358 = vld [vmem:[#allocation16 + $0x470] sm:$0xff]
    %v2359 = vld [vmem:[#allocation16 + $0x478] sm:$0xf]
    %v2360 = vld [vmem:[#allocation16 + $0x47c] sm:$0xff]
    %v2361 = vld [vmem:[#allocation16 + $0x484] sm:$0xff]
    %v2362 = vld [vmem:[#allocation16 + $0x48c] sm:$0xff]
    %v2363 = vld [vmem:[#allocation16 + $0x494] sm:$0xf]
    %v2364 = vld [vmem:[#allocation16 + $0x498] sm:$0xff]
    %v2365 = vld [vmem:[#allocation16 + $0x4a0] sm:$0xff]
    %v2366 = vld [vmem:[#allocation16 + $0x4a8] sm:$0xff]
    %v2367 = vld [vmem:[#allocation16 + $0x4b0] sm:$0xf]
    %v2368 = vld [vmem:[#allocation16 + $0x4b4] sm:$0xff]
    %v2369 = vld [vmem:[#allocation16 + $0x4bc] sm:$0xff]
    %v2370 = vld [vmem:[#allocation16 + $0x4c4] sm:$0xff]
    %v2371 = vld [vmem:[#allocation16 + $0x4cc] sm:$0xf]
    %v2372 = vld [vmem:[#allocation16 + $0x4d0] sm:$0xff]
    %v2373 = vld [vmem:[#allocation16 + $0x4d8] sm:$0xff]
    %v2374 = vld [vmem:[#allocation16 + $0x4e0] sm:$0xff]
    %v2375 = vld [vmem:[#allocation16 + $0x4e8] sm:$0xf]
    %v2376 = vld [vmem:[#allocation16 + $0x4ec] sm:$0xff]
    %v2377 = vld [vmem:[#allocation16 + $0x4f4] sm:$0xff]
    %v2378 = vld [vmem:[#allocation16 + $0x4fc] sm:$0xff]
    %v2379 = vld [vmem:[#allocation16 + $0x504] sm:$0xf]
    %v2380 = vld [vmem:[#allocation16 + $0x508] sm:$0xff]
    %v2381 = vld [vmem:[#allocation16 + $0x510] sm:$0xff]
    %v2382 = vld [vmem:[#allocation16 + $0x518] sm:$0xff]
    %v2383 = vld [vmem:[#allocation16 + $0x520] sm:$0xf]
    %v2384 = vld [vmem:[#allocation16 + $0x524] sm:$0xff]
    %v2385 = vld [vmem:[#allocation16 + $0x52c] sm:$0xff]
    %v2386 = vld [vmem:[#allocation16 + $0x534] sm:$0xff]
    %v2387 = vld [vmem:[#allocation16 + $0x53c] sm:$0xf]
    %v2388 = vld [vmem:[#allocation16 + $0x540] sm:$0xff]
    %v2389 = vld [vmem:[#allocation16 + $0x548] sm:$0xff]
    %v2390 = vld [vmem:[#allocation16 + $0x550] sm:$0xff]
    %v2391 = vld [vmem:[#allocation16 + $0x558] sm:$0xf]
    %v2392 = vld [vmem:[#allocation16 + $0x55c] sm:$0xff]
    %v2393 = vld [vmem:[#allocation16 + $0x564] sm:$0xff]
    %v2394 = vld [vmem:[#allocation16 + $0x56c] sm:$0xff]
    %v2395 = vld [vmem:[#allocation16 + $0x574] sm:$0xf]
    %v2396 = vld [vmem:[#allocation17] sm:$0x7f]
    %v2398 = vlaneseq
    %v2399 = vshrl.u32 %v2398, 7
    %v2400 = vsub.s32 0, %v2399
    %v2401 = vrot.slane %v2396, %v2400
    %v2402 = vlaneseq
    %v2403 = vshrl.u32 %v2402, 7
    %v2404 = vsub.s32 1, %v2403
    %v2405 = vrot.slane %v2396, %v2404
    %v2406 = vlaneseq
    %v2407 = vshrl.u32 %v2406, 7
    %v2408 = vsub.s32 2, %v2407
    %v2409 = vrot.slane %v2396, %v2408
    %v2410 = vlaneseq
    %v2411 = vshrl.u32 %v2410, 7
    %v2412 = vsub.s32 3, %v2411
    %v2413 = vrot.slane %v2396, %v2412
    %v2414 = vlaneseq
    %v2415 = vshrl.u32 %v2414, 7
    %v2416 = vsub.s32 4, %v2415
    %v2417 = vrot.slane %v2396, %v2416
    %v2418 = vlaneseq
    %v2419 = vshrl.u32 %v2418, 7
    %v2420 = vsub.s32 5, %v2419
    %v2421 = vrot.slane %v2396, %v2420
    %v2422 = vlaneseq
    %v2423 = vshrl.u32 %v2422, 7
    %v2424 = vsub.s32 6, %v2423
    %v2425 = vrot.slane %v2396, %v2424
    %v2633 = vunpack.c.l.b16 %v2196
    %v2634 = vunpack.c.h.b16 %v2196
    %v2635 = vunpack.c.l.b16 %v2197
    %v2636 = vunpack.c.h.b16 %v2197
    %v2637 = vunpack.c.l.b16 %v2198
    %v2638 = vunpack.c.h.b16 %v2198
    %v2639 = vunpack.c.l.b16 %v2199
    %v2640 = vunpack.c.l.b16 %v2200
    %v2641 = vunpack.c.h.b16 %v2200
    %v2642 = vunpack.c.l.b16 %v2201
    %v2643 = vunpack.c.h.b16 %v2201
    %v2644 = vunpack.c.l.b16 %v2202
    %v2645 = vunpack.c.h.b16 %v2202
    %v2646 = vunpack.c.l.b16 %v2203
    %v2647 = vunpack.c.l.b16 %v2204
    %v2648 = vunpack.c.h.b16 %v2204
    %v2649 = vunpack.c.l.b16 %v2205
    %v2650 = vunpack.c.h.b16 %v2205
    %v2651 = vunpack.c.l.b16 %v2206
    %v2652 = vunpack.c.h.b16 %v2206
    %v2653 = vunpack.c.l.b16 %v2207
    %v2654 = vunpack.c.l.b16 %v2208
    %v2655 = vunpack.c.h.b16 %v2208
    %v2656 = vunpack.c.l.b16 %v2209
    %v2657 = vunpack.c.h.b16 %v2209
    %v2658 = vunpack.c.l.b16 %v2210
    %v2659 = vunpack.c.h.b16 %v2210
    %v2660 = vunpack.c.l.b16 %v2211
    %v2661 = vunpack.c.l.b16 %v2212
    %v2662 = vunpack.c.h.b16 %v2212
    %v2663 = vunpack.c.l.b16 %v2213
    %v2664 = vunpack.c.h.b16 %v2213
    %v2665 = vunpack.c.l.b16 %v2214
    %v2666 = vunpack.c.h.b16 %v2214
    %v2667 = vunpack.c.l.b16 %v2215
    %v2668 = vunpack.c.l.b16 %v2216
    %v2669 = vunpack.c.h.b16 %v2216
    %v2670 = vunpack.c.l.b16 %v2217
    %v2671 = vunpack.c.h.b16 %v2217
    %v2672 = vunpack.c.l.b16 %v2218
    %v2673 = vunpack.c.h.b16 %v2218
    %v2674 = vunpack.c.l.b16 %v2219
    %v2675 = vunpack.c.l.b16 %v2220
    %v2676 = vunpack.c.h.b16 %v2220
    %v2677 = vunpack.c.l.b16 %v2221
    %v2678 = vunpack.c.h.b16 %v2221
    %v2679 = vunpack.c.l.b16 %v2222
    %v2680 = vunpack.c.h.b16 %v2222
    %v2681 = vunpack.c.l.b16 %v2223
    %v2682 = vunpack.c.l.b16 %v2224
    %v2683 = vunpack.c.h.b16 %v2224
    %v2684 = vunpack.c.l.b16 %v2225
    %v2685 = vunpack.c.h.b16 %v2225
    %v2686 = vunpack.c.l.b16 %v2226
    %v2687 = vunpack.c.h.b16 %v2226
    %v2688 = vunpack.c.l.b16 %v2227
    %v2689 = vunpack.c.l.b16 %v2228
    %v2690 = vunpack.c.h.b16 %v2228
    %v2691 = vunpack.c.l.b16 %v2229
    %v2692 = vunpack.c.h.b16 %v2229
    %v2693 = vunpack.c.l.b16 %v2230
    %v2694 = vunpack.c.h.b16 %v2230
    %v2695 = vunpack.c.l.b16 %v2231
    %v2696 = vunpack.c.l.b16 %v2232
    %v2697 = vunpack.c.h.b16 %v2232
    %v2698 = vunpack.c.l.b16 %v2233
    %v2699 = vunpack.c.h.b16 %v2233
    %v2700 = vunpack.c.l.b16 %v2234
    %v2701 = vunpack.c.h.b16 %v2234
    %v2702 = vunpack.c.l.b16 %v2235
    %v2703 = vunpack.c.l.b16 %v2236
    %v2704 = vunpack.c.h.b16 %v2236
    %v2705 = vunpack.c.l.b16 %v2237
    %v2706 = vunpack.c.h.b16 %v2237
    %v2707 = vunpack.c.l.b16 %v2238
    %v2708 = vunpack.c.h.b16 %v2238
    %v2709 = vunpack.c.l.b16 %v2239
    %v2710 = vunpack.c.l.b16 %v2240
    %v2711 = vunpack.c.h.b16 %v2240
    %v2712 = vunpack.c.l.b16 %v2241
    %v2713 = vunpack.c.h.b16 %v2241
    %v2714 = vunpack.c.l.b16 %v2242
    %v2715 = vunpack.c.h.b16 %v2242
    %v2716 = vunpack.c.l.b16 %v2243
    %v2717 = vunpack.c.l.b16 %v2244
    %v2718 = vunpack.c.h.b16 %v2244
    %v2719 = vunpack.c.l.b16 %v2245
    %v2720 = vunpack.c.h.b16 %v2245
    %v2721 = vunpack.c.l.b16 %v2246
    %v2722 = vunpack.c.h.b16 %v2246
    %v2723 = vunpack.c.l.b16 %v2247
    %v2724 = vunpack.c.l.b16 %v2248
    %v2725 = vunpack.c.h.b16 %v2248
    %v2726 = vunpack.c.l.b16 %v2249
    %v2727 = vunpack.c.h.b16 %v2249
    %v2728 = vunpack.c.l.b16 %v2250
    %v2729 = vunpack.c.h.b16 %v2250
    %v2730 = vunpack.c.l.b16 %v2251
    %v2731 = vunpack.c.l.b16 %v2252
    %v2732 = vunpack.c.h.b16 %v2252
    %v2733 = vunpack.c.l.b16 %v2253
    %v2734 = vunpack.c.h.b16 %v2253
    %v2735 = vunpack.c.l.b16 %v2254
    %v2736 = vunpack.c.h.b16 %v2254
    %v2737 = vunpack.c.l.b16 %v2255
    %v2738 = vunpack.c.l.b16 %v2256
    %v2739 = vunpack.c.h.b16 %v2256
    %v2740 = vunpack.c.l.b16 %v2257
    %v2741 = vunpack.c.h.b16 %v2257
    %v2742 = vunpack.c.l.b16 %v2258
    %v2743 = vunpack.c.h.b16 %v2258
    %v2744 = vunpack.c.l.b16 %v2259
    %v2745 = vunpack.c.l.b16 %v2260
    %v2746 = vunpack.c.h.b16 %v2260
    %v2747 = vunpack.c.l.b16 %v2261
    %v2748 = vunpack.c.h.b16 %v2261
    %v2749 = vunpack.c.l.b16 %v2262
    %v2750 = vunpack.c.h.b16 %v2262
    %v2751 = vunpack.c.l.b16 %v2263
    %v2752 = vunpack.c.l.b16 %v2264
    %v2753 = vunpack.c.h.b16 %v2264
    %v2754 = vunpack.c.l.b16 %v2265
    %v2755 = vunpack.c.h.b16 %v2265
    %v2756 = vunpack.c.l.b16 %v2266
    %v2757 = vunpack.c.h.b16 %v2266
    %v2758 = vunpack.c.l.b16 %v2267
    %v2759 = vunpack.c.l.b16 %v2268
    %v2760 = vunpack.c.h.b16 %v2268
    %v2761 = vunpack.c.l.b16 %v2269
    %v2762 = vunpack.c.h.b16 %v2269
    %v2763 = vunpack.c.l.b16 %v2270
    %v2764 = vunpack.c.h.b16 %v2270
    %v2765 = vunpack.c.l.b16 %v2271
    %v2766 = vunpack.c.l.b16 %v2272
    %v2767 = vunpack.c.h.b16 %v2272
    %v2768 = vunpack.c.l.b16 %v2273
    %v2769 = vunpack.c.h.b16 %v2273
    %v2770 = vunpack.c.l.b16 %v2274
    %v2771 = vunpack.c.h.b16 %v2274
    %v2772 = vunpack.c.l.b16 %v2275
    %v2773 = vunpack.c.l.b16 %v2276
    %v2774 = vunpack.c.h.b16 %v2276
    %v2775 = vunpack.c.l.b16 %v2277
    %v2776 = vunpack.c.h.b16 %v2277
    %v2777 = vunpack.c.l.b16 %v2278
    %v2778 = vunpack.c.h.b16 %v2278
    %v2779 = vunpack.c.l.b16 %v2279
    %v2780 = vunpack.c.l.b16 %v2280
    %v2781 = vunpack.c.h.b16 %v2280
    %v2782 = vunpack.c.l.b16 %v2281
    %v2783 = vunpack.c.h.b16 %v2281
    %v2784 = vunpack.c.l.b16 %v2282
    %v2785 = vunpack.c.h.b16 %v2282
    %v2786 = vunpack.c.l.b16 %v2283
    %v2787 = vunpack.c.l.b16 %v2284
    %v2788 = vunpack.c.h.b16 %v2284
    %v2789 = vunpack.c.l.b16 %v2285
    %v2790 = vunpack.c.h.b16 %v2285
    %v2791 = vunpack.c.l.b16 %v2286
    %v2792 = vunpack.c.h.b16 %v2286
    %v2793 = vunpack.c.l.b16 %v2287
    %v2794 = vunpack.c.l.b16 %v2288
    %v2795 = vunpack.c.h.b16 %v2288
    %v2796 = vunpack.c.l.b16 %v2289
    %v2797 = vunpack.c.h.b16 %v2289
    %v2798 = vunpack.c.l.b16 %v2290
    %v2799 = vunpack.c.h.b16 %v2290
    %v2800 = vunpack.c.l.b16 %v2291
    %v2801 = vunpack.c.l.b16 %v2292
    %v2802 = vunpack.c.h.b16 %v2292
    %v2803 = vunpack.c.l.b16 %v2293
    %v2804 = vunpack.c.h.b16 %v2293
    %v2805 = vunpack.c.l.b16 %v2294
    %v2806 = vunpack.c.h.b16 %v2294
    %v2807 = vunpack.c.l.b16 %v2295
    %v2808 = vunpack.c.l.b16 %v2296
    %v2809 = vunpack.c.h.b16 %v2296
    %v2810 = vunpack.c.l.b16 %v2297
    %v2811 = vunpack.c.h.b16 %v2297
    %v2812 = vunpack.c.l.b16 %v2298
    %v2813 = vunpack.c.h.b16 %v2298
    %v2814 = vunpack.c.l.b16 %v2299
    %v2815 = vunpack.c.l.b16 %v2300
    %v2816 = vunpack.c.h.b16 %v2300
    %v2817 = vunpack.c.l.b16 %v2301
    %v2818 = vunpack.c.h.b16 %v2301
    %v2819 = vunpack.c.l.b16 %v2302
    %v2820 = vunpack.c.h.b16 %v2302
    %v2821 = vunpack.c.l.b16 %v2303
    %v2822 = vunpack.c.l.b16 %v2304
    %v2823 = vunpack.c.h.b16 %v2304
    %v2824 = vunpack.c.l.b16 %v2305
    %v2825 = vunpack.c.h.b16 %v2305
    %v2826 = vunpack.c.l.b16 %v2306
    %v2827 = vunpack.c.h.b16 %v2306
    %v2828 = vunpack.c.l.b16 %v2307
    %v2829 = vunpack.c.l.b16 %v2308
    %v2830 = vunpack.c.h.b16 %v2308
    %v2831 = vunpack.c.l.b16 %v2309
    %v2832 = vunpack.c.h.b16 %v2309
    %v2833 = vunpack.c.l.b16 %v2310
    %v2834 = vunpack.c.h.b16 %v2310
    %v2835 = vunpack.c.l.b16 %v2311
    %v2836 = vunpack.c.l.b16 %v2312
    %v2837 = vunpack.c.h.b16 %v2312
    %v2838 = vunpack.c.l.b16 %v2313
    %v2839 = vunpack.c.h.b16 %v2313
    %v2840 = vunpack.c.l.b16 %v2314
    %v2841 = vunpack.c.h.b16 %v2314
    %v2842 = vunpack.c.l.b16 %v2315
    %v2843 = vunpack.c.l.b16 %v2316
    %v2844 = vunpack.c.h.b16 %v2316
    %v2845 = vunpack.c.l.b16 %v2317
    %v2846 = vunpack.c.h.b16 %v2317
    %v2847 = vunpack.c.l.b16 %v2318
    %v2848 = vunpack.c.h.b16 %v2318
    %v2849 = vunpack.c.l.b16 %v2319
    %v2850 = vunpack.c.l.b16 %v2320
    %v2851 = vunpack.c.h.b16 %v2320
    %v2852 = vunpack.c.l.b16 %v2321
    %v2853 = vunpack.c.h.b16 %v2321
    %v2854 = vunpack.c.l.b16 %v2322
    %v2855 = vunpack.c.h.b16 %v2322
    %v2856 = vunpack.c.l.b16 %v2323
    %v2857 = vunpack.c.l.b16 %v2324
    %v2858 = vunpack.c.h.b16 %v2324
    %v2859 = vunpack.c.l.b16 %v2325
    %v2860 = vunpack.c.h.b16 %v2325
    %v2861 = vunpack.c.l.b16 %v2326
    %v2862 = vunpack.c.h.b16 %v2326
    %v2863 = vunpack.c.l.b16 %v2327
    %v2864 = vunpack.c.l.b16 %v2328
    %v2865 = vunpack.c.h.b16 %v2328
    %v2866 = vunpack.c.l.b16 %v2329
    %v2867 = vunpack.c.h.b16 %v2329
    %v2868 = vunpack.c.l.b16 %v2330
    %v2869 = vunpack.c.h.b16 %v2330
    %v2870 = vunpack.c.l.b16 %v2331
    %v2871 = vunpack.c.l.b16 %v2332
    %v2872 = vunpack.c.h.b16 %v2332
    %v2873 = vunpack.c.l.b16 %v2333
    %v2874 = vunpack.c.h.b16 %v2333
    %v2875 = vunpack.c.l.b16 %v2334
    %v2876 = vunpack.c.h.b16 %v2334
    %v2877 = vunpack.c.l.b16 %v2335
    %v2878 = vunpack.c.l.b16 %v2336
    %v2879 = vunpack.c.h.b16 %v2336
    %v2880 = vunpack.c.l.b16 %v2337
    %v2881 = vunpack.c.h.b16 %v2337
    %v2882 = vunpack.c.l.b16 %v2338
    %v2883 = vunpack.c.h.b16 %v2338
    %v2884 = vunpack.c.l.b16 %v2339
    %v2885 = vunpack.c.l.b16 %v2340
    %v2886 = vunpack.c.h.b16 %v2340
    %v2887 = vunpack.c.l.b16 %v2341
    %v2888 = vunpack.c.h.b16 %v2341
    %v2889 = vunpack.c.l.b16 %v2342
    %v2890 = vunpack.c.h.b16 %v2342
    %v2891 = vunpack.c.l.b16 %v2343
    %v2892 = vunpack.c.l.b16 %v2344
    %v2893 = vunpack.c.h.b16 %v2344
    %v2894 = vunpack.c.l.b16 %v2345
    %v2895 = vunpack.c.h.b16 %v2345
    %v2896 = vunpack.c.l.b16 %v2346
    %v2897 = vunpack.c.h.b16 %v2346
    %v2898 = vunpack.c.l.b16 %v2347
    %v2899 = vunpack.c.l.b16 %v2348
    %v2900 = vunpack.c.h.b16 %v2348
    %v2901 = vunpack.c.l.b16 %v2349
    %v2902 = vunpack.c.h.b16 %v2349
    %v2903 = vunpack.c.l.b16 %v2350
    %v2904 = vunpack.c.h.b16 %v2350
    %v2905 = vunpack.c.l.b16 %v2351
    %v2906 = vunpack.c.l.b16 %v2352
    %v2907 = vunpack.c.h.b16 %v2352
    %v2908 = vunpack.c.l.b16 %v2353
    %v2909 = vunpack.c.h.b16 %v2353
    %v2910 = vunpack.c.l.b16 %v2354
    %v2911 = vunpack.c.h.b16 %v2354
    %v2912 = vunpack.c.l.b16 %v2355
    %v2913 = vunpack.c.l.b16 %v2356
    %v2914 = vunpack.c.h.b16 %v2356
    %v2915 = vunpack.c.l.b16 %v2357
    %v2916 = vunpack.c.h.b16 %v2357
    %v2917 = vunpack.c.l.b16 %v2358
    %v2918 = vunpack.c.h.b16 %v2358
    %v2919 = vunpack.c.l.b16 %v2359
    %v2920 = vunpack.c.l.b16 %v2360
    %v2921 = vunpack.c.h.b16 %v2360
    %v2922 = vunpack.c.l.b16 %v2361
    %v2923 = vunpack.c.h.b16 %v2361
    %v2924 = vunpack.c.l.b16 %v2362
    %v2925 = vunpack.c.h.b16 %v2362
    %v2926 = vunpack.c.l.b16 %v2363
    %v2927 = vunpack.c.l.b16 %v2364
    %v2928 = vunpack.c.h.b16 %v2364
    %v2929 = vunpack.c.l.b16 %v2365
    %v2930 = vunpack.c.h.b16 %v2365
    %v2931 = vunpack.c.l.b16 %v2366
    %v2932 = vunpack.c.h.b16 %v2366
    %v2933 = vunpack.c.l.b16 %v2367
    %v2934 = vunpack.c.l.b16 %v2368
    %v2935 = vunpack.c.h.b16 %v2368
    %v2936 = vunpack.c.l.b16 %v2369
    %v2937 = vunpack.c.h.b16 %v2369
    %v2938 = vunpack.c.l.b16 %v2370
    %v2939 = vunpack.c.h.b16 %v2370
    %v2940 = vunpack.c.l.b16 %v2371
    %v2941 = vunpack.c.l.b16 %v2372
    %v2942 = vunpack.c.h.b16 %v2372
    %v2943 = vunpack.c.l.b16 %v2373
    %v2944 = vunpack.c.h.b16 %v2373
    %v2945 = vunpack.c.l.b16 %v2374
    %v2946 = vunpack.c.h.b16 %v2374
    %v2947 = vunpack.c.l.b16 %v2375
    %v2948 = vunpack.c.l.b16 %v2376
    %v2949 = vunpack.c.h.b16 %v2376
    %v2950 = vunpack.c.l.b16 %v2377
    %v2951 = vunpack.c.h.b16 %v2377
    %v2952 = vunpack.c.l.b16 %v2378
    %v2953 = vunpack.c.h.b16 %v2378
    %v2954 = vunpack.c.l.b16 %v2379
    %v2955 = vunpack.c.l.b16 %v2380
    %v2956 = vunpack.c.h.b16 %v2380
    %v2957 = vunpack.c.l.b16 %v2381
    %v2958 = vunpack.c.h.b16 %v2381
    %v2959 = vunpack.c.l.b16 %v2382
    %v2960 = vunpack.c.h.b16 %v2382
    %v2961 = vunpack.c.l.b16 %v2383
    %v2962 = vunpack.c.l.b16 %v2384
    %v2963 = vunpack.c.h.b16 %v2384
    %v2964 = vunpack.c.l.b16 %v2385
    %v2965 = vunpack.c.h.b16 %v2385
    %v2966 = vunpack.c.l.b16 %v2386
    %v2967 = vunpack.c.h.b16 %v2386
    %v2968 = vunpack.c.l.b16 %v2387
    %v2969 = vunpack.c.l.b16 %v2388
    %v2970 = vunpack.c.h.b16 %v2388
    %v2971 = vunpack.c.l.b16 %v2389
    %v2972 = vunpack.c.h.b16 %v2389
    %v2973 = vunpack.c.l.b16 %v2390
    %v2974 = vunpack.c.h.b16 %v2390
    %v2975 = vunpack.c.l.b16 %v2391
    %v2976 = vunpack.c.l.b16 %v2392
    %v2977 = vunpack.c.h.b16 %v2392
    %v2978 = vunpack.c.l.b16 %v2393
    %v2979 = vunpack.c.h.b16 %v2393
    %v2980 = vunpack.c.l.b16 %v2394
    %v2981 = vunpack.c.h.b16 %v2394
    %v2982 = vunpack.c.l.b16 %v2395
    %v2983 = vpack.c.b16 %v2640, %v2633
    %v2984 = vpack.c.b16 %v2641, %v2634
    %v2985 = vpack.c.b16 %v2642, %v2635
    %v2986 = vpack.c.b16 %v2643, %v2636
    %v2987 = vpack.c.b16 %v2644, %v2637
    %v2988 = vpack.c.b16 %v2645, %v2638
    %v2989 = vpack.c.b16 %v2646, %v2639
    %v2990 = vpack.c.b16 %v2654, %v2647
    %v2991 = vpack.c.b16 %v2655, %v2648
    %v2992 = vpack.c.b16 %v2656, %v2649
    %v2993 = vpack.c.b16 %v2657, %v2650
    %v2994 = vpack.c.b16 %v2658, %v2651
    %v2995 = vpack.c.b16 %v2659, %v2652
    %v2996 = vpack.c.b16 %v2660, %v2653
    %v2997 = vpack.c.b16 %v2668, %v2661
    %v2998 = vpack.c.b16 %v2669, %v2662
    %v2999 = vpack.c.b16 %v2670, %v2663
    %v3000 = vpack.c.b16 %v2671, %v2664
    %v3001 = vpack.c.b16 %v2672, %v2665
    %v3002 = vpack.c.b16 %v2673, %v2666
    %v3003 = vpack.c.b16 %v2674, %v2667
    %v3004 = vpack.c.b16 %v2682, %v2675
    %v3005 = vpack.c.b16 %v2683, %v2676
    %v3006 = vpack.c.b16 %v2684, %v2677
    %v3007 = vpack.c.b16 %v2685, %v2678
    %v3008 = vpack.c.b16 %v2686, %v2679
    %v3009 = vpack.c.b16 %v2687, %v2680
    %v3010 = vpack.c.b16 %v2688, %v2681
    %v3011 = vpack.c.b16 %v2696, %v2689
    %v3012 = vpack.c.b16 %v2697, %v2690
    %v3013 = vpack.c.b16 %v2698, %v2691
    %v3014 = vpack.c.b16 %v2699, %v2692
    %v3015 = vpack.c.b16 %v2700, %v2693
    %v3016 = vpack.c.b16 %v2701, %v2694
    %v3017 = vpack.c.b16 %v2702, %v2695
    %v3018 = vpack.c.b16 %v2710, %v2703
    %v3019 = vpack.c.b16 %v2711, %v2704
    %v3020 = vpack.c.b16 %v2712, %v2705
    %v3021 = vpack.c.b16 %v2713, %v2706
    %v3022 = vpack.c.b16 %v2714, %v2707
    %v3023 = vpack.c.b16 %v2715, %v2708
    %v3024 = vpack.c.b16 %v2716, %v2709
    %v3025 = vpack.c.b16 %v2724, %v2717
    %v3026 = vpack.c.b16 %v2725, %v2718
    %v3027 = vpack.c.b16 %v2726, %v2719
    %v3028 = vpack.c.b16 %v2727, %v2720
    %v3029 = vpack.c.b16 %v2728, %v2721
    %v3030 = vpack.c.b16 %v2729, %v2722
    %v3031 = vpack.c.b16 %v2730, %v2723
    %v3032 = vpack.c.b16 %v2738, %v2731
    %v3033 = vpack.c.b16 %v2739, %v2732
    %v3034 = vpack.c.b16 %v2740, %v2733
    %v3035 = vpack.c.b16 %v2741, %v2734
    %v3036 = vpack.c.b16 %v2742, %v2735
    %v3037 = vpack.c.b16 %v2743, %v2736
    %v3038 = vpack.c.b16 %v2744, %v2737
    %v3039 = vpack.c.b16 %v2752, %v2745
    %v3040 = vpack.c.b16 %v2753, %v2746
    %v3041 = vpack.c.b16 %v2754, %v2747
    %v3042 = vpack.c.b16 %v2755, %v2748
    %v3043 = vpack.c.b16 %v2756, %v2749
    %v3044 = vpack.c.b16 %v2757, %v2750
    %v3045 = vpack.c.b16 %v2758, %v2751
    %v3046 = vpack.c.b16 %v2766, %v2759
    %v3047 = vpack.c.b16 %v2767, %v2760
    %v3048 = vpack.c.b16 %v2768, %v2761
    %v3049 = vpack.c.b16 %v2769, %v2762
    %v3050 = vpack.c.b16 %v2770, %v2763
    %v3051 = vpack.c.b16 %v2771, %v2764
    %v3052 = vpack.c.b16 %v2772, %v2765
    %v3053 = vpack.c.b16 %v2780, %v2773
    %v3054 = vpack.c.b16 %v2781, %v2774
    %v3055 = vpack.c.b16 %v2782, %v2775
    %v3056 = vpack.c.b16 %v2783, %v2776
    %v3057 = vpack.c.b16 %v2784, %v2777
    %v3058 = vpack.c.b16 %v2785, %v2778
    %v3059 = vpack.c.b16 %v2786, %v2779
    %v3060 = vpack.c.b16 %v2794, %v2787
    %v3061 = vpack.c.b16 %v2795, %v2788
    %v3062 = vpack.c.b16 %v2796, %v2789
    %v3063 = vpack.c.b16 %v2797, %v2790
    %v3064 = vpack.c.b16 %v2798, %v2791
    %v3065 = vpack.c.b16 %v2799, %v2792
    %v3066 = vpack.c.b16 %v2800, %v2793
    %v3067 = vpack.c.b16 %v2808, %v2801
    %v3068 = vpack.c.b16 %v2809, %v2802
    %v3069 = vpack.c.b16 %v2810, %v2803
    %v3070 = vpack.c.b16 %v2811, %v2804
    %v3071 = vpack.c.b16 %v2812, %v2805
    %v3072 = vpack.c.b16 %v2813, %v2806
    %v3073 = vpack.c.b16 %v2814, %v2807
    %v3074 = vpack.c.b16 %v2822, %v2815
    %v3075 = vpack.c.b16 %v2823, %v2816
    %v3076 = vpack.c.b16 %v2824, %v2817
    %v3077 = vpack.c.b16 %v2825, %v2818
    %v3078 = vpack.c.b16 %v2826, %v2819
    %v3079 = vpack.c.b16 %v2827, %v2820
    %v3080 = vpack.c.b16 %v2828, %v2821
    %v3081 = vpack.c.b16 %v2836, %v2829
    %v3082 = vpack.c.b16 %v2837, %v2830
    %v3083 = vpack.c.b16 %v2838, %v2831
    %v3084 = vpack.c.b16 %v2839, %v2832
    %v3085 = vpack.c.b16 %v2840, %v2833
    %v3086 = vpack.c.b16 %v2841, %v2834
    %v3087 = vpack.c.b16 %v2842, %v2835
    %v3088 = vpack.c.b16 %v2850, %v2843
    %v3089 = vpack.c.b16 %v2851, %v2844
    %v3090 = vpack.c.b16 %v2852, %v2845
    %v3091 = vpack.c.b16 %v2853, %v2846
    %v3092 = vpack.c.b16 %v2854, %v2847
    %v3093 = vpack.c.b16 %v2855, %v2848
    %v3094 = vpack.c.b16 %v2856, %v2849
    %v3095 = vpack.c.b16 %v2864, %v2857
    %v3096 = vpack.c.b16 %v2865, %v2858
    %v3097 = vpack.c.b16 %v2866, %v2859
    %v3098 = vpack.c.b16 %v2867, %v2860
    %v3099 = vpack.c.b16 %v2868, %v2861
    %v3100 = vpack.c.b16 %v2869, %v2862
    %v3101 = vpack.c.b16 %v2870, %v2863
    %v3102 = vpack.c.b16 %v2878, %v2871
    %v3103 = vpack.c.b16 %v2879, %v2872
    %v3104 = vpack.c.b16 %v2880, %v2873
    %v3105 = vpack.c.b16 %v2881, %v2874
    %v3106 = vpack.c.b16 %v2882, %v2875
    %v3107 = vpack.c.b16 %v2883, %v2876
    %v3108 = vpack.c.b16 %v2884, %v2877
    %v3109 = vpack.c.b16 %v2892, %v2885
    %v3110 = vpack.c.b16 %v2893, %v2886
    %v3111 = vpack.c.b16 %v2894, %v2887
    %v3112 = vpack.c.b16 %v2895, %v2888
    %v3113 = vpack.c.b16 %v2896, %v2889
    %v3114 = vpack.c.b16 %v2897, %v2890
    %v3115 = vpack.c.b16 %v2898, %v2891
    %v3116 = vpack.c.b16 %v2906, %v2899
    %v3117 = vpack.c.b16 %v2907, %v2900
    %v3118 = vpack.c.b16 %v2908, %v2901
    %v3119 = vpack.c.b16 %v2909, %v2902
    %v3120 = vpack.c.b16 %v2910, %v2903
    %v3121 = vpack.c.b16 %v2911, %v2904
    %v3122 = vpack.c.b16 %v2912, %v2905
    %v3123 = vpack.c.b16 %v2920, %v2913
    %v3124 = vpack.c.b16 %v2921, %v2914
    %v3125 = vpack.c.b16 %v2922, %v2915
    %v3126 = vpack.c.b16 %v2923, %v2916
    %v3127 = vpack.c.b16 %v2924, %v2917
    %v3128 = vpack.c.b16 %v2925, %v2918
    %v3129 = vpack.c.b16 %v2926, %v2919
    %v3130 = vpack.c.b16 %v2934, %v2927
    %v3131 = vpack.c.b16 %v2935, %v2928
    %v3132 = vpack.c.b16 %v2936, %v2929
    %v3133 = vpack.c.b16 %v2937, %v2930
    %v3134 = vpack.c.b16 %v2938, %v2931
    %v3135 = vpack.c.b16 %v2939, %v2932
    %v3136 = vpack.c.b16 %v2940, %v2933
    %v3137 = vpack.c.b16 %v2948, %v2941
    %v3138 = vpack.c.b16 %v2949, %v2942
    %v3139 = vpack.c.b16 %v2950, %v2943
    %v3140 = vpack.c.b16 %v2951, %v2944
    %v3141 = vpack.c.b16 %v2952, %v2945
    %v3142 = vpack.c.b16 %v2953, %v2946
    %v3143 = vpack.c.b16 %v2954, %v2947
    %v3144 = vpack.c.b16 %v2962, %v2955
    %v3145 = vpack.c.b16 %v2963, %v2956
    %v3146 = vpack.c.b16 %v2964, %v2957
    %v3147 = vpack.c.b16 %v2965, %v2958
    %v3148 = vpack.c.b16 %v2966, %v2959
    %v3149 = vpack.c.b16 %v2967, %v2960
    %v3150 = vpack.c.b16 %v2968, %v2961
    %v3151 = vpack.c.b16 %v2976, %v2969
    %v3152 = vpack.c.b16 %v2977, %v2970
    %v3153 = vpack.c.b16 %v2978, %v2971
    %v3154 = vpack.c.b16 %v2979, %v2972
    %v3155 = vpack.c.b16 %v2980, %v2973
    %v3156 = vpack.c.b16 %v2981, %v2974
    %v3157 = vpack.c.b16 %v2982, %v2975
    %v3334 = vsel %vm1391, %v2195, 0
    %3336 = vmatprep.subr.bf16.mxu0 %v2984
    %3337 = vmatpush1.bf16.msra.mxu0 %v2983
    %3338 = vmatprep.subr.bf16.mxu0 %v2991
    %3339 = vmatpush1.bf16.msra.mxu0 %v2990
    %3340 = vmatprep.subr.bf16.mxu0 %v2998
    %3341 = vmatpush1.bf16.msra.mxu0 %v2997
    %3342 = vmatprep.subr.bf16.mxu0 %v3005
    %3343 = vmatpush1.bf16.msra.mxu0 %v3004
    %3344 = vmatprep.subr.bf16.mxu0 %v3012
    %3345 = vmatpush1.bf16.msra.mxu0 %v3011
    %3346 = vmatprep.subr.bf16.mxu0 %v3019
    %3347 = vmatpush1.bf16.msra.mxu0 %v3018
    %3348 = vmatprep.subr.bf16.mxu0 %v3026
    %3349 = vmatpush1.bf16.msra.mxu0 %v3025
    %3350 = vmatprep.subr.bf16.mxu0 %v3033
    %3351 = vmatpush1.bf16.msra.mxu0 %v3032
    %3352 = vmatprep.subr.bf16.mxu0 %v3040
    %3353 = vmatpush1.bf16.msra.mxu0 %v3039
    %3354 = vmatprep.subr.bf16.mxu0 %v3047
    %3355 = vmatpush1.bf16.msra.mxu0 %v3046
    %3356 = vmatprep.subr.bf16.mxu0 %v3054
    %3357 = vmatpush1.bf16.msra.mxu0 %v3053
    %3358 = vmatprep.subr.bf16.mxu0 %v3061
    %3359 = vmatpush1.bf16.msra.mxu0 %v3060
    %3360 = vmatprep.subr.bf16.mxu0 %v3068
    %3361 = vmatpush1.bf16.msra.mxu0 %v3067
    %3362 = vmatprep.subr.bf16.mxu0 %v3075
    %3363 = vmatpush1.bf16.msra.mxu0 %v3074
    %3364 = vmatprep.subr.bf16.mxu0 %v3082
    %3365 = vmatpush1.bf16.msra.mxu0 %v3081
    %3366 = vmatprep.subr.bf16.mxu0 %v3089
    %3367 = vmatpush1.bf16.msra.mxu0 %v3088
    %3368 = vmatprep.mubr.bf16.mxu0 %v2193
    %3369 = vmatmul.mubr.bf16.gmra.mrb[0].mxu0 %v2192
    %v3370 = vpop.f32.mrb[0].mxu0
    %v3371 = vadd.f32 %v2401, %v3370
    %v3372 = vpop.f32.mrb[0].mxu0
    %v3373 = vadd.f32 %v2405, %v3372
    %v3374 = vpop.f32.mrb[0].mxu0
    %v3375 = vpop.f32.mrb[0].mxu0
    %3376 = vdwg.mxu0
    %3377 = vmatprep.subr.bf16.mxu0 %v3096
    %3378 = vmatpush1.bf16.msra.mxu0 %v3095
    %3379 = vmatprep.subr.bf16.mxu0 %v3103
    %3380 = vmatpush1.bf16.msra.mxu0 %v3102
    %3381 = vmatprep.subr.bf16.mxu0 %v3110
    %3382 = vmatpush1.bf16.msra.mxu0 %v3109
    %3383 = vmatprep.subr.bf16.mxu0 %v3117
    %3384 = vmatpush1.bf16.msra.mxu0 %v3116
    %3385 = vmatprep.subr.bf16.mxu0 %v3124
    %3386 = vmatpush1.bf16.msra.mxu0 %v3123
    %3387 = vmatprep.subr.bf16.mxu0 %v3131
    %3388 = vmatpush1.bf16.msra.mxu0 %v3130
    %3389 = vmatprep.subr.bf16.mxu0 %v3138
    %3390 = vmatpush1.bf16.msra.mxu0 %v3137
    %3391 = vmatprep.subr.bf16.mxu0 %v3145
    %3392 = vmatpush1.bf16.msra.mxu0 %v3144
    %3393 = vmatprep.subr.bf16.mxu0 %v3152
    %3394 = vmatpush1.bf16.msra.mxu0 %v3151
    %3395 = vmatprep.subr.bf16.mxu0 0
    %3396 = vmatpush1.bf16.msra.mxu0 0
    %3397 = vmatprep.subr.bf16.mxu0 0
    %3398 = vmatpush1.bf16.msra.mxu0 0
    %3399 = vmatprep.subr.bf16.mxu0 0
    %3400 = vmatpush1.bf16.msra.mxu0 0
    %3401 = vmatprep.subr.bf16.mxu0 0
    %3402 = vmatpush1.bf16.msra.mxu0 0
    %3403 = vmatprep.subr.bf16.mxu0 0
    %3404 = vmatpush1.bf16.msra.mxu0 0
    %3405 = vmatprep.subr.bf16.mxu0 0
    %3406 = vmatpush1.bf16.msra.mxu0 0
    %3407 = vmatprep.subr.bf16.mxu0 0
    %3408 = vmatpush1.bf16.msra.mxu0 0
    %3409 = vmatprep.mubr.bf16.mxu0 %v3334
    %3410 = vmatmul.mubr.bf16.gmra.mrb[0].mxu0 %v2194
    %v3411 = vpop.f32.mrb[0].mxu0
    %v3412 = vadd.f32 %v3371, %v3411
    %v3413 = vpop.f32.mrb[0].mxu0
    %v3414 = vadd.f32 %v3373, %v3413
    %v3415 = vpop.f32.mrb[0].mxu0
    %v3416 = vpop.f32.mrb[0].mxu0
    %3417 = vdwg.mxu0
    %3418 = vmatprep.subr.bf16.mxu0 %v2986
    %3419 = vmatpush1.bf16.msra.mxu0 %v2985
    %3420 = vmatprep.subr.bf16.mxu0 %v2993
    %3421 = vmatpush1.bf16.msra.mxu0 %v2992
    %3422 = vmatprep.subr.bf16.mxu0 %v3000
    %3423 = vmatpush1.bf16.msra.mxu0 %v2999
    %3424 = vmatprep.subr.bf16.mxu0 %v3007
    %3425 = vmatpush1.bf16.msra.mxu0 %v3006
    %3426 = vmatprep.subr.bf16.mxu0 %v3014
    %3427 = vmatpush1.bf16.msra.mxu0 %v3013
    %3428 = vmatprep.subr.bf16.mxu0 %v3021
    %3429 = vmatpush1.bf16.msra.mxu0 %v3020
    %3430 = vmatprep.subr.bf16.mxu0 %v3028
    %3431 = vmatpush1.bf16.msra.mxu0 %v3027
    %3432 = vmatprep.subr.bf16.mxu0 %v3035
    %3433 = vmatpush1.bf16.msra.mxu0 %v3034
    %3434 = vmatprep.subr.bf16.mxu0 %v3042
    %3435 = vmatpush1.bf16.msra.mxu0 %v3041
    %3436 = vmatprep.subr.bf16.mxu0 %v3049
    %3437 = vmatpush1.bf16.msra.mxu0 %v3048
    %3438 = vmatprep.subr.bf16.mxu0 %v3056
    %3439 = vmatpush1.bf16.msra.mxu0 %v3055
    %3440 = vmatprep.subr.bf16.mxu0 %v3063
    %3441 = vmatpush1.bf16.msra.mxu0 %v3062
    %3442 = vmatprep.subr.bf16.mxu0 %v3070
    %3443 = vmatpush1.bf16.msra.mxu0 %v3069
    %3444 = vmatprep.subr.bf16.mxu0 %v3077
    %3445 = vmatpush1.bf16.msra.mxu0 %v3076
    %3446 = vmatprep.subr.bf16.mxu0 %v3084
    %3447 = vmatpush1.bf16.msra.mxu0 %v3083
    %3448 = vmatprep.subr.bf16.mxu0 %v3091
    %3449 = vmatpush1.bf16.msra.mxu0 %v3090
    %3450 = vmatprep.mubr.bf16.mxu0 %v2193
    %3451 = vmatmul.mubr.bf16.gmra.mrb[0].mxu0 %v2192
    %v3452 = vpop.f32.mrb[0].mxu0
    %v3453 = vadd.f32 %v2409, %v3452
    %v3454 = vpop.f32.mrb[0].mxu0
    %v3455 = vadd.f32 %v2413, %v3454
    %v3456 = vpop.f32.mrb[0].mxu0
    %v3457 = vpop.f32.mrb[0].mxu0
    %3458 = vdwg.mxu0
    %3459 = vmatprep.subr.bf16.mxu0 %v3098
    %3460 = vmatpush1.bf16.msra.mxu0 %v3097
    %3461 = vmatprep.subr.bf16.mxu0 %v3105
    %3462 = vmatpush1.bf16.msra.mxu0 %v3104
    %3463 = vmatprep.subr.bf16.mxu0 %v3112
    %3464 = vmatpush1.bf16.msra.mxu0 %v3111
    %3465 = vmatprep.subr.bf16.mxu0 %v3119
    %3466 = vmatpush1.bf16.msra.mxu0 %v3118
    %3467 = vmatprep.subr.bf16.mxu0 %v3126
    %3468 = vmatpush1.bf16.msra.mxu0 %v3125
    %3469 = vmatprep.subr.bf16.mxu0 %v3133
    %3470 = vmatpush1.bf16.msra.mxu0 %v3132
    %3471 = vmatprep.subr.bf16.mxu0 %v3140
    %3472 = vmatpush1.bf16.msra.mxu0 %v3139
    %3473 = vmatprep.subr.bf16.mxu0 %v3147
    %3474 = vmatpush1.bf16.msra.mxu0 %v3146
    %3475 = vmatprep.subr.bf16.mxu0 %v3154
    %3476 = vmatpush1.bf16.msra.mxu0 %v3153
    %3477 = vmatprep.subr.bf16.mxu0 0
    %3478 = vmatpush1.bf16.msra.mxu0 0
    %3479 = vmatprep.subr.bf16.mxu0 0
    %3480 = vmatpush1.bf16.msra.mxu0 0
    %3481 = vmatprep.subr.bf16.mxu0 0
    %3482 = vmatpush1.bf16.msra.mxu0 0
    %3483 = vmatprep.subr.bf16.mxu0 0
    %3484 = vmatpush1.bf16.msra.mxu0 0
    %3485 = vmatprep.subr.bf16.mxu0 0
    %3486 = vmatpush1.bf16.msra.mxu0 0
    %3487 = vmatprep.subr.bf16.mxu0 0
    %3488 = vmatpush1.bf16.msra.mxu0 0
    %3489 = vmatprep.subr.bf16.mxu0 0
    %3490 = vmatpush1.bf16.msra.mxu0 0
    %3491 = vmatprep.mubr.bf16.mxu0 %v3334
    %3492 = vmatmul.mubr.bf16.gmra.mrb[0].mxu0 %v2194
    %v3493 = vpop.f32.mrb[0].mxu0
    %v3494 = vadd.f32 %v3453, %v3493
    %v3495 = vpop.f32.mrb[0].mxu0
    %v3496 = vadd.f32 %v3455, %v3495
    %v3497 = vpop.f32.mrb[0].mxu0
    %v3498 = vpop.f32.mrb[0].mxu0
    %3499 = vdwg.mxu0
    %3500 = vmatprep.subr.bf16.mxu0 %v2988
    %3501 = vmatpush1.bf16.msra.mxu0 %v2987
    %3502 = vmatprep.subr.bf16.mxu0 %v2995
    %3503 = vmatpush1.bf16.msra.mxu0 %v2994
    %3504 = vmatprep.subr.bf16.mxu0 %v3002
    %3505 = vmatpush1.bf16.msra.mxu0 %v3001
    %3506 = vmatprep.subr.bf16.mxu0 %v3009
    %3507 = vmatpush1.bf16.msra.mxu0 %v3008
    %3508 = vmatprep.subr.bf16.mxu0 %v3016
    %3509 = vmatpush1.bf16.msra.mxu0 %v3015
    %3510 = vmatprep.subr.bf16.mxu0 %v3023
    %3511 = vmatpush1.bf16.msra.mxu0 %v3022
    %3512 = vmatprep.subr.bf16.mxu0 %v3030
    %3513 = vmatpush1.bf16.msra.mxu0 %v3029
    %3514 = vmatprep.subr.bf16.mxu0 %v3037
    %3515 = vmatpush1.bf16.msra.mxu0 %v3036
    %3516 = vmatprep.subr.bf16.mxu0 %v3044
    %3517 = vmatpush1.bf16.msra.mxu0 %v3043
    %3518 = vmatprep.subr.bf16.mxu0 %v3051
    %3519 = vmatpush1.bf16.msra.mxu0 %v3050
    %3520 = vmatprep.subr.bf16.mxu0 %v3058
    %3521 = vmatpush1.bf16.msra.mxu0 %v3057
    %3522 = vmatprep.subr.bf16.mxu0 %v3065
    %3523 = vmatpush1.bf16.msra.mxu0 %v3064
    %3524 = vmatprep.subr.bf16.mxu0 %v3072
    %3525 = vmatpush1.bf16.msra.mxu0 %v3071
    %3526 = vmatprep.subr.bf16.mxu0 %v3079
    %3527 = vmatpush1.bf16.msra.mxu0 %v3078
    %3528 = vmatprep.subr.bf16.mxu0 %v3086
    %3529 = vmatpush1.bf16.msra.mxu0 %v3085
    %3530 = vmatprep.subr.bf16.mxu0 %v3093
    %3531 = vmatpush1.bf16.msra.mxu0 %v3092
    %3532 = vmatprep.mubr.bf16.mxu0 %v2193
    %3533 = vmatmul.mubr.bf16.gmra.mrb[0].mxu0 %v2192
    %v3534 = vpop.f32.mrb[0].mxu0
    %v3535 = vadd.f32 %v2417, %v3534
    %v3536 = vpop.f32.mrb[0].mxu0
    %v3537 = vadd.f32 %v2421, %v3536
    %v3538 = vpop.f32.mrb[0].mxu0
    %v3539 = vpop.f32.mrb[0].mxu0
    %3540 = vdwg.mxu0
    %3541 = vmatprep.subr.bf16.mxu0 %v3100
    %3542 = vmatpush1.bf16.msra.mxu0 %v3099
    %3543 = vmatprep.subr.bf16.mxu0 %v3107
    %3544 = vmatpush1.bf16.msra.mxu0 %v3106
    %3545 = vmatprep.subr.bf16.mxu0 %v3114
    %3546 = vmatpush1.bf16.msra.mxu0 %v3113
    %3547 = vmatprep.subr.bf16.mxu0 %v3121
    %3548 = vmatpush1.bf16.msra.mxu0 %v3120
    %3549 = vmatprep.subr.bf16.mxu0 %v3128
    %3550 = vmatpush1.bf16.msra.mxu0 %v3127
    %3551 = vmatprep.subr.bf16.mxu0 %v3135
    %3552 = vmatpush1.bf16.msra.mxu0 %v3134
    %3553 = vmatprep.subr.bf16.mxu0 %v3142
    %3554 = vmatpush1.bf16.msra.mxu0 %v3141
    %3555 = vmatprep.subr.bf16.mxu0 %v3149
    %3556 = vmatpush1.bf16.msra.mxu0 %v3148
    %3557 = vmatprep.subr.bf16.mxu0 %v3156
    %3558 = vmatpush1.bf16.msra.mxu0 %v3155
    %3559 = vmatprep.subr.bf16.mxu0 0
    %3560 = vmatpush1.bf16.msra.mxu0 0
    %3561 = vmatprep.subr.bf16.mxu0 0
    %3562 = vmatpush1.bf16.msra.mxu0 0
    %3563 = vmatprep.subr.bf16.mxu0 0
    %3564 = vmatpush1.bf16.msra.mxu0 0
    %3565 = vmatprep.subr.bf16.mxu0 0
    %3566 = vmatpush1.bf16.msra.mxu0 0
    %3567 = vmatprep.subr.bf16.mxu0 0
    %3568 = vmatpush1.bf16.msra.mxu0 0
    %3569 = vmatprep.subr.bf16.mxu0 0
    %3570 = vmatpush1.bf16.msra.mxu0 0
    %3571 = vmatprep.subr.bf16.mxu0 0
    %3572 = vmatpush1.bf16.msra.mxu0 0
    %3573 = vmatprep.mubr.bf16.mxu0 %v3334
    %3574 = vmatmul.mubr.bf16.gmra.mrb[0].mxu0 %v2194
    %v3575 = vpop.f32.mrb[0].mxu0
    %v3576 = vadd.f32 %v3535, %v3575
    %v3577 = vpop.f32.mrb[0].mxu0
    %v3578 = vadd.f32 %v3537, %v3577
    %v3579 = vpop.f32.mrb[0].mxu0
    %v3580 = vpop.f32.mrb[0].mxu0
    %3581 = vdwg.mxu0
    %3582 = vmatprep.subr.bf16.mxu0 0
    %3583 = vmatpush1.bf16.msra.mxu0 %v2989
    %3584 = vmatprep.subr.bf16.mxu0 0
    %3585 = vmatpush1.bf16.msra.mxu0 %v2996
    %3586 = vmatprep.subr.bf16.mxu0 0
    %3587 = vmatpush1.bf16.msra.mxu0 %v3003
    %3588 = vmatprep.subr.bf16.mxu0 0
    %3589 = vmatpush1.bf16.msra.mxu0 %v3010
    %3590 = vmatprep.subr.bf16.mxu0 0
    %3591 = vmatpush1.bf16.msra.mxu0 %v3017
    %3592 = vmatprep.subr.bf16.mxu0 0
    %3593 = vmatpush1.bf16.msra.mxu0 %v3024
    %3594 = vmatprep.subr.bf16.mxu0 0
    %3595 = vmatpush1.bf16.msra.mxu0 %v3031
    %3596 = vmatprep.subr.bf16.mxu0 0
    %3597 = vmatpush1.bf16.msra.mxu0 %v3038
    %3598 = vmatprep.subr.bf16.mxu0 0
    %3599 = vmatpush1.bf16.msra.mxu0 %v3045
    %3600 = vmatprep.subr.bf16.mxu0 0
    %3601 = vmatpush1.bf16.msra.mxu0 %v3052
    %3602 = vmatprep.subr.bf16.mxu0 0
    %3603 = vmatpush1.bf16.msra.mxu0 %v3059
    %3604 = vmatprep.subr.bf16.mxu0 0
    %3605 = vmatpush1.bf16.msra.mxu0 %v3066
    %3606 = vmatprep.subr.bf16.mxu0 0
    %3607 = vmatpush1.bf16.msra.mxu0 %v3073
    %3608 = vmatprep.subr.bf16.mxu0 0
    %3609 = vmatpush1.bf16.msra.mxu0 %v3080
    %3610 = vmatprep.subr.bf16.mxu0 0
    %3611 = vmatpush1.bf16.msra.mxu0 %v3087
    %3612 = vmatprep.subr.bf16.mxu0 0
    %3613 = vmatpush1.bf16.msra.mxu0 %v3094
    %3614 = vmatprep.mubr.bf16.mxu0 %v2193
    %3615 = vmatmul.mubr.bf16.gmra.mrb[0].mxu0 %v2192
    %v3616 = vpop.f32.mrb[0].mxu0
    %v3617 = vadd.f32 %v2425, %v3616
    %v3618 = vpop.f32.mrb[0].mxu0
    %v3619 = vpop.f32.mrb[0].mxu0
    %v3620 = vpop.f32.mrb[0].mxu0
    %3621 = vdwg.mxu0
    %3622 = vmatprep.subr.bf16.mxu0 0
    %3623 = vmatpush1.bf16.msra.mxu0 %v3101
    %3624 = vmatprep.subr.bf16.mxu0 0
    %3625 = vmatpush1.bf16.msra.mxu0 %v3108
    %3626 = vmatprep.subr.bf16.mxu0 0
    %3627 = vmatpush1.bf16.msra.mxu0 %v3115
    %3628 = vmatprep.subr.bf16.mxu0 0
    %3629 = vmatpush1.bf16.msra.mxu0 %v3122
    %3630 = vmatprep.subr.bf16.mxu0 0
    %3631 = vmatpush1.bf16.msra.mxu0 %v3129
    %3632 = vmatprep.subr.bf16.mxu0 0
    %3633 = vmatpush1.bf16.msra.mxu0 %v3136
    %3634 = vmatprep.subr.bf16.mxu0 0
    %3635 = vmatpush1.bf16.msra.mxu0 %v3143
    %3636 = vmatprep.subr.bf16.mxu0 0
    %3637 = vmatpush1.bf16.msra.mxu0 %v3150
    %3638 = vmatprep.subr.bf16.mxu0 0
    %3639 = vmatpush1.bf16.msra.mxu0 %v3157
    %3640 = vmatprep.subr.bf16.mxu0 0
    %3641 = vmatpush1.bf16.msra.mxu0 0
    %3642 = vmatprep.subr.bf16.mxu0 0
    %3643 = vmatpush1.bf16.msra.mxu0 0
    %3644 = vmatprep.subr.bf16.mxu0 0
    %3645 = vmatpush1.bf16.msra.mxu0 0
    %3646 = vmatprep.subr.bf16.mxu0 0
    %3647 = vmatpush1.bf16.msra.mxu0 0
    %3648 = vmatprep.subr.bf16.mxu0 0
    %3649 = vmatpush1.bf16.msra.mxu0 0
    %3650 = vmatprep.subr.bf16.mxu0 0
    %3651 = vmatpush1.bf16.msra.mxu0 0
    %3652 = vmatprep.subr.bf16.mxu0 0
    %3653 = vmatpush1.bf16.msra.mxu0 0
    %3654 = vmatprep.mubr.bf16.mxu0 %v3334
    %3655 = vmatmul.mubr.bf16.gmra.mrb[0].mxu0 %v2194
    %v3656 = vpop.f32.mrb[0].mxu0
    %v3657 = vadd.f32 %v3617, %v3656
    %v3658 = vpop.f32.mrb[0].mxu0
    %v3659 = vpop.f32.mrb[0].mxu0
    %v3660 = vpop.f32.mrb[0].mxu0
    %3661 = vdwg.mxu0
    %v3662 = vxor.u32 %v3412, 2147483648
    %v3663 = vxor.u32 %v3414, 2147483648
    %v3664 = vxor.u32 %v3494, 2147483648
    %v3665 = vxor.u32 %v3496, 2147483648
    %v3666 = vxor.u32 %v3576, 2147483648
    %v3667 = vxor.u32 %v3578, 2147483648
    %v3668 = vxor.u32 %v3657, 2147483648
    %v3669 = vmul.f32 %v3662, 1.442695
    %v3670 = vpow.pop %v3669
    %v3671 = vmul.f32 %v3663, 1.442695
    %v3672 = vpow.pop %v3671
    %v3673 = vmul.f32 %v3664, 1.442695
    %v3674 = vpow.pop %v3673
    %v3675 = vmul.f32 %v3665, 1.442695
    %v3676 = vpow.pop %v3675
    %v3677 = vmul.f32 %v3666, 1.442695
    %v3678 = vpow.pop %v3677
    %v3679 = vmul.f32 %v3667, 1.442695
    %v3680 = vpow.pop %v3679
    %v3681 = vmul.f32 %v3668, 1.442695
    %v3682 = vpow.pop %v3681
    %v3683 = vadd.f32 %v3670, 1.0
    %v3684 = vadd.f32 %v3672, 1.0
    %v3685 = vadd.f32 %v3674, 1.0
    %v3686 = vadd.f32 %v3676, 1.0
    %v3687 = vadd.f32 %v3678, 1.0
    %v3688 = vadd.f32 %v3680, 1.0
    %v3689 = vadd.f32 %v3682, 1.0
    %v3690 = vrcp.pop %v3683
    %v3691 = vmul.f32 1.0, %v3690
    %v3692 = vrcp.pop %v3684
    %v3693 = vmul.f32 1.0, %v3692
    %v3694 = vrcp.pop %v3685
    %v3695 = vmul.f32 1.0, %v3694
    %v3696 = vrcp.pop %v3686
    %v3697 = vmul.f32 1.0, %v3696
    %v3698 = vrcp.pop %v3687
    %v3699 = vmul.f32 1.0, %v3698
    %v3700 = vrcp.pop %v3688
    %v3701 = vmul.f32 1.0, %v3700
    %v3702 = vrcp.pop %v3689
    %v3703 = vmul.f32 1.0, %v3702
    %v3704 = vpack.c.bf16 %v3691, %v3691
    %v3705 = vpack.c.bf16 %v3693, %v3693
    %v3706 = vpack.c.bf16 %v3695, %v3695
    %v3707 = vpack.c.bf16 %v3697, %v3697
    %v3708 = vpack.c.bf16 %v3699, %v3699
    %v3709 = vpack.c.bf16 %v3701, %v3701
    %v3710 = vpack.c.bf16 %v3703, %v3703
    %v3718 = vunpack.c.l.b16 %v3704
    %v3719 = vunpack.c.l.b16 %v3705
    %v3720 = vunpack.c.l.b16 %v3706
    %v3721 = vunpack.c.l.b16 %v3707
    %v3722 = vunpack.c.l.b16 %v3708
    %v3723 = vunpack.c.l.b16 %v3709
    %v3724 = vunpack.c.l.b16 %v3710
    %v3725 = vpack.c.b16 %v3719, %v3718
    %v3726 = vpack.c.b16 %v3721, %v3720
    %v3727 = vpack.c.b16 %v3723, %v3722
    %v3728 = vpack.c.b16 %v3724, %v3724
    %3733 = vst [vmem:[#allocation19] sm:$0xff] %v3725
    %3734 = vst [vmem:[#allocation19 + $0x8] sm:$0xff] %v3726
    %3735 = vst [vmem:[#allocation19 + $0x10] sm:$0xff] %v3727
    %vm3736 = vcmask 125952
    %3737 = vst.msk [vmem:[#allocation19 + $0x18] sm:$0xf] %vm3736, %v3728
    %vm3738 = vcmask 326656
    %3739 = vst.msk [vmem:[#allocation20] sm:$0xff] %vm3738, %v2016
    // Predicated region
    $region82: #{vae_forward.1} parent=1 // pred_check
      _
    $region83: #{vae_forward.1} parent=1 // pred_check_branch
      %3741 = sbr.rel (0) target = $region85
    $region84: #{vae_forward.1} parent=1 // pred_region
      %s3743 = ssub.s32 448, 448
      %3744 = vsyncadd [#allocation4], %s3743
      %s3746 = sshll.u32 [#allocation19], 4
      %s3747 = int_to_ptr.vmem [resolvable:$true] %s3746
      %3749 = dma.vmem_to_hbm [thread:$0]  %s3747, 448, %s10, [#allocation4]
    $region85: #{vae_forward.1} parent=1 // pred_fallthru
      _
    // Predicated region
    $region86: #{vae_forward.1} parent=1 // pred_check
      _
    $region87: #{vae_forward.1} parent=1 // pred_check_branch
      %3751 = sbr.rel (0) target = $region89
    $region88: #{vae_forward.1} parent=1 // pred_region
      %s3753 = ssub.s32 128, 128
      %3754 = vsyncadd [#allocation21], %s3753
      %s3756 = sshll.u32 [#allocation20], 4
      %s3757 = int_to_ptr.vmem [resolvable:$true] %s3756
      %3759 = dma.vmem_to_hbm [thread:$0]  %s3757, 128, %s11, [#allocation21]
    $region89: #{vae_forward.1} parent=1 // pred_fallthru
      _
    // Predicated region
    $region90: #{vae_forward.1} parent=1 // pred_check
      _
    $region91: #{vae_forward.1} parent=1 // pred_check_branch
      %3761 = sbr.rel (0) target = $region93
    $region92: #{vae_forward.1} parent=1 // pred_region
      %3762 = dma.done [#allocation4], 448
    $region93: #{vae_forward.1} parent=1 // pred_fallthru
      _
    // Predicated region
    $region94: #{vae_forward.1} parent=1 // pred_check
      _
    $region95: #{vae_forward.1} parent=1 // pred_check_branch
      %3764 = sbr.rel (0) target = $region97
    $region96: #{vae_forward.1} parent=1 // pred_region
      %3765 = dma.done [#allocation21], 128
    $region97: #{vae_forward.1} parent=1 // pred_fallthru
      _
    %3766 = vsyncpa [#allocation3], 1
    %3767 = vsyncpa [#allocation6], 1
    %3768 = vsyncpa [#allocation9], 1
    %3769 = vsyncpa [#allocation12], 1
    %3770 = vsyncpa [#allocation15], 1
    %3771 = vsyncpa [#allocation18], 1
    %3772 = vsyncpa [#allocation4], 1
    %3773 = vsyncpa [#allocation21], 1

</llo_original>
